<compile_context>
chip_gen: v5e
topology: v5e:2x2
jax: 0.10.0
libtpu: 0.0.40
codegen_flags: <defaults>
</compile_context>

<pallas_src>
import jax
import jax.numpy as jnp
from jax.experimental import pallas as pl
from jax.experimental.pallas import tpu as pltpu

DIM = 128        # model dim
DIM_QKV = 64     # head dim == rotary dim
DIM_FF = 256     # feed-forward hidden (small stand-in for 2048)
KSIZE = 15       # depthwise conv kernel size
PAD = (KSIZE - 1) // 2
CPAD = 8         # conv scratch padding rounded up to a full sublane group
EPS = 1e-5

# ---- row layout of the packed (., DIM) parameter array `vecD` ----------------
ROW_CV_DW = 0                      # KSIZE rows of depthwise taps
_S = ROW_CV_DW + KSIZE
(ROW_F1_LNW, ROW_F1_LNB, ROW_F1_B2,
 ROW_AT_LNW, ROW_AT_LNB, ROW_AT_BO,
 ROW_CV_LN1W, ROW_CV_LN1B, ROW_CV_DB,
 ROW_CV_LN2W, ROW_CV_LN2B, ROW_CV_BB,
 ROW_F2_LNW, ROW_F2_LNB, ROW_F2_B2,
 ROW_PN_W, ROW_PN_B) = range(_S, _S + 17)
ROW_COS = _S + 17                  # N rows of cos, then N rows of sin (batch-tile independent)

# rows of the packed wide-bias array `vecW`
ROW_F1_B1, ROW_CV_BA, ROW_F2_B1 = 0, 1, 2


# ----------------------------- shared math (used by kernel AND reference) ----
def _layer_norm(v, w, b):
    mu = jnp.mean(v, axis=-1, keepdims=True)
    var = jnp.mean(jnp.square(v - mu), axis=-1, keepdims=True)
    return (v - mu) * jax.lax.rsqrt(var + EPS) * w + b


def _silu(v):
    return v * jax.nn.sigmoid(v)


def _matmul(a, b):
    # bf16 MXU operands, f32 accumulation.
    return jax.lax.dot_general(
        a.astype(jnp.bfloat16), b.astype(jnp.bfloat16),
        (((a.ndim - 1,), (0,)), ((), ())),
        preferred_element_type=jnp.float32)


def _bmm(a, b, contract_a, contract_b):
    # batched matmul over leading axis, bf16 operands, f32 accumulation.
    return jax.lax.dot_general(
        a.astype(jnp.bfloat16), b.astype(jnp.bfloat16),
        (((contract_a,), (contract_b,)), ((0,), (0,))),
        preferred_element_type=jnp.float32)


def _rotate_pairs(x):
    """interleave(-x[..., 1::2], x[..., ::2]) via two lane shifts + one select.

    out[2i] = -x[2i+1], out[2i+1] = x[2i].  Pairwise, so per-head blocks are never
    mixed even when applied full-width."""
    left = jnp.concatenate([x[..., 1:], x[..., :1]], axis=-1)     # out[i] = x[i+1]
    right = jnp.concatenate([x[..., -1:], x[..., :-1]], axis=-1)  # out[i] = x[i-1]
    lane = jax.lax.broadcasted_iota(jnp.int32, x.shape, x.ndim - 1)
    return jnp.where(lane % 2 == 0, -left, right)


def _forward(x3, vd, vw, f1_w1, f1_w2, at_wqkv, at_wo, cv_wa, cv_wb,
             f2_w1, f2_w2, *, conv_scratch=None):
    """x3: (TB, N, D) f32.  vd/vw: packed parameter arrays.  Weights: bf16.

    conv_scratch is a (TB, N + 2*CPAD, D) VMEM ref inside the kernel and None in
    the pure-JAX reference path (which then uses jnp.pad — identical math)."""
    in_kernel = conv_scratch is not None
    tb, n, d = x3.shape
    r = tb * n
    heads = d // DIM_QKV

    def row(i):
        return vd[i:i + 1]                     # (1, D)

    cv_dw = vd[ROW_CV_DW:ROW_CV_DW + KSIZE]    # (KSIZE, D)
    cos_n = vd[ROW_COS:ROW_COS + n][None]      # (1, N, D) — broadcast over batch tile
    sin_n = vd[ROW_COS + n:ROW_COS + 2 * n][None]

    f1_b1 = vw[ROW_F1_B1:ROW_F1_B1 + 1, :DIM_FF]
    cv_ba = vw[ROW_CV_BA:ROW_CV_BA + 1, :2 * d]
    f2_b1 = vw[ROW_F2_B1:ROW_F2_B1 + 1, :DIM_FF]

    x = x3.reshape(r, d)                       # fold batch tile into matmul rows

    def feed_forward(v, lnw, lnb, w1, b1, w2, b2):
        h = _layer_norm(v, lnw, lnb)
        h = _silu(_matmul(h, w1) + b1)
        return _matmul(h, w2) + b2

    # ---- ff1 (half-step residual) ----
    x = feed_forward(x, row(ROW_F1_LNW), row(ROW_F1_LNB),
                     f1_w1, f1_b1, f1_w2, row(ROW_F1_B2)) * 0.5 + x

    # ---- attention with rotary position embedding ----
    h = _layer_norm(x, row(ROW_AT_LNW), row(ROW_AT_LNB))
    qkv = _matmul(h, at_wqkv)                  # (R, 3D) f32
    q3 = qkv[:, :d].reshape(tb, n, d)
    k3 = qkv[:, d:2 * d].reshape(tb, n, d)
    v3 = qkv[:, 2 * d:].reshape(tb, n, d)
    q3 = q3 * cos_n + _rotate_pairs(q3) * sin_n
    k3 = k3 * cos_n + _rotate_pairs(k3) * sin_n

    scale = DIM_QKV ** -0.5
    head_outs = []
    for hh in range(heads):                    # heads == 2; tiny static loop
        sl = slice(hh * DIM_QKV, (hh + 1) * DIM_QKV)
        s = _bmm(q3[..., sl], k3[..., sl], 2, 2) * scale          # (TB, N, N)
        s = s - jnp.max(s, axis=-1, keepdims=True)
        p = jnp.exp(s)
        p = p / jnp.sum(p, axis=-1, keepdims=True)                # exact (matches ref)
        head_outs.append(_bmm(p, v3[..., sl], 2, 1))              # (TB, N, 64)
    # lane-concat head outputs, single K=128 output-projection matmul
    o_cat = jnp.concatenate(head_outs, axis=-1).reshape(r, d)
    x = _matmul(o_cat, at_wo) + row(ROW_AT_BO) + x

    # ---- conformer conv module ----
    h = _layer_norm(x, row(ROW_CV_LN1W), row(ROW_CV_LN1B))
    y = _matmul(h, cv_wa) + cv_ba              # (R, 2D)
    glu = y[:, :d] * jax.nn.sigmoid(y[:, d:])  # GLU over channels
    glu3 = glu.reshape(tb, n, d)
    acc = None
    if in_kernel:
        # Depthwise conv over time via a zero-padded VMEM scratch: zero only the
        # two pad slabs (interior is fully overwritten), 15 shifted ref reads.
        conv_scratch[:, :CPAD, :] = jnp.zeros((tb, CPAD, d), jnp.float32)
        conv_scratch[:, CPAD + n:, :] = jnp.zeros((tb, CPAD, d), jnp.float32)
        conv_scratch[:, CPAD:CPAD + n, :] = glu3
        for kk in range(KSIZE):
            off = CPAD + kk - PAD
            tap = conv_scratch[:, off:off + n, :] * cv_dw[kk:kk + 1]
            acc = tap if acc is None else acc + tap
    else:
        padded = jnp.pad(glu3, ((0, 0), (PAD, PAD), (0, 0)))
        for kk in range(KSIZE):
            tap = padded[:, kk:kk + n, :] * cv_dw[kk:kk + 1]
            acc = tap if acc is None else acc + tap
    acc = acc + row(ROW_CV_DB)
    h = _layer_norm(acc.reshape(r, d), row(ROW_CV_LN2W), row(ROW_CV_LN2B))
    h = _silu(h)
    h = _matmul(h, cv_wb) + row(ROW_CV_BB)
    x = h + x

    # ---- ff2 (half-step residual) ----
    x = feed_forward(x, row(ROW_F2_LNW), row(ROW_F2_LNB),
                     f2_w1, f2_b1, f2_w2, row(ROW_F2_B2)) * 0.5 + x

    # ---- post norm ----
    x = _layer_norm(x, row(ROW_PN_W), row(ROW_PN_B))
    return x.reshape(tb, n, d)


# ----------------------------------------------------------------- kernel ----
def conformer_kernel(x_ref, vecd_ref, vecw_ref,
                     f1w1_ref, f1w2_ref, wqkv_ref, wo_ref,
                     cvwa_ref, cvwb_ref, f2w1_ref, f2w2_ref,
                     o_ref, conv_pad_ref):
    out = _forward(
        x_ref[...].astype(jnp.float32), vecd_ref[...], vecw_ref[...],
        f1w1_ref[...], f1w2_ref[...], wqkv_ref[...], wo_ref[...],
        cvwa_ref[...], cvwb_ref[...], f2w1_ref[...], f2w2_ref[...],
        conv_scratch=conv_pad_ref)
    o_ref[...] = out.astype(o_ref.dtype)


# --------------------------------------------------------------- tiling ------
def _device_info():
    """(vmem_capacity_bytes, tensorcores_per_device) with conservative fallbacks."""
    vmem = 64 * 1024 * 1024
    cores = 1
    try:
        info = pltpu.get_tpu_info()
        vmem = int(getattr(info, "vmem_capacity_bytes", vmem) or vmem)
        cores = int(getattr(info, "num_cores",
                            getattr(info, "tensorcores_per_chip", cores)) or cores)
    except Exception:
        pass
    try:
        cores = max(cores, int(getattr(jax.devices()[0], "num_cores", 1) or 1))
    except Exception:
        pass
    return vmem, max(1, min(cores, 8))


def _pick_batch_tile(b, n, vmem_bytes, num_cores):
    """Batch tile sized by VMEM budget (not a fixed 256-row cap).

    Peak live f32 temporaries are ~5-6 KB/row (qkv 384-wide, ff hidden 256-wide,
    conv acc, residuals); budget at 8 KB/row against ~60% of the VMEM limit,
    leaving headroom for weights, double-buffered x/out blocks and compiler
    temporaries.  On multi-TensorCore parts (v7x) prefer a grid that is a
    multiple of the core count so ("parallel",) semantics shard across cores."""
    bytes_per_row = 8 * 1024
    fixed = 4 * 1024 * 1024
    budget = max(0, int(vmem_bytes * 0.6) - fixed)
    max_rows = max(n, budget // bytes_per_row)
    divisors = [t for t in range(1, b + 1) if b % t == 0]
    fitting = [t for t in divisors if t * n <= max_rows] or divisors[:1]
    tile = max(fitting)
    if num_cores > 1:
        multi = [t for t in fitting if (b // t) % num_cores == 0]
        if multi:
            tile = max(multi)
    return tile


def _flop_estimate(b, n):
    heads = DIM // DIM_QKV
    r = b * n
    mm = 2 * r * (2 * DIM * DIM_FF          # ff1
                  + DIM * 3 * DIM           # qkv
                  + DIM * DIM               # attention out projection
                  + DIM * 2 * DIM           # conv pointwise in (GLU)
                  + DIM * DIM               # conv pointwise out
                  + 2 * DIM * DIM_FF)       # ff2
    attn = 4 * b * heads * n * n * DIM_QKV  # QK^T + PV
    conv = 2 * r * DIM * KSIZE
    transc = r * (2 * DIM_FF + DIM) + b * heads * n * n   # sigmoids + softmax exp
    return mm + attn + conv, transc


def conformer_block(x, vecD, vecW, weights, *, batch_tile=None):
    B, N, D = x.shape
    assert D == DIM
    # rotary tables are packed per sequence length (batch-tile independent)
    assert N == (vecD.shape[0] - ROW_COS) // 2, "vecD packed for a different seq len"

    vmem_cap, num_cores = _device_info()
    if batch_tile is None:
        batch_tile = _pick_batch_tile(B, N, vmem_cap, num_cores)
    assert B % batch_tile == 0
    tb = batch_tile
    grid = (B // tb,)

    in_specs = [pl.BlockSpec((tb, N, D), lambda b: (b, 0, 0)),
                pl.BlockSpec(vecD.shape, lambda b: (0, 0)),
                pl.BlockSpec(vecW.shape, lambda b: (0, 0))]
    for w in weights:                                  # full, grid-resident blocks
        in_specs.append(pl.BlockSpec(w.shape, lambda b: (0, 0)))
    out_spec = pl.BlockSpec((tb, N, D), lambda b: (b, 0, 0))

    nbytes = sum(int(a.size) * a.dtype.itemsize for a in (x, vecD, vecW, *weights))
    nbytes += int(x.size) * x.dtype.itemsize           # output
    flops, transc = _flop_estimate(B, N)

    # generation-aware VMEM limit: ~102 MiB on 128-MiB parts, ~51 MiB on v7x (64 MiB)
    vmem_limit = max(32 * 1024 * 1024, min(int(vmem_cap * 0.8), 112 * 1024 * 1024))

    return pl.pallas_call(
        conformer_kernel,
        out_shape=jax.ShapeDtypeStruct((B, N, D), x.dtype),
        grid_spec=pltpu.PrefetchScalarGridSpec(
            num_scalar_prefetch=0,
            grid=grid,
            in_specs=in_specs,
            out_specs=out_spec,
            scratch_shapes=[pltpu.VMEM((tb, N + 2 * CPAD, D), jnp.float32)],
        ),
        compiler_params=pltpu.CompilerParams(
            dimension_semantics=("parallel",),
            vmem_limit_bytes=vmem_limit,
        ),
        cost_estimate=pl.CostEstimate(
            flops=flops, transcendentals=transc, bytes_accessed=nbytes),
    )(x, vecD, vecW, *weights)


# ------------------------------------------------------------ param setup ----
def rotary_tables(n, dim):
    inv = 1.0 / (10000.0 ** (jnp.arange(0, dim, 2, dtype=jnp.float32) / dim))
    freqs = jnp.arange(n, dtype=jnp.float32)[:, None] * inv        # (n, dim/2)
    freqs = jnp.repeat(freqs, 2, axis=-1)                          # (n, dim) interleaved
    return jnp.cos(freqs), jnp.sin(freqs)


def init_params(key):
    keys = iter(jax.random.split(key, 64))

    def lin(fan_in, fan_out):
        w = jax.random.normal(next(keys), (fan_in, fan_out), jnp.float32) / jnp.sqrt(
            float(fan_in))
        b = 0.01 * jax.random.normal(next(keys), (fan_out,), jnp.float32)
        return w, b

    def ln(dd):
        w = 1.0 + 0.1 * jax.random.normal(next(keys), (dd,), jnp.float32)
        b = 0.1 * jax.random.normal(next(keys), (dd,), jnp.float32)
        return w, b

    p = {}
    p["f1_lnw"], p["f1_lnb"] = ln(DIM)
    p["f1_w1"], p["f1_b1"] = lin(DIM, DIM_FF)
    p["f1_w2"], p["f1_b2"] = lin(DIM_FF, DIM)
    p["at_lnw"], p["at_lnb"] = ln(DIM)
    p["at_wqkv"] = jax.random.normal(next(keys), (DIM, 3 * DIM), jnp.float32) / jnp.sqrt(
        float(DIM))
    p["at_wo"], p["at_bo"] = lin(DIM, DIM)
    p["cv_ln1w"], p["cv_ln1b"] = ln(DIM)
    p["cv_wa"], p["cv_ba"] = lin(DIM, 2 * DIM)
    p["cv_dw"] = jax.random.normal(next(keys), (KSIZE, DIM), jnp.float32) / jnp.sqrt(
        float(KSIZE))
    p["cv_db"] = 0.01 * jax.random.normal(next(keys), (DIM,), jnp.float32)
    p["cv_ln2w"], p["cv_ln2b"] = ln(DIM)
    p["cv_wb"], p["cv_bb"] = lin(DIM, DIM)
    p["f2_lnw"], p["f2_lnb"] = ln(DIM)
    p["f2_w1"], p["f2_b1"] = lin(DIM, DIM_FF)
    p["f2_w2"], p["f2_b2"] = lin(DIM_FF, DIM)
    p["pn_w"], p["pn_b"] = ln(DIM)
    return p


def pack_params(p, n):
    """Pack tiny per-channel vectors, conv taps and (N, D) RoPE tables into ONE
    f32 array, the 3 wide biases into another, and pre-cast the 8 big matmul
    weights to bf16 (accumulation stays f32 in the kernel)."""
    heads = DIM // DIM_QKV
    cos, sin = rotary_tables(n, DIM_QKV)              # (n, 64)
    cos = jnp.tile(cos, (1, heads))                   # (n, D) — per-head copies
    sin = jnp.tile(sin, (1, heads))

    singles = jnp.stack([
        p["f1_lnw"], p["f1_lnb"], p["f1_b2"],
        p["at_lnw"], p["at_lnb"], p["at_bo"],
        p["cv_ln1w"], p["cv_ln1b"], p["cv_db"],
        p["cv_ln2w"], p["cv_ln2b"], p["cv_bb"],
        p["f2_lnw"], p["f2_lnb"], p["f2_b2"],
        p["pn_w"], p["pn_b"]], axis=0)                # (17, D)
    vecD = jnp.concatenate([p["cv_dw"], singles, cos, sin], axis=0).astype(jnp.float32)

    wide = max(DIM_FF, 2 * DIM)

    def wide_row(v):
        return jnp.pad(v, (0, wide - v.shape[0]))
    vecW = jnp.stack([wide_row(p["f1_b1"]), wide_row(p["cv_ba"]),
                      wide_row(p["f2_b1"])], axis=0).astype(jnp.float32)

    weights = tuple(w.astype(jnp.bfloat16) for w in (
        p["f1_w1"], p["f1_w2"], p["at_wqkv"], p["at_wo"],
        p["cv_wa"], p["cv_wb"], p["f2_w1"], p["f2_w2"]))
    return vecD, vecW, weights


# ------------------------------------------------------------------- main ----
if __name__ == "__main__":
    B, N = 2, 8
    key = jax.random.PRNGKey(0)
    kx, kp = jax.random.split(key)
    x = jax.random.normal(kx, (B, N, DIM), jnp.float32)

    params = init_params(kp)
    vecD, vecW, weights = pack_params(params, N)

    out = jax.block_until_ready(conformer_block(x, vecD, vecW, weights))

    # pure-JAX reference with IDENTICAL math (bf16 matmul operands, f32
    # accumulation, exact softmax division).  The grid processes disjoint batch
    # slices of otherwise per-batch-element math, so the full-batch _forward is
    # an exact functional reference regardless of the batch tile chosen.
    ref = _forward(x.astype(jnp.float32), vecD, vecW, *weights)

    assert out.shape == (B, N, DIM)
    assert bool(jnp.all(jnp.isfinite(out)))
    err = float(jnp.max(jnp.abs(out - ref)))
    # tolerance covers only Mosaic/interpret-vs-XLA reduction-order noise
    assert bool(jnp.allclose(out, ref, atol=2e-2, rtol=2e-2)), err
    print("KERNEL_OK")
</pallas_src>

<mosaic_0001>
module attributes {stable_mosaic.version = 11 : i64} {
  func.func @conformer_kernel(%arg0: i32, %arg1: memref<2x8x128xf32, #tpu.memory_space<vmem>>, %arg2: memref<48x128xf32, #tpu.memory_space<vmem>>, %arg3: memref<3x256xf32, #tpu.memory_space<vmem>>, %arg4: memref<128x256xbf16, #tpu.memory_space<vmem>>, %arg5: memref<256x128xbf16, #tpu.memory_space<vmem>>, %arg6: memref<128x384xbf16, #tpu.memory_space<vmem>>, %arg7: memref<128x128xbf16, #tpu.memory_space<vmem>>, %arg8: memref<128x256xbf16, #tpu.memory_space<vmem>>, %arg9: memref<128x128xbf16, #tpu.memory_space<vmem>>, %arg10: memref<128x256xbf16, #tpu.memory_space<vmem>>, %arg11: memref<256x128xbf16, #tpu.memory_space<vmem>>, %arg12: memref<2x8x128xf32, #tpu.memory_space<vmem>>, %arg13: memref<2x24x128xf32, #tpu.memory_space<vmem>>) attributes {dimension_semantics = [#tpu.dimension_semantics<parallel>], iteration_bounds = array<i64: 1>, scalar_prefetch = 0 : i64, scratch_operands = 1 : i64, tpu.core_type = #tpu.core_type<tc>, window_params = [{transform_indices = @transform_0, window_bounds = array<i64: 2, 8, 128>}, {pipeline_mode = #tpu.pipeline_mode<synchronous>, transform_indices = @transform_1, window_bounds = array<i64: 48, 128>}, {pipeline_mode = #tpu.pipeline_mode<synchronous>, transform_indices = @transform_2, window_bounds = array<i64: 3, 256>}, {pipeline_mode = #tpu.pipeline_mode<synchronous>, transform_indices = @transform_3, window_bounds = array<i64: 128, 256>}, {pipeline_mode = #tpu.pipeline_mode<synchronous>, transform_indices = @transform_4, window_bounds = array<i64: 256, 128>}, {pipeline_mode = #tpu.pipeline_mode<synchronous>, transform_indices = @transform_5, window_bounds = array<i64: 128, 384>}, {pipeline_mode = #tpu.pipeline_mode<synchronous>, transform_indices = @transform_6, window_bounds = array<i64: 128, 128>}, {pipeline_mode = #tpu.pipeline_mode<synchronous>, transform_indices = @transform_7, window_bounds = array<i64: 128, 256>}, {pipeline_mode = #tpu.pipeline_mode<synchronous>, transform_indices = @transform_8, window_bounds = array<i64: 128, 128>}, {pipeline_mode = #tpu.pipeline_mode<synchronous>, transform_indices = @transform_9, window_bounds = array<i64: 128, 256>}, {pipeline_mode = #tpu.pipeline_mode<synchronous>, transform_indices = @transform_10, window_bounds = array<i64: 256, 128>}, {transform_indices = @transform_11, window_bounds = array<i64: 2, 8, 128>}]} {
    %c0 = arith.constant 0 : index
    %c0_0 = arith.constant 0 : index
    %c0_1 = arith.constant 0 : index
    %0 = vector.load %arg1[%c0, %c0_0, %c0_1] : memref<2x8x128xf32, #tpu.memory_space<vmem>>, vector<2x8x128xf32>
    %c0_2 = arith.constant 0 : index
    %c0_3 = arith.constant 0 : index
    %1 = vector.load %arg2[%c0_2, %c0_3] : memref<48x128xf32, #tpu.memory_space<vmem>>, vector<48x128xf32>
    %c0_4 = arith.constant 0 : index
    %c0_5 = arith.constant 0 : index
    %2 = vector.load %arg3[%c0_4, %c0_5] : memref<3x256xf32, #tpu.memory_space<vmem>>, vector<3x256xf32>
    %c0_6 = arith.constant 0 : index
    %c0_7 = arith.constant 0 : index
    %3 = vector.load %arg4[%c0_6, %c0_7] : memref<128x256xbf16, #tpu.memory_space<vmem>>, vector<128x256xbf16>
    %c0_8 = arith.constant 0 : index
    %c0_9 = arith.constant 0 : index
    %4 = vector.load %arg5[%c0_8, %c0_9] : memref<256x128xbf16, #tpu.memory_space<vmem>>, vector<256x128xbf16>
    %c0_10 = arith.constant 0 : index
    %c0_11 = arith.constant 0 : index
    %5 = vector.load %arg6[%c0_10, %c0_11] : memref<128x384xbf16, #tpu.memory_space<vmem>>, vector<128x384xbf16>
    %c0_12 = arith.constant 0 : index
    %c0_13 = arith.constant 0 : index
    %6 = vector.load %arg7[%c0_12, %c0_13] : memref<128x128xbf16, #tpu.memory_space<vmem>>, vector<128x128xbf16>
    %c0_14 = arith.constant 0 : index
    %c0_15 = arith.constant 0 : index
    %7 = vector.load %arg8[%c0_14, %c0_15] : memref<128x256xbf16, #tpu.memory_space<vmem>>, vector<128x256xbf16>
    %c0_16 = arith.constant 0 : index
    %c0_17 = arith.constant 0 : index
    %8 = vector.load %arg9[%c0_16, %c0_17] : memref<128x128xbf16, #tpu.memory_space<vmem>>, vector<128x128xbf16>
    %c0_18 = arith.constant 0 : index
    %c0_19 = arith.constant 0 : index
    %9 = vector.load %arg10[%c0_18, %c0_19] : memref<128x256xbf16, #tpu.memory_space<vmem>>, vector<128x256xbf16>
    %c0_20 = arith.constant 0 : index
    %c0_21 = arith.constant 0 : index
    %10 = vector.load %arg11[%c0_20, %c0_21] : memref<256x128xbf16, #tpu.memory_space<vmem>>, vector<256x128xbf16>
    %11 = vector.extract_strided_slice %1 {offsets = [0, 0], sizes = [15, 128], strides = [1, 1]} : vector<48x128xf32> to vector<15x128xf32>
    %12 = vector.extract_strided_slice %1 {offsets = [32, 0], sizes = [8, 128], strides = [1, 1]} : vector<48x128xf32> to vector<8x128xf32>
    %13 = vector.shape_cast %12 : vector<8x128xf32> to vector<1x8x128xf32>
    %14 = vector.extract_strided_slice %1 {offsets = [40, 0], sizes = [8, 128], strides = [1, 1]} : vector<48x128xf32> to vector<8x128xf32>
    %15 = vector.shape_cast %14 : vector<8x128xf32> to vector<1x8x128xf32>
    %16 = vector.extract_strided_slice %2 {offsets = [0, 0], sizes = [1, 256], strides = [1, 1]} : vector<3x256xf32> to vector<1x256xf32>
    %17 = vector.extract_strided_slice %2 {offsets = [1, 0], sizes = [1, 256], strides = [1, 1]} : vector<3x256xf32> to vector<1x256xf32>
    %18 = vector.extract_strided_slice %2 {offsets = [2, 0], sizes = [1, 256], strides = [1, 1]} : vector<3x256xf32> to vector<1x256xf32>
    %19 = vector.shape_cast %0 : vector<2x8x128xf32> to vector<16x128xf32>
    %20 = vector.extract_strided_slice %1 {offsets = [15, 0], sizes = [1, 128], strides = [1, 1]} : vector<48x128xf32> to vector<1x128xf32>
    %21 = vector.extract_strided_slice %1 {offsets = [16, 0], sizes = [1, 128], strides = [1, 1]} : vector<48x128xf32> to vector<1x128xf32>
    %22 = vector.extract_strided_slice %1 {offsets = [17, 0], sizes = [1, 128], strides = [1, 1]} : vector<48x128xf32> to vector<1x128xf32>
    %cst = arith.constant dense<0.000000e+00> : vector<16xf32>
    %23 = vector.multi_reduction <add>, %19, %cst [1] : vector<16x128xf32> to vector<16xf32>
    %24 = vector.shape_cast %23 : vector<16xf32> to vector<16x1xf32>
    %cst_22 = arith.constant 1.280000e+02 : f32
    %25 = vector.broadcast %cst_22 : f32 to vector<16x1xf32>
    %26 = arith.divf %24, %25 : vector<16x1xf32>
    %27 = vector.broadcast %26 : vector<16x1xf32> to vector<16x128xf32>
    %28 = arith.subf %19, %27 : vector<16x128xf32>
    %29 = arith.mulf %28, %28 : vector<16x128xf32>
    %cst_23 = arith.constant dense<0.000000e+00> : vector<16xf32>
    %30 = vector.multi_reduction <add>, %29, %cst_23 [1] : vector<16x128xf32> to vector<16xf32>
    %31 = vector.shape_cast %30 : vector<16xf32> to vector<16x1xf32>
    %cst_24 = arith.constant 1.280000e+02 : f32
    %32 = vector.broadcast %cst_24 : f32 to vector<16x1xf32>
    %33 = arith.divf %31, %32 : vector<16x1xf32>
    %34 = vector.broadcast %26 : vector<16x1xf32> to vector<16x128xf32>
    %35 = arith.subf %19, %34 : vector<16x128xf32>
    %cst_25 = arith.constant 9.99999974E-6 : f32
    %36 = vector.broadcast %cst_25 : f32 to vector<16x1xf32>
    %37 = arith.addf %33, %36 : vector<16x1xf32>
    %38 = math.rsqrt %37 : vector<16x1xf32>
    %39 = vector.broadcast %38 : vector<16x1xf32> to vector<16x128xf32>
    %40 = arith.mulf %35, %39 : vector<16x128xf32>
    %41 = vector.broadcast %20 : vector<1x128xf32> to vector<16x128xf32>
    %42 = arith.mulf %40, %41 : vector<16x128xf32>
    %43 = vector.broadcast %21 : vector<1x128xf32> to vector<16x128xf32>
    %44 = arith.addf %42, %43 : vector<16x128xf32>
    %45 = arith.truncf %44 : vector<16x128xf32> to vector<16x128xbf16>
    %cst_26 = arith.constant dense<0.000000e+00> : vector<16x256xf32>
    %46 = tpu.matmul %45, %3, %cst_26 {dimension_numbers = #tpu.dot_dimension_numbers<[1], [0], [0], [1], [0, 0, 1, 1], [], []>} : vector<16x128xbf16>, vector<128x256xbf16>, vector<16x256xf32> -> vector<16x256xf32>
    %47 = vector.broadcast %16 : vector<1x256xf32> to vector<16x256xf32>
    %48 = arith.addf %46, %47 : vector<16x256xf32>
    %49 = arith.negf %48 : vector<16x256xf32>
    %50 = math.exp %49 : vector<16x256xf32>
    %cst_27 = arith.constant 1.000000e+00 : f32
    %51 = vector.broadcast %cst_27 : f32 to vector<16x256xf32>
    %52 = arith.addf %51, %50 : vector<16x256xf32>
    %53 = arith.divf %51, %52 : vector<16x256xf32>
    %54 = arith.mulf %48, %53 : vector<16x256xf32>
    %55 = arith.truncf %54 : vector<16x256xf32> to vector<16x256xbf16>
    %cst_28 = arith.constant dense<0.000000e+00> : vector<16x128xf32>
    %56 = tpu.matmul %55, %4, %cst_28 {dimension_numbers = #tpu.dot_dimension_numbers<[1], [0], [0], [1], [0, 0, 1, 1], [], []>} : vector<16x256xbf16>, vector<256x128xbf16>, vector<16x128xf32> -> vector<16x128xf32>
    %57 = vector.broadcast %22 : vector<1x128xf32> to vector<16x128xf32>
    %58 = arith.addf %56, %57 : vector<16x128xf32>
    %cst_29 = arith.constant 5.000000e-01 : f32
    %59 = vector.broadcast %cst_29 : f32 to vector<16x128xf32>
    %60 = arith.mulf %58, %59 : vector<16x128xf32>
    %61 = arith.addf %60, %19 : vector<16x128xf32>
    %62 = vector.extract_strided_slice %1 {offsets = [18, 0], sizes = [1, 128], strides = [1, 1]} : vector<48x128xf32> to vector<1x128xf32>
    %63 = vector.extract_strided_slice %1 {offsets = [19, 0], sizes = [1, 128], strides = [1, 1]} : vector<48x128xf32> to vector<1x128xf32>
    %cst_30 = arith.constant dense<0.000000e+00> : vector<16xf32>
    %64 = vector.multi_reduction <add>, %61, %cst_30 [1] : vector<16x128xf32> to vector<16xf32>
    %65 = vector.shape_cast %64 : vector<16xf32> to vector<16x1xf32>
    %cst_31 = arith.constant 1.280000e+02 : f32
    %66 = vector.broadcast %cst_31 : f32 to vector<16x1xf32>
    %67 = arith.divf %65, %66 : vector<16x1xf32>
    %68 = vector.broadcast %67 : vector<16x1xf32> to vector<16x128xf32>
    %69 = arith.subf %61, %68 : vector<16x128xf32>
    %70 = arith.mulf %69, %69 : vector<16x128xf32>
    %cst_32 = arith.constant dense<0.000000e+00> : vector<16xf32>
    %71 = vector.multi_reduction <add>, %70, %cst_32 [1] : vector<16x128xf32> to vector<16xf32>
    %72 = vector.shape_cast %71 : vector<16xf32> to vector<16x1xf32>
    %cst_33 = arith.constant 1.280000e+02 : f32
    %73 = vector.broadcast %cst_33 : f32 to vector<16x1xf32>
    %74 = arith.divf %72, %73 : vector<16x1xf32>
    %75 = vector.broadcast %67 : vector<16x1xf32> to vector<16x128xf32>
    %76 = arith.subf %61, %75 : vector<16x128xf32>
    %cst_34 = arith.constant 9.99999974E-6 : f32
    %77 = vector.broadcast %cst_34 : f32 to vector<16x1xf32>
    %78 = arith.addf %74, %77 : vector<16x1xf32>
    %79 = math.rsqrt %78 : vector<16x1xf32>
    %80 = vector.broadcast %79 : vector<16x1xf32> to vector<16x128xf32>
    %81 = arith.mulf %76, %80 : vector<16x128xf32>
    %82 = vector.broadcast %62 : vector<1x128xf32> to vector<16x128xf32>
    %83 = arith.mulf %81, %82 : vector<16x128xf32>
    %84 = vector.broadcast %63 : vector<1x128xf32> to vector<16x128xf32>
    %85 = arith.addf %83, %84 : vector<16x128xf32>
    %86 = arith.truncf %85 : vector<16x128xf32> to vector<16x128xbf16>
    %cst_35 = arith.constant dense<0.000000e+00> : vector<16x384xf32>
    %87 = tpu.matmul %86, %5, %cst_35 {dimension_numbers = #tpu.dot_dimension_numbers<[1], [0], [0], [1], [0, 0, 1, 1], [], []>} : vector<16x128xbf16>, vector<128x384xbf16>, vector<16x384xf32> -> vector<16x384xf32>
    %88 = vector.extract_strided_slice %87 {offsets = [0, 0], sizes = [16, 128], strides = [1, 1]} : vector<16x384xf32> to vector<16x128xf32>
    %89 = vector.shape_cast %88 : vector<16x128xf32> to vector<2x8x128xf32>
    %90 = vector.extract_strided_slice %87 {offsets = [0, 128], sizes = [16, 128], strides = [1, 1]} : vector<16x384xf32> to vector<16x128xf32>
    %91 = vector.shape_cast %90 : vector<16x128xf32> to vector<2x8x128xf32>
    %92 = vector.extract_strided_slice %87 {offsets = [0, 256], sizes = [16, 128], strides = [1, 1]} : vector<16x384xf32> to vector<16x128xf32>
    %93 = vector.shape_cast %92 : vector<16x128xf32> to vector<2x8x128xf32>
    %94 = vector.broadcast %13 : vector<1x8x128xf32> to vector<2x8x128xf32>
    %95 = arith.mulf %89, %94 : vector<2x8x128xf32>
    %96 = vector.extract_strided_slice %89 {offsets = [0, 0, 1], sizes = [2, 8, 127], strides = [1, 1, 1]} : vector<2x8x128xf32> to vector<2x8x127xf32>
    %97 = vector.extract_strided_slice %89 {offsets = [0, 0, 0], sizes = [2, 8, 1], strides = [1, 1, 1]} : vector<2x8x128xf32> to vector<2x8x1xf32>
    %98 = tpu.concatenate %96, %97 in 2 : vector<2x8x127xf32>, vector<2x8x1xf32> -> vector<2x8x128xf32>
    %99 = vector.extract_strided_slice %89 {offsets = [0, 0, 127], sizes = [2, 8, 1], strides = [1, 1, 1]} : vector<2x8x128xf32> to vector<2x8x1xf32>
    %100 = vector.extract_strided_slice %89 {offsets = [0, 0, 0], sizes = [2, 8, 127], strides = [1, 1, 1]} : vector<2x8x128xf32> to vector<2x8x127xf32>
    %101 = tpu.concatenate %99, %100 in 2 : vector<2x8x1xf32>, vector<2x8x127xf32> -> vector<2x8x128xf32>
    %102 = tpu.iota {dimensions = array<i32: 2>} : vector<2x8x128xi32>
    %c2_i32 = arith.constant 2 : i32
    %c0_i32 = arith.constant 0 : i32
    %103 = arith.cmpi eq, %c2_i32, %c0_i32 : i32
    %c1_i32 = arith.constant 1 : i32
    %104 = arith.select %103, %c1_i32, %c2_i32 : i32
    %105 = vector.broadcast %104 : i32 to vector<2x8x128xi32>
    %106 = arith.remsi %102, %105 : vector<2x8x128xi32>
    %c0_i32_36 = arith.constant 0 : i32
    %107 = vector.broadcast %c0_i32_36 : i32 to vector<2x8x128xi32>
    %108 = arith.cmpi ne, %106, %107 : vector<2x8x128xi32>
    %c0_i32_37 = arith.constant 0 : i32
    %109 = vector.broadcast %c0_i32_37 : i32 to vector<2x8x128xi32>
    %110 = arith.cmpi slt, %106, %109 : vector<2x8x128xi32>
    %c0_i32_38 = arith.constant 0 : i32
    %111 = arith.cmpi slt, %104, %c0_i32_38 : i32
    %112 = vector.broadcast %111 : i1 to vector<2x8x128xi1>
    %113 = vector.broadcast %112 : vector<2x8x128xi1> to vector<2x8x128xi1>
    %114 = arith.xori %110, %113 : vector<2x8x128xi1>
    %115 = arith.andi %114, %108 : vector<2x8x128xi1>
    %116 = vector.broadcast %104 : i32 to vector<2x8x128xi32>
    %117 = arith.addi %106, %116 : vector<2x8x128xi32>
    %118 = arith.select %115, %117, %106 : vector<2x8x128xi1>, vector<2x8x128xi32>
    %c0_i32_39 = arith.constant 0 : i32
    %119 = vector.broadcast %c0_i32_39 : i32 to vector<2x8x128xi32>
    %120 = arith.cmpi eq, %118, %119 : vector<2x8x128xi32>
    %cst_40 = arith.constant 0.000000e+00 : f32
    %121 = vector.broadcast %cst_40 : f32 to vector<2x8x128xf32>
    %122 = arith.subf %121, %98 : vector<2x8x128xf32>
    %123 = arith.select %120, %122, %101 : vector<2x8x128xi1>, vector<2x8x128xf32>
    %124 = vector.broadcast %15 : vector<1x8x128xf32> to vector<2x8x128xf32>
    %125 = arith.mulf %123, %124 : vector<2x8x128xf32>
    %126 = arith.addf %95, %125 : vector<2x8x128xf32>
    %127 = vector.broadcast %13 : vector<1x8x128xf32> to vector<2x8x128xf32>
    %128 = arith.mulf %91, %127 : vector<2x8x128xf32>
    %129 = vector.extract_strided_slice %91 {offsets = [0, 0, 1], sizes = [2, 8, 127], strides = [1, 1, 1]} : vector<2x8x128xf32> to vector<2x8x127xf32>
    %130 = vector.extract_strided_slice %91 {offsets = [0, 0, 0], sizes = [2, 8, 1], strides = [1, 1, 1]} : vector<2x8x128xf32> to vector<2x8x1xf32>
    %131 = tpu.concatenate %129, %130 in 2 : vector<2x8x127xf32>, vector<2x8x1xf32> -> vector<2x8x128xf32>
    %132 = vector.extract_strided_slice %91 {offsets = [0, 0, 127], sizes = [2, 8, 1], strides = [1, 1, 1]} : vector<2x8x128xf32> to vector<2x8x1xf32>
    %133 = vector.extract_strided_slice %91 {offsets = [0, 0, 0], sizes = [2, 8, 127], strides = [1, 1, 1]} : vector<2x8x128xf32> to vector<2x8x127xf32>
    %134 = tpu.concatenate %132, %133 in 2 : vector<2x8x1xf32>, vector<2x8x127xf32> -> vector<2x8x128xf32>
    %135 = tpu.iota {dimensions = array<i32: 2>} : vector<2x8x128xi32>
    %c2_i32_41 = arith.constant 2 : i32
    %c0_i32_42 = arith.constant 0 : i32
    %136 = arith.cmpi eq, %c2_i32_41, %c0_i32_42 : i32
    %c1_i32_43 = arith.constant 1 : i32
    %137 = arith.select %136, %c1_i32_43, %c2_i32_41 : i32
    %138 = vector.broadcast %137 : i32 to vector<2x8x128xi32>
    %139 = arith.remsi %135, %138 : vector<2x8x128xi32>
    %c0_i32_44 = arith.constant 0 : i32
    %140 = vector.broadcast %c0_i32_44 : i32 to vector<2x8x128xi32>
    %141 = arith.cmpi ne, %139, %140 : vector<2x8x128xi32>
    %c0_i32_45 = arith.constant 0 : i32
    %142 = vector.broadcast %c0_i32_45 : i32 to vector<2x8x128xi32>
    %143 = arith.cmpi slt, %139, %142 : vector<2x8x128xi32>
    %c0_i32_46 = arith.constant 0 : i32
    %144 = arith.cmpi slt, %137, %c0_i32_46 : i32
    %145 = vector.broadcast %144 : i1 to vector<2x8x128xi1>
    %146 = vector.broadcast %145 : vector<2x8x128xi1> to vector<2x8x128xi1>
    %147 = arith.xori %143, %146 : vector<2x8x128xi1>
    %148 = arith.andi %147, %141 : vector<2x8x128xi1>
    %149 = vector.broadcast %137 : i32 to vector<2x8x128xi32>
    %150 = arith.addi %139, %149 : vector<2x8x128xi32>
    %151 = arith.select %148, %150, %139 : vector<2x8x128xi1>, vector<2x8x128xi32>
    %c0_i32_47 = arith.constant 0 : i32
    %152 = vector.broadcast %c0_i32_47 : i32 to vector<2x8x128xi32>
    %153 = arith.cmpi eq, %151, %152 : vector<2x8x128xi32>
    %cst_48 = arith.constant 0.000000e+00 : f32
    %154 = vector.broadcast %cst_48 : f32 to vector<2x8x128xf32>
    %155 = arith.subf %154, %131 : vector<2x8x128xf32>
    %156 = arith.select %153, %155, %134 : vector<2x8x128xi1>, vector<2x8x128xf32>
    %157 = vector.broadcast %15 : vector<1x8x128xf32> to vector<2x8x128xf32>
    %158 = arith.mulf %156, %157 : vector<2x8x128xf32>
    %159 = arith.addf %128, %158 : vector<2x8x128xf32>
    %160 = vector.extract_strided_slice %126 {offsets = [0, 0, 0], sizes = [2, 8, 64], strides = [1, 1, 1]} : vector<2x8x128xf32> to vector<2x8x64xf32>
    %161 = vector.extract_strided_slice %159 {offsets = [0, 0, 0], sizes = [2, 8, 64], strides = [1, 1, 1]} : vector<2x8x128xf32> to vector<2x8x64xf32>
    %162 = arith.truncf %160 : vector<2x8x64xf32> to vector<2x8x64xbf16>
    %163 = arith.truncf %161 : vector<2x8x64xf32> to vector<2x8x64xbf16>
    %cst_49 = arith.constant dense<0.000000e+00> : vector<2x8x8xf32>
    %164 = tpu.matmul %162, %163, %cst_49 {dimension_numbers = #tpu.dot_dimension_numbers<[2], [2], [1], [1], [0, 0, 0, 1, 1, 1], [0], [0]>} : vector<2x8x64xbf16>, vector<2x8x64xbf16>, vector<2x8x8xf32> -> vector<2x8x8xf32>
    %cst_50 = arith.constant 1.250000e-01 : f32
    %165 = vector.broadcast %cst_50 : f32 to vector<2x8x8xf32>
    %166 = arith.mulf %164, %165 : vector<2x8x8xf32>
    %cst_51 = arith.constant dense<0xFF800000> : vector<2x8xf32>
    %167 = vector.multi_reduction <maximumf>, %166, %cst_51 [2] : vector<2x8x8xf32> to vector<2x8xf32>
    %168 = vector.shape_cast %167 : vector<2x8xf32> to vector<2x8x1xf32>
    %169 = vector.broadcast %168 : vector<2x8x1xf32> to vector<2x8x8xf32>
    %170 = arith.subf %166, %169 : vector<2x8x8xf32>
    %171 = math.exp %170 : vector<2x8x8xf32>
    %cst_52 = arith.constant dense<0.000000e+00> : vector<2x8xf32>
    %172 = vector.multi_reduction <add>, %171, %cst_52 [2] : vector<2x8x8xf32> to vector<2x8xf32>
    %173 = vector.shape_cast %172 : vector<2x8xf32> to vector<2x8x1xf32>
    %174 = vector.broadcast %173 : vector<2x8x1xf32> to vector<2x8x8xf32>
    %175 = arith.divf %171, %174 : vector<2x8x8xf32>
    %176 = vector.extract_strided_slice %93 {offsets = [0, 0, 0], sizes = [2, 8, 64], strides = [1, 1, 1]} : vector<2x8x128xf32> to vector<2x8x64xf32>
    %177 = arith.truncf %175 : vector<2x8x8xf32> to vector<2x8x8xbf16>
    %178 = arith.truncf %176 : vector<2x8x64xf32> to vector<2x8x64xbf16>
    %cst_53 = arith.constant dense<0.000000e+00> : vector<2x8x64xf32>
    %179 = tpu.matmul %177, %178, %cst_53 {dimension_numbers = #tpu.dot_dimension_numbers<[2], [1], [1], [2], [0, 0, 0, 1, 1, 2], [0], [0]>} : vector<2x8x8xbf16>, vector<2x8x64xbf16>, vector<2x8x64xf32> -> vector<2x8x64xf32>
    %180 = vector.extract_strided_slice %126 {offsets = [0, 0, 64], sizes = [2, 8, 64], strides = [1, 1, 1]} : vector<2x8x128xf32> to vector<2x8x64xf32>
    %181 = vector.extract_strided_slice %159 {offsets = [0, 0, 64], sizes = [2, 8, 64], strides = [1, 1, 1]} : vector<2x8x128xf32> to vector<2x8x64xf32>
    %182 = arith.truncf %180 : vector<2x8x64xf32> to vector<2x8x64xbf16>
    %183 = arith.truncf %181 : vector<2x8x64xf32> to vector<2x8x64xbf16>
    %cst_54 = arith.constant dense<0.000000e+00> : vector<2x8x8xf32>
    %184 = tpu.matmul %182, %183, %cst_54 {dimension_numbers = #tpu.dot_dimension_numbers<[2], [2], [1], [1], [0, 0, 0, 1, 1, 1], [0], [0]>} : vector<2x8x64xbf16>, vector<2x8x64xbf16>, vector<2x8x8xf32> -> vector<2x8x8xf32>
    %cst_55 = arith.constant 1.250000e-01 : f32
    %185 = vector.broadcast %cst_55 : f32 to vector<2x8x8xf32>
    %186 = arith.mulf %184, %185 : vector<2x8x8xf32>
    %cst_56 = arith.constant dense<0xFF800000> : vector<2x8xf32>
    %187 = vector.multi_reduction <maximumf>, %186, %cst_56 [2] : vector<2x8x8xf32> to vector<2x8xf32>
    %188 = vector.shape_cast %187 : vector<2x8xf32> to vector<2x8x1xf32>
    %189 = vector.broadcast %188 : vector<2x8x1xf32> to vector<2x8x8xf32>
    %190 = arith.subf %186, %189 : vector<2x8x8xf32>
    %191 = math.exp %190 : vector<2x8x8xf32>
    %cst_57 = arith.constant dense<0.000000e+00> : vector<2x8xf32>
    %192 = vector.multi_reduction <add>, %191, %cst_57 [2] : vector<2x8x8xf32> to vector<2x8xf32>
    %193 = vector.shape_cast %192 : vector<2x8xf32> to vector<2x8x1xf32>
    %194 = vector.broadcast %193 : vector<2x8x1xf32> to vector<2x8x8xf32>
    %195 = arith.divf %191, %194 : vector<2x8x8xf32>
    %196 = vector.extract_strided_slice %93 {offsets = [0, 0, 64], sizes = [2, 8, 64], strides = [1, 1, 1]} : vector<2x8x128xf32> to vector<2x8x64xf32>
    %197 = arith.truncf %195 : vector<2x8x8xf32> to vector<2x8x8xbf16>
    %198 = arith.truncf %196 : vector<2x8x64xf32> to vector<2x8x64xbf16>
    %cst_58 = arith.constant dense<0.000000e+00> : vector<2x8x64xf32>
    %199 = tpu.matmul %197, %198, %cst_58 {dimension_numbers = #tpu.dot_dimension_numbers<[2], [1], [1], [2], [0, 0, 0, 1, 1, 2], [0], [0]>} : vector<2x8x8xbf16>, vector<2x8x64xbf16>, vector<2x8x64xf32> -> vector<2x8x64xf32>
    %200 = tpu.concatenate %179, %199 in 2 : vector<2x8x64xf32>, vector<2x8x64xf32> -> vector<2x8x128xf32>
    %201 = vector.shape_cast %200 : vector<2x8x128xf32> to vector<16x128xf32>
    %202 = arith.truncf %201 : vector<16x128xf32> to vector<16x128xbf16>
    %cst_59 = arith.constant dense<0.000000e+00> : vector<16x128xf32>
    %203 = tpu.matmul %202, %6, %cst_59 {dimension_numbers = #tpu.dot_dimension_numbers<[1], [0], [0], [1], [0, 0, 1, 1], [], []>} : vector<16x128xbf16>, vector<128x128xbf16>, vector<16x128xf32> -> vector<16x128xf32>
    %204 = vector.extract_strided_slice %1 {offsets = [20, 0], sizes = [1, 128], strides = [1, 1]} : vector<48x128xf32> to vector<1x128xf32>
    %205 = vector.broadcast %204 : vector<1x128xf32> to vector<16x128xf32>
    %206 = arith.addf %203, %205 : vector<16x128xf32>
    %207 = arith.addf %206, %61 : vector<16x128xf32>
    %208 = vector.extract_strided_slice %1 {offsets = [21, 0], sizes = [1, 128], strides = [1, 1]} : vector<48x128xf32> to vector<1x128xf32>
    %209 = vector.extract_strided_slice %1 {offsets = [22, 0], sizes = [1, 128], strides = [1, 1]} : vector<48x128xf32> to vector<1x128xf32>
    %cst_60 = arith.constant dense<0.000000e+00> : vector<16xf32>
    %210 = vector.multi_reduction <add>, %207, %cst_60 [1] : vector<16x128xf32> to vector<16xf32>
    %211 = vector.shape_cast %210 : vector<16xf32> to vector<16x1xf32>
    %cst_61 = arith.constant 1.280000e+02 : f32
    %212 = vector.broadcast %cst_61 : f32 to vector<16x1xf32>
    %213 = arith.divf %211, %212 : vector<16x1xf32>
    %214 = vector.broadcast %213 : vector<16x1xf32> to vector<16x128xf32>
    %215 = arith.subf %207, %214 : vector<16x128xf32>
    %216 = arith.mulf %215, %215 : vector<16x128xf32>
    %cst_62 = arith.constant dense<0.000000e+00> : vector<16xf32>
    %217 = vector.multi_reduction <add>, %216, %cst_62 [1] : vector<16x128xf32> to vector<16xf32>
    %218 = vector.shape_cast %217 : vector<16xf32> to vector<16x1xf32>
    %cst_63 = arith.constant 1.280000e+02 : f32
    %219 = vector.broadcast %cst_63 : f32 to vector<16x1xf32>
    %220 = arith.divf %218, %219 : vector<16x1xf32>
    %221 = vector.broadcast %213 : vector<16x1xf32> to vector<16x128xf32>
    %222 = arith.subf %207, %221 : vector<16x128xf32>
    %cst_64 = arith.constant 9.99999974E-6 : f32
    %223 = vector.broadcast %cst_64 : f32 to vector<16x1xf32>
    %224 = arith.addf %220, %223 : vector<16x1xf32>
    %225 = math.rsqrt %224 : vector<16x1xf32>
    %226 = vector.broadcast %225 : vector<16x1xf32> to vector<16x128xf32>
    %227 = arith.mulf %222, %226 : vector<16x128xf32>
    %228 = vector.broadcast %208 : vector<1x128xf32> to vector<16x128xf32>
    %229 = arith.mulf %227, %228 : vector<16x128xf32>
    %230 = vector.broadcast %209 : vector<1x128xf32> to vector<16x128xf32>
    %231 = arith.addf %229, %230 : vector<16x128xf32>
    %232 = arith.truncf %231 : vector<16x128xf32> to vector<16x128xbf16>
    %cst_65 = arith.constant dense<0.000000e+00> : vector<16x256xf32>
    %233 = tpu.matmul %232, %7, %cst_65 {dimension_numbers = #tpu.dot_dimension_numbers<[1], [0], [0], [1], [0, 0, 1, 1], [], []>} : vector<16x128xbf16>, vector<128x256xbf16>, vector<16x256xf32> -> vector<16x256xf32>
    %234 = vector.broadcast %17 : vector<1x256xf32> to vector<16x256xf32>
    %235 = arith.addf %233, %234 : vector<16x256xf32>
    %236 = vector.extract_strided_slice %235 {offsets = [0, 0], sizes = [16, 128], strides = [1, 1]} : vector<16x256xf32> to vector<16x128xf32>
    %237 = vector.extract_strided_slice %235 {offsets = [0, 128], sizes = [16, 128], strides = [1, 1]} : vector<16x256xf32> to vector<16x128xf32>
    %238 = arith.negf %237 : vector<16x128xf32>
    %239 = math.exp %238 : vector<16x128xf32>
    %cst_66 = arith.constant 1.000000e+00 : f32
    %240 = vector.broadcast %cst_66 : f32 to vector<16x128xf32>
    %241 = arith.addf %240, %239 : vector<16x128xf32>
    %242 = arith.divf %240, %241 : vector<16x128xf32>
    %243 = arith.mulf %236, %242 : vector<16x128xf32>
    %244 = vector.shape_cast %243 : vector<16x128xf32> to vector<2x8x128xf32>
    %cst_67 = arith.constant 0.000000e+00 : f32
    %245 = vector.broadcast %cst_67 : f32 to vector<2x8x128xf32>
    %c0_68 = arith.constant 0 : index
    %c0_69 = arith.constant 0 : index
    %c0_70 = arith.constant 0 : index
    %246 = vector.load %arg13[%c0_68, %c0_69, %c0_70] : memref<2x24x128xf32, #tpu.memory_space<vmem>>, vector<2x8x128xf32>
    tpu.vector_store %arg13[%c0_68, %c0_69, %c0_70], %245 {strides = array<i32>} : memref<2x24x128xf32, #tpu.memory_space<vmem>>, vector<2x8x128xf32>,
    %cst_71 = arith.constant 0.000000e+00 : f32
    %247 = vector.broadcast %cst_71 : f32 to vector<2x8x128xf32>
    %c0_72 = arith.constant 0 : index
    %c16 = arith.constant 16 : index
    %c0_73 = arith.constant 0 : index
    %248 = vector.load %arg13[%c0_72, %c16, %c0_73] : memref<2x24x128xf32, #tpu.memory_space<vmem>>, vector<2x8x128xf32>
    tpu.vector_store %arg13[%c0_72, %c16, %c0_73], %247 {strides = array<i32>} : memref<2x24x128xf32, #tpu.memory_space<vmem>>, vector<2x8x128xf32>,
    %c0_74 = arith.constant 0 : index
    %c8 = arith.constant 8 : index
    %c0_75 = arith.constant 0 : index
    %249 = vector.load %arg13[%c0_74, %c8, %c0_75] : memref<2x24x128xf32, #tpu.memory_space<vmem>>, vector<2x8x128xf32>
    tpu.vector_store %arg13[%c0_74, %c8, %c0_75], %244 {strides = array<i32>} : memref<2x24x128xf32, #tpu.memory_space<vmem>>, vector<2x8x128xf32>,
    %c0_76 = arith.constant 0 : index
    %c1 = arith.constant 1 : index
    %c0_77 = arith.constant 0 : index
    %250 = vector.load %arg13[%c0_76, %c1, %c0_77] : memref<2x24x128xf32, #tpu.memory_space<vmem>>, vector<2x8x128xf32>
    %251 = vector.extract_strided_slice %11 {offsets = [0, 0], sizes = [1, 128], strides = [1, 1]} : vector<15x128xf32> to vector<1x128xf32>
    %252 = vector.shape_cast %251 : vector<1x128xf32> to vector<1x1x128xf32>
    %253 = vector.broadcast %252 : vector<1x1x128xf32> to vector<2x8x128xf32>
    %254 = arith.mulf %250, %253 : vector<2x8x128xf32>
    %c0_78 = arith.constant 0 : index
    %c2 = arith.constant 2 : index
    %c0_79 = arith.constant 0 : index
    %255 = vector.load %arg13[%c0_78, %c2, %c0_79] : memref<2x24x128xf32, #tpu.memory_space<vmem>>, vector<2x8x128xf32>
    %256 = vector.extract_strided_slice %11 {offsets = [1, 0], sizes = [1, 128], strides = [1, 1]} : vector<15x128xf32> to vector<1x128xf32>
    %257 = vector.shape_cast %256 : vector<1x128xf32> to vector<1x1x128xf32>
    %258 = vector.broadcast %257 : vector<1x1x128xf32> to vector<2x8x128xf32>
    %259 = arith.mulf %255, %258 : vector<2x8x128xf32>
    %260 = arith.addf %254, %259 : vector<2x8x128xf32>
    %c0_80 = arith.constant 0 : index
    %c3 = arith.constant 3 : index
    %c0_81 = arith.constant 0 : index
    %261 = vector.load %arg13[%c0_80, %c3, %c0_81] : memref<2x24x128xf32, #tpu.memory_space<vmem>>, vector<2x8x128xf32>
    %262 = vector.extract_strided_slice %11 {offsets = [2, 0], sizes = [1, 128], strides = [1, 1]} : vector<15x128xf32> to vector<1x128xf32>
    %263 = vector.shape_cast %262 : vector<1x128xf32> to vector<1x1x128xf32>
    %264 = vector.broadcast %263 : vector<1x1x128xf32> to vector<2x8x128xf32>
    %265 = arith.mulf %261, %264 : vector<2x8x128xf32>
    %266 = arith.addf %260, %265 : vector<2x8x128xf32>
    %c0_82 = arith.constant 0 : index
    %c4 = arith.constant 4 : index
    %c0_83 = arith.constant 0 : index
    %267 = vector.load %arg13[%c0_82, %c4, %c0_83] : memref<2x24x128xf32, #tpu.memory_space<vmem>>, vector<2x8x128xf32>
    %268 = vector.extract_strided_slice %11 {offsets = [3, 0], sizes = [1, 128], strides = [1, 1]} : vector<15x128xf32> to vector<1x128xf32>
    %269 = vector.shape_cast %268 : vector<1x128xf32> to vector<1x1x128xf32>
    %270 = vector.broadcast %269 : vector<1x1x128xf32> to vector<2x8x128xf32>
    %271 = arith.mulf %267, %270 : vector<2x8x128xf32>
    %272 = arith.addf %266, %271 : vector<2x8x128xf32>
    %c0_84 = arith.constant 0 : index
    %c5 = arith.constant 5 : index
    %c0_85 = arith.constant 0 : index
    %273 = vector.load %arg13[%c0_84, %c5, %c0_85] : memref<2x24x128xf32, #tpu.memory_space<vmem>>, vector<2x8x128xf32>
    %274 = vector.extract_strided_slice %11 {offsets = [4, 0], sizes = [1, 128], strides = [1, 1]} : vector<15x128xf32> to vector<1x128xf32>
    %275 = vector.shape_cast %274 : vector<1x128xf32> to vector<1x1x128xf32>
    %276 = vector.broadcast %275 : vector<1x1x128xf32> to vector<2x8x128xf32>
    %277 = arith.mulf %273, %276 : vector<2x8x128xf32>
    %278 = arith.addf %272, %277 : vector<2x8x128xf32>
    %c0_86 = arith.constant 0 : index
    %c6 = arith.constant 6 : index
    %c0_87 = arith.constant 0 : index
    %279 = vector.load %arg13[%c0_86, %c6, %c0_87] : memref<2x24x128xf32, #tpu.memory_space<vmem>>, vector<2x8x128xf32>
    %280 = vector.extract_strided_slice %11 {offsets = [5, 0], sizes = [1, 128], strides = [1, 1]} : vector<15x128xf32> to vector<1x128xf32>
    %281 = vector.shape_cast %280 : vector<1x128xf32> to vector<1x1x128xf32>
    %282 = vector.broadcast %281 : vector<1x1x128xf32> to vector<2x8x128xf32>
    %283 = arith.mulf %279, %282 : vector<2x8x128xf32>
    %284 = arith.addf %278, %283 : vector<2x8x128xf32>
    %c0_88 = arith.constant 0 : index
    %c7 = arith.constant 7 : index
    %c0_89 = arith.constant 0 : index
    %285 = vector.load %arg13[%c0_88, %c7, %c0_89] : memref<2x24x128xf32, #tpu.memory_space<vmem>>, vector<2x8x128xf32>
    %286 = vector.extract_strided_slice %11 {offsets = [6, 0], sizes = [1, 128], strides = [1, 1]} : vector<15x128xf32> to vector<1x128xf32>
    %287 = vector.shape_cast %286 : vector<1x128xf32> to vector<1x1x128xf32>
    %288 = vector.broadcast %287 : vector<1x1x128xf32> to vector<2x8x128xf32>
    %289 = arith.mulf %285, %288 : vector<2x8x128xf32>
    %290 = arith.addf %284, %289 : vector<2x8x128xf32>
    %c0_90 = arith.constant 0 : index
    %c8_91 = arith.constant 8 : index
    %c0_92 = arith.constant 0 : index
    %291 = vector.load %arg13[%c0_90, %c8_91, %c0_92] : memref<2x24x128xf32, #tpu.memory_space<vmem>>, vector<2x8x128xf32>
    %292 = vector.extract_strided_slice %11 {offsets = [7, 0], sizes = [1, 128], strides = [1, 1]} : vector<15x128xf32> to vector<1x128xf32>
    %293 = vector.shape_cast %292 : vector<1x128xf32> to vector<1x1x128xf32>
    %294 = vector.broadcast %293 : vector<1x1x128xf32> to vector<2x8x128xf32>
    %295 = arith.mulf %291, %294 : vector<2x8x128xf32>
    %296 = arith.addf %290, %295 : vector<2x8x128xf32>
    %c0_93 = arith.constant 0 : index
    %c9 = arith.constant 9 : index
    %c0_94 = arith.constant 0 : index
    %297 = vector.load %arg13[%c0_93, %c9, %c0_94] : memref<2x24x128xf32, #tpu.memory_space<vmem>>, vector<2x8x128xf32>
    %298 = vector.extract_strided_slice %11 {offsets = [8, 0], sizes = [1, 128], strides = [1, 1]} : vector<15x128xf32> to vector<1x128xf32>
    %299 = vector.shape_cast %298 : vector<1x128xf32> to vector<1x1x128xf32>
    %300 = vector.broadcast %299 : vector<1x1x128xf32> to vector<2x8x128xf32>
    %301 = arith.mulf %297, %300 : vector<2x8x128xf32>
    %302 = arith.addf %296, %301 : vector<2x8x128xf32>
    %c0_95 = arith.constant 0 : index
    %c10 = arith.constant 10 : index
    %c0_96 = arith.constant 0 : index
    %303 = vector.load %arg13[%c0_95, %c10, %c0_96] : memref<2x24x128xf32, #tpu.memory_space<vmem>>, vector<2x8x128xf32>
    %304 = vector.extract_strided_slice %11 {offsets = [9, 0], sizes = [1, 128], strides = [1, 1]} : vector<15x128xf32> to vector<1x128xf32>
    %305 = vector.shape_cast %304 : vector<1x128xf32> to vector<1x1x128xf32>
    %306 = vector.broadcast %305 : vector<1x1x128xf32> to vector<2x8x128xf32>
    %307 = arith.mulf %303, %306 : vector<2x8x128xf32>
    %308 = arith.addf %302, %307 : vector<2x8x128xf32>
    %c0_97 = arith.constant 0 : index
    %c11 = arith.constant 11 : index
    %c0_98 = arith.constant 0 : index
    %309 = vector.load %arg13[%c0_97, %c11, %c0_98] : memref<2x24x128xf32, #tpu.memory_space<vmem>>, vector<2x8x128xf32>
    %310 = vector.extract_strided_slice %11 {offsets = [10, 0], sizes = [1, 128], strides = [1, 1]} : vector<15x128xf32> to vector<1x128xf32>
    %311 = vector.shape_cast %310 : vector<1x128xf32> to vector<1x1x128xf32>
    %312 = vector.broadcast %311 : vector<1x1x128xf32> to vector<2x8x128xf32>
    %313 = arith.mulf %309, %312 : vector<2x8x128xf32>
    %314 = arith.addf %308, %313 : vector<2x8x128xf32>
    %c0_99 = arith.constant 0 : index
    %c12 = arith.constant 12 : index
    %c0_100 = arith.constant 0 : index
    %315 = vector.load %arg13[%c0_99, %c12, %c0_100] : memref<2x24x128xf32, #tpu.memory_space<vmem>>, vector<2x8x128xf32>
    %316 = vector.extract_strided_slice %11 {offsets = [11, 0], sizes = [1, 128], strides = [1, 1]} : vector<15x128xf32> to vector<1x128xf32>
    %317 = vector.shape_cast %316 : vector<1x128xf32> to vector<1x1x128xf32>
    %318 = vector.broadcast %317 : vector<1x1x128xf32> to vector<2x8x128xf32>
    %319 = arith.mulf %315, %318 : vector<2x8x128xf32>
    %320 = arith.addf %314, %319 : vector<2x8x128xf32>
    %c0_101 = arith.constant 0 : index
    %c13 = arith.constant 13 : index
    %c0_102 = arith.constant 0 : index
    %321 = vector.load %arg13[%c0_101, %c13, %c0_102] : memref<2x24x128xf32, #tpu.memory_space<vmem>>, vector<2x8x128xf32>
    %322 = vector.extract_strided_slice %11 {offsets = [12, 0], sizes = [1, 128], strides = [1, 1]} : vector<15x128xf32> to vector<1x128xf32>
    %323 = vector.shape_cast %322 : vector<1x128xf32> to vector<1x1x128xf32>
    %324 = vector.broadcast %323 : vector<1x1x128xf32> to vector<2x8x128xf32>
    %325 = arith.mulf %321, %324 : vector<2x8x128xf32>
    %326 = arith.addf %320, %325 : vector<2x8x128xf32>
    %c0_103 = arith.constant 0 : index
    %c14 = arith.constant 14 : index
    %c0_104 = arith.constant 0 : index
    %327 = vector.load %arg13[%c0_103, %c14, %c0_104] : memref<2x24x128xf32, #tpu.memory_space<vmem>>, vector<2x8x128xf32>
    %328 = vector.extract_strided_slice %11 {offsets = [13, 0], sizes = [1, 128], strides = [1, 1]} : vector<15x128xf32> to vector<1x128xf32>
    %329 = vector.shape_cast %328 : vector<1x128xf32> to vector<1x1x128xf32>
    %330 = vector.broadcast %329 : vector<1x1x128xf32> to vector<2x8x128xf32>
    %331 = arith.mulf %327, %330 : vector<2x8x128xf32>
    %332 = arith.addf %326, %331 : vector<2x8x128xf32>
    %c0_105 = arith.constant 0 : index
    %c15 = arith.constant 15 : index
    %c0_106 = arith.constant 0 : index
    %333 = vector.load %arg13[%c0_105, %c15, %c0_106] : memref<2x24x128xf32, #tpu.memory_space<vmem>>, vector<2x8x128xf32>
    %334 = vector.extract_strided_slice %11 {offsets = [14, 0], sizes = [1, 128], strides = [1, 1]} : vector<15x128xf32> to vector<1x128xf32>
    %335 = vector.shape_cast %334 : vector<1x128xf32> to vector<1x1x128xf32>
    %336 = vector.broadcast %335 : vector<1x1x128xf32> to vector<2x8x128xf32>
    %337 = arith.mulf %333, %336 : vector<2x8x128xf32>
    %338 = arith.addf %332, %337 : vector<2x8x128xf32>
    %339 = vector.extract_strided_slice %1 {offsets = [23, 0], sizes = [1, 128], strides = [1, 1]} : vector<48x128xf32> to vector<1x128xf32>
    %340 = vector.shape_cast %339 : vector<1x128xf32> to vector<1x1x128xf32>
    %341 = vector.broadcast %340 : vector<1x1x128xf32> to vector<2x8x128xf32>
    %342 = arith.addf %338, %341 : vector<2x8x128xf32>
    %343 = vector.shape_cast %342 : vector<2x8x128xf32> to vector<16x128xf32>
    %344 = vector.extract_strided_slice %1 {offsets = [24, 0], sizes = [1, 128], strides = [1, 1]} : vector<48x128xf32> to vector<1x128xf32>
    %345 = vector.extract_strided_slice %1 {offsets = [25, 0], sizes = [1, 128], strides = [1, 1]} : vector<48x128xf32> to vector<1x128xf32>
    %cst_107 = arith.constant dense<0.000000e+00> : vector<16xf32>
    %346 = vector.multi_reduction <add>, %343, %cst_107 [1] : vector<16x128xf32> to vector<16xf32>
    %347 = vector.shape_cast %346 : vector<16xf32> to vector<16x1xf32>
    %cst_108 = arith.constant 1.280000e+02 : f32
    %348 = vector.broadcast %cst_108 : f32 to vector<16x1xf32>
    %349 = arith.divf %347, %348 : vector<16x1xf32>
    %350 = vector.broadcast %349 : vector<16x1xf32> to vector<16x128xf32>
    %351 = arith.subf %343, %350 : vector<16x128xf32>
    %352 = arith.mulf %351, %351 : vector<16x128xf32>
    %cst_109 = arith.constant dense<0.000000e+00> : vector<16xf32>
    %353 = vector.multi_reduction <add>, %352, %cst_109 [1] : vector<16x128xf32> to vector<16xf32>
    %354 = vector.shape_cast %353 : vector<16xf32> to vector<16x1xf32>
    %cst_110 = arith.constant 1.280000e+02 : f32
    %355 = vector.broadcast %cst_110 : f32 to vector<16x1xf32>
    %356 = arith.divf %354, %355 : vector<16x1xf32>
    %357 = vector.broadcast %349 : vector<16x1xf32> to vector<16x128xf32>
    %358 = arith.subf %343, %357 : vector<16x128xf32>
    %cst_111 = arith.constant 9.99999974E-6 : f32
    %359 = vector.broadcast %cst_111 : f32 to vector<16x1xf32>
    %360 = arith.addf %356, %359 : vector<16x1xf32>
    %361 = math.rsqrt %360 : vector<16x1xf32>
    %362 = vector.broadcast %361 : vector<16x1xf32> to vector<16x128xf32>
    %363 = arith.mulf %358, %362 : vector<16x128xf32>
    %364 = vector.broadcast %344 : vector<1x128xf32> to vector<16x128xf32>
    %365 = arith.mulf %363, %364 : vector<16x128xf32>
    %366 = vector.broadcast %345 : vector<1x128xf32> to vector<16x128xf32>
    %367 = arith.addf %365, %366 : vector<16x128xf32>
    %368 = arith.negf %367 : vector<16x128xf32>
    %369 = math.exp %368 : vector<16x128xf32>
    %cst_112 = arith.constant 1.000000e+00 : f32
    %370 = vector.broadcast %cst_112 : f32 to vector<16x128xf32>
    %371 = arith.addf %370, %369 : vector<16x128xf32>
    %372 = arith.divf %370, %371 : vector<16x128xf32>
    %373 = arith.mulf %367, %372 : vector<16x128xf32>
    %374 = arith.truncf %373 : vector<16x128xf32> to vector<16x128xbf16>
    %cst_113 = arith.constant dense<0.000000e+00> : vector<16x128xf32>
    %375 = tpu.matmul %374, %8, %cst_113 {dimension_numbers = #tpu.dot_dimension_numbers<[1], [0], [0], [1], [0, 0, 1, 1], [], []>} : vector<16x128xbf16>, vector<128x128xbf16>, vector<16x128xf32> -> vector<16x128xf32>
    %376 = vector.extract_strided_slice %1 {offsets = [26, 0], sizes = [1, 128], strides = [1, 1]} : vector<48x128xf32> to vector<1x128xf32>
    %377 = vector.broadcast %376 : vector<1x128xf32> to vector<16x128xf32>
    %378 = arith.addf %375, %377 : vector<16x128xf32>
    %379 = arith.addf %378, %207 : vector<16x128xf32>
    %380 = vector.extract_strided_slice %1 {offsets = [27, 0], sizes = [1, 128], strides = [1, 1]} : vector<48x128xf32> to vector<1x128xf32>
    %381 = vector.extract_strided_slice %1 {offsets = [28, 0], sizes = [1, 128], strides = [1, 1]} : vector<48x128xf32> to vector<1x128xf32>
    %382 = vector.extract_strided_slice %1 {offsets = [29, 0], sizes = [1, 128], strides = [1, 1]} : vector<48x128xf32> to vector<1x128xf32>
    %cst_114 = arith.constant dense<0.000000e+00> : vector<16xf32>
    %383 = vector.multi_reduction <add>, %379, %cst_114 [1] : vector<16x128xf32> to vector<16xf32>
    %384 = vector.shape_cast %383 : vector<16xf32> to vector<16x1xf32>
    %cst_115 = arith.constant 1.280000e+02 : f32
    %385 = vector.broadcast %cst_115 : f32 to vector<16x1xf32>
    %386 = arith.divf %384, %385 : vector<16x1xf32>
    %387 = vector.broadcast %386 : vector<16x1xf32> to vector<16x128xf32>
    %388 = arith.subf %379, %387 : vector<16x128xf32>
    %389 = arith.mulf %388, %388 : vector<16x128xf32>
    %cst_116 = arith.constant dense<0.000000e+00> : vector<16xf32>
    %390 = vector.multi_reduction <add>, %389, %cst_116 [1] : vector<16x128xf32> to vector<16xf32>
    %391 = vector.shape_cast %390 : vector<16xf32> to vector<16x1xf32>
    %cst_117 = arith.constant 1.280000e+02 : f32
    %392 = vector.broadcast %cst_117 : f32 to vector<16x1xf32>
    %393 = arith.divf %391, %392 : vector<16x1xf32>
    %394 = vector.broadcast %386 : vector<16x1xf32> to vector<16x128xf32>
    %395 = arith.subf %379, %394 : vector<16x128xf32>
    %cst_118 = arith.constant 9.99999974E-6 : f32
    %396 = vector.broadcast %cst_118 : f32 to vector<16x1xf32>
    %397 = arith.addf %393, %396 : vector<16x1xf32>
    %398 = math.rsqrt %397 : vector<16x1xf32>
    %399 = vector.broadcast %398 : vector<16x1xf32> to vector<16x128xf32>
    %400 = arith.mulf %395, %399 : vector<16x128xf32>
    %401 = vector.broadcast %380 : vector<1x128xf32> to vector<16x128xf32>
    %402 = arith.mulf %400, %401 : vector<16x128xf32>
    %403 = vector.broadcast %381 : vector<1x128xf32> to vector<16x128xf32>
    %404 = arith.addf %402, %403 : vector<16x128xf32>
    %405 = arith.truncf %404 : vector<16x128xf32> to vector<16x128xbf16>
    %cst_119 = arith.constant dense<0.000000e+00> : vector<16x256xf32>
    %406 = tpu.matmul %405, %9, %cst_119 {dimension_numbers = #tpu.dot_dimension_numbers<[1], [0], [0], [1], [0, 0, 1, 1], [], []>} : vector<16x128xbf16>, vector<128x256xbf16>, vector<16x256xf32> -> vector<16x256xf32>
    %407 = vector.broadcast %18 : vector<1x256xf32> to vector<16x256xf32>
    %408 = arith.addf %406, %407 : vector<16x256xf32>
    %409 = arith.negf %408 : vector<16x256xf32>
    %410 = math.exp %409 : vector<16x256xf32>
    %cst_120 = arith.constant 1.000000e+00 : f32
    %411 = vector.broadcast %cst_120 : f32 to vector<16x256xf32>
    %412 = arith.addf %411, %410 : vector<16x256xf32>
    %413 = arith.divf %411, %412 : vector<16x256xf32>
    %414 = arith.mulf %408, %413 : vector<16x256xf32>
    %415 = arith.truncf %414 : vector<16x256xf32> to vector<16x256xbf16>
    %cst_121 = arith.constant dense<0.000000e+00> : vector<16x128xf32>
    %416 = tpu.matmul %415, %10, %cst_121 {dimension_numbers = #tpu.dot_dimension_numbers<[1], [0], [0], [1], [0, 0, 1, 1], [], []>} : vector<16x256xbf16>, vector<256x128xbf16>, vector<16x128xf32> -> vector<16x128xf32>
    %417 = vector.broadcast %382 : vector<1x128xf32> to vector<16x128xf32>
    %418 = arith.addf %416, %417 : vector<16x128xf32>
    %cst_122 = arith.constant 5.000000e-01 : f32
    %419 = vector.broadcast %cst_122 : f32 to vector<16x128xf32>
    %420 = arith.mulf %418, %419 : vector<16x128xf32>
    %421 = arith.addf %420, %379 : vector<16x128xf32>
    %422 = vector.extract_strided_slice %1 {offsets = [30, 0], sizes = [1, 128], strides = [1, 1]} : vector<48x128xf32> to vector<1x128xf32>
    %423 = vector.extract_strided_slice %1 {offsets = [31, 0], sizes = [1, 128], strides = [1, 1]} : vector<48x128xf32> to vector<1x128xf32>
    %cst_123 = arith.constant dense<0.000000e+00> : vector<16xf32>
    %424 = vector.multi_reduction <add>, %421, %cst_123 [1] : vector<16x128xf32> to vector<16xf32>
    %425 = vector.shape_cast %424 : vector<16xf32> to vector<16x1xf32>
    %cst_124 = arith.constant 1.280000e+02 : f32
    %426 = vector.broadcast %cst_124 : f32 to vector<16x1xf32>
    %427 = arith.divf %425, %426 : vector<16x1xf32>
    %428 = vector.broadcast %427 : vector<16x1xf32> to vector<16x128xf32>
    %429 = arith.subf %421, %428 : vector<16x128xf32>
    %430 = arith.mulf %429, %429 : vector<16x128xf32>
    %cst_125 = arith.constant dense<0.000000e+00> : vector<16xf32>
    %431 = vector.multi_reduction <add>, %430, %cst_125 [1] : vector<16x128xf32> to vector<16xf32>
    %432 = vector.shape_cast %431 : vector<16xf32> to vector<16x1xf32>
    %cst_126 = arith.constant 1.280000e+02 : f32
    %433 = vector.broadcast %cst_126 : f32 to vector<16x1xf32>
    %434 = arith.divf %432, %433 : vector<16x1xf32>
    %435 = vector.broadcast %427 : vector<16x1xf32> to vector<16x128xf32>
    %436 = arith.subf %421, %435 : vector<16x128xf32>
    %cst_127 = arith.constant 9.99999974E-6 : f32
    %437 = vector.broadcast %cst_127 : f32 to vector<16x1xf32>
    %438 = arith.addf %434, %437 : vector<16x1xf32>
    %439 = math.rsqrt %438 : vector<16x1xf32>
    %440 = vector.broadcast %439 : vector<16x1xf32> to vector<16x128xf32>
    %441 = arith.mulf %436, %440 : vector<16x128xf32>
    %442 = vector.broadcast %422 : vector<1x128xf32> to vector<16x128xf32>
    %443 = arith.mulf %441, %442 : vector<16x128xf32>
    %444 = vector.broadcast %423 : vector<1x128xf32> to vector<16x128xf32>
    %445 = arith.addf %443, %444 : vector<16x128xf32>
    %446 = vector.shape_cast %445 : vector<16x128xf32> to vector<2x8x128xf32>
    %c0_128 = arith.constant 0 : index
    %c0_129 = arith.constant 0 : index
    %c0_130 = arith.constant 0 : index
    %447 = vector.load %arg12[%c0_128, %c0_129, %c0_130] : memref<2x8x128xf32, #tpu.memory_space<vmem>>, vector<2x8x128xf32>
    tpu.vector_store %arg12[%c0_128, %c0_129, %c0_130], %446 {strides = array<i32>} : memref<2x8x128xf32, #tpu.memory_space<vmem>>, vector<2x8x128xf32>,
    return
  }
  func.func @transform_0(%arg0: i32) -> (i32, i32, i32) {
    %c0_i32 = arith.constant 0 : i32
    %c0_i32_0 = arith.constant 0 : i32
    %c0_i32_1 = arith.constant 0 : i32
    return %arg0, %c0_i32, %c0_i32_0 : i32, i32, i32
  }
  func.func @transform_1(%arg0: i32) -> (i32, i32) {
    %c0_i32 = arith.constant 0 : i32
    %c0_i32_0 = arith.constant 0 : i32
    %c0_i32_1 = arith.constant 0 : i32
    return %c0_i32, %c0_i32_0 : i32, i32
  }
  func.func @transform_2(%arg0: i32) -> (i32, i32) {
    %c0_i32 = arith.constant 0 : i32
    %c0_i32_0 = arith.constant 0 : i32
    %c0_i32_1 = arith.constant 0 : i32
    return %c0_i32, %c0_i32_0 : i32, i32
  }
  func.func @transform_3(%arg0: i32) -> (i32, i32) {
    %c0_i32 = arith.constant 0 : i32
    %c0_i32_0 = arith.constant 0 : i32
    %c0_i32_1 = arith.constant 0 : i32
    return %c0_i32, %c0_i32_0 : i32, i32
  }
  func.func @transform_4(%arg0: i32) -> (i32, i32) {
    %c0_i32 = arith.constant 0 : i32
    %c0_i32_0 = arith.constant 0 : i32
    %c0_i32_1 = arith.constant 0 : i32
    return %c0_i32, %c0_i32_0 : i32, i32
  }
  func.func @transform_5(%arg0: i32) -> (i32, i32) {
    %c0_i32 = arith.constant 0 : i32
    %c0_i32_0 = arith.constant 0 : i32
    %c0_i32_1 = arith.constant 0 : i32
    return %c0_i32, %c0_i32_0 : i32, i32
  }
  func.func @transform_6(%arg0: i32) -> (i32, i32) {
    %c0_i32 = arith.constant 0 : i32
    %c0_i32_0 = arith.constant 0 : i32
    %c0_i32_1 = arith.constant 0 : i32
    return %c0_i32, %c0_i32_0 : i32, i32
  }
  func.func @transform_7(%arg0: i32) -> (i32, i32) {
    %c0_i32 = arith.constant 0 : i32
    %c0_i32_0 = arith.constant 0 : i32
    %c0_i32_1 = arith.constant 0 : i32
    return %c0_i32, %c0_i32_0 : i32, i32
  }
  func.func @transform_8(%arg0: i32) -> (i32, i32) {
    %c0_i32 = arith.constant 0 : i32
    %c0_i32_0 = arith.constant 0 : i32
    %c0_i32_1 = arith.constant 0 : i32
    return %c0_i32, %c0_i32_0 : i32, i32
  }
  func.func @transform_9(%arg0: i32) -> (i32, i32) {
    %c0_i32 = arith.constant 0 : i32
    %c0_i32_0 = arith.constant 0 : i32
    %c0_i32_1 = arith.constant 0 : i32
    return %c0_i32, %c0_i32_0 : i32, i32
  }
  func.func @transform_10(%arg0: i32) -> (i32, i32) {
    %c0_i32 = arith.constant 0 : i32
    %c0_i32_0 = arith.constant 0 : i32
    %c0_i32_1 = arith.constant 0 : i32
    return %c0_i32, %c0_i32_0 : i32, i32
  }
  func.func @transform_11(%arg0: i32) -> (i32, i32, i32) {
    %c0_i32 = arith.constant 0 : i32
    %c0_i32_0 = arith.constant 0 : i32
    %c0_i32_1 = arith.constant 0 : i32
    return %arg0, %c0_i32, %c0_i32_0 : i32, i32, i32
  }
}

</mosaic_0001>

<llo_original>
// kernel: tpu_custom_call.1
$region0: #{tpu_custom_call.1}
  #allocation0 [shape = 'u32[]', space=smem, size = 0x4, offset = 0x4, fixed_abs, tag = 'smem constant byte address 0x4 - core index']
  #allocation1 [shape = 'u32[72,128]{1,0:T(1,128)}', space=vmem, size = 0x9000, scoped, tag = 'internal scratch']
  #allocation2 [shape = 'f32[2,24,128]{2,1,0:T(8,128)}', space=vmem, size = 0x6000, scoped, tag = 'scratch operand']
  %s0 = inlined_call_operand.hbm [shape: f32[2,8,128], index: 0, kind: input, shape index: {}]
  %s1 = inlined_call_operand.hbm [shape: f32[48,128], index: 1, kind: input, shape index: {}]
  %s2 = inlined_call_operand.hbm [shape: f32[3,256], index: 2, kind: input, shape index: {}]
  %s3 = inlined_call_operand.hbm [shape: bf16[128,256], index: 3, kind: input, shape index: {}]
  %s4 = inlined_call_operand.hbm [shape: bf16[256,128], index: 4, kind: input, shape index: {}]
  %s5 = inlined_call_operand.hbm [shape: bf16[128,384], index: 5, kind: input, shape index: {}]
  %s6 = inlined_call_operand.hbm [shape: bf16[128,128], index: 6, kind: input, shape index: {}]
  %s7 = inlined_call_operand.hbm [shape: bf16[128,256], index: 7, kind: input, shape index: {}]
  %s8 = inlined_call_operand.hbm [shape: bf16[128,128], index: 8, kind: input, shape index: {}]
  %s9 = inlined_call_operand.hbm [shape: bf16[128,256], index: 9, kind: input, shape index: {}]
  %s10 = inlined_call_operand.hbm [shape: bf16[256,128], index: 10, kind: input, shape index: {}]
  %s11 = inlined_call_operand.hbm [shape: f32[2,8,128], index: 11, kind: output, shape index: {}]
  %s12 = sld [smem:[#allocation0]]
  $region98: #{tpu_custom_call.1} parent=0
    _
  %s14 = ssub.s32 1, %s12
  %s15 = scalar_select 0, %s14, %s12
  $region1: #{tpu_custom_call.1} parent=0
    #allocation3 [shape = 'u8[8192]{0}', space=vmem, size = 0x2000, scoped, tag = 'input window, operand 0, single buffered']
    #allocation4 [shape = 's32[1]{0}', space=sflag, size = 0x4, scoped, tag = 'scoped memory for tpu_custom_call.1']
    #allocation5 [shape = 's32[1]{0}', space=sflag, size = 0x4, scoped, tag = 'scoped memory for tpu_custom_call.1']
    #allocation6 [shape = 'u8[24576]{0}', space=vmem, size = 0x6000, scoped, tag = 'input window, operand 1, single buffered']
    #allocation7 [shape = 's32[1]{0}', space=sflag, size = 0x4, scoped, tag = 'scoped memory for tpu_custom_call.1']
    #allocation8 [shape = 'u8[4096]{0}', space=vmem, size = 0x1000, scoped, tag = 'input window, operand 2, single buffered']
    #allocation9 [shape = 'u8[65536]{0}', space=vmem, size = 0x10000, scoped, tag = 'input window, operand 3, single buffered']
    #allocation10 [shape = 's32[1]{0}', space=sflag, size = 0x4, scoped, tag = 'scoped memory for tpu_custom_call.1']
    #allocation11 [shape = 'u8[65536]{0}', space=vmem, size = 0x10000, scoped, tag = 'input window, operand 4, single buffered']
    #allocation12 [shape = 'u8[98304]{0}', space=vmem, size = 0x18000, scoped, tag = 'input window, operand 5, single buffered']
    #allocation13 [shape = 's32[1]{0}', space=sflag, size = 0x4, scoped, tag = 'scoped memory for tpu_custom_call.1']
    #allocation14 [shape = 'u8[32768]{0}', space=vmem, size = 0x8000, scoped, tag = 'input window, operand 6, single buffered']
    #allocation15 [shape = 'u8[65536]{0}', space=vmem, size = 0x10000, scoped, tag = 'input window, operand 7, single buffered']
    #allocation16 [shape = 's32[1]{0}', space=sflag, size = 0x4, scoped, tag = 'scoped memory for tpu_custom_call.1']
    #allocation17 [shape = 'u8[32768]{0}', space=vmem, size = 0x8000, scoped, tag = 'input window, operand 8, single buffered']
    #allocation18 [shape = 'u8[65536]{0}', space=vmem, size = 0x10000, scoped, tag = 'input window, operand 9, single buffered']
    #allocation19 [shape = 's32[1]{0}', space=sflag, size = 0x4, scoped, tag = 'scoped memory for tpu_custom_call.1']
    #allocation20 [shape = 'u8[65536]{0}', space=vmem, size = 0x10000, scoped, tag = 'input window, operand 10, single buffered']
    #allocation21 [shape = 'u8[8192]{0}', space=vmem, size = 0x2000, scoped, tag = 'output window, operand 0, single buffered']
    %16 = vsyncpa [#allocation4], 0
    %17 = vsyncpa [#allocation7], 0
    %18 = vsyncpa [#allocation10], 0
    %19 = vsyncpa [#allocation13], 0
    %20 = vsyncpa [#allocation16], 0
    %21 = vsyncpa [#allocation19], 0
    %22 = vsyncpa [#allocation5], 0
    // Predicated region
    $region2: #{tpu_custom_call.1} parent=1 // pred_check
      _
    $region3: #{tpu_custom_call.1} parent=1 // pred_check_branch
      %24 = sbr.rel (0) target = $region5
    $region4: #{tpu_custom_call.1} parent=1 // pred_region
      %26 = vsyncadd [#allocation4], 0
      %s27 = sshll.u32 %s0, 4
      %s28 = int_to_ptr.hbm [resolvable:$true] %s27
      %s29 = sshll.u32 [#allocation3], 4
      %s30 = int_to_ptr.vmem [resolvable:$true] %s29
      %35 = dma.hbm_to_vmem [thread:$0]  %s28, 256, %s30, [#allocation4], 128, 128, 8
    $region5: #{tpu_custom_call.1} parent=1 // pred_fallthru
      _
    // Predicated region
    $region6: #{tpu_custom_call.1} parent=1 // pred_check
      _
    $region7: #{tpu_custom_call.1} parent=1 // pred_check_branch
      %37 = sbr.rel (0) target = $region9
    $region8: #{tpu_custom_call.1} parent=1 // pred_region
      %39 = vsyncadd [#allocation7], 0
      %s40 = sshll.u32 %s1, 4
      %s41 = int_to_ptr.hbm [resolvable:$true] %s40
      %s42 = sshll.u32 [#allocation6], 4
      %s43 = int_to_ptr.vmem [resolvable:$true] %s42
      %48 = dma.hbm_to_vmem [thread:$0]  %s41, 768, %s43, [#allocation7], 128, 128, 8
    $region9: #{tpu_custom_call.1} parent=1 // pred_fallthru
      _
    // Predicated region
    $region10: #{tpu_custom_call.1} parent=1 // pred_check
      _
    $region11: #{tpu_custom_call.1} parent=1 // pred_check_branch
      %50 = sbr.rel (0) target = $region13
    $region12: #{tpu_custom_call.1} parent=1 // pred_region
      %52 = vsyncadd [#allocation7], 0
      %s54 = sshll.u32 %s2, 4
      %s55 = int_to_ptr.hbm [resolvable:$true] %s54
      %s56 = sshll.u32 [#allocation8], 4
      %s57 = int_to_ptr.vmem [resolvable:$true] %s56
      %59 = dma.hbm_to_vmem [thread:$0]  %s55, 128, %s57, [#allocation7]
    $region13: #{tpu_custom_call.1} parent=1 // pred_fallthru
      _
    // Predicated region
    $region14: #{tpu_custom_call.1} parent=1 // pred_check
      _
    $region15: #{tpu_custom_call.1} parent=1 // pred_check_branch
      %61 = sbr.rel (0) target = $region17
    $region16: #{tpu_custom_call.1} parent=1 // pred_region
      %63 = vsyncadd [#allocation10], 0
      %s64 = sshll.u32 %s3, 4
      %s65 = int_to_ptr.hbm [resolvable:$true] %s64
      %s66 = sshll.u32 [#allocation9], 4
      %s67 = int_to_ptr.vmem [resolvable:$true] %s66
      %72 = dma.hbm_to_vmem [thread:$0]  %s65, 2048, %s67, [#allocation10], 128, 128, 8
    $region17: #{tpu_custom_call.1} parent=1 // pred_fallthru
      _
    // Predicated region
    $region18: #{tpu_custom_call.1} parent=1 // pred_check
      _
    $region19: #{tpu_custom_call.1} parent=1 // pred_check_branch
      %74 = sbr.rel (0) target = $region21
    $region20: #{tpu_custom_call.1} parent=1 // pred_region
      %76 = vsyncadd [#allocation10], 0
      %s77 = sshll.u32 %s4, 4
      %s78 = int_to_ptr.hbm [resolvable:$true] %s77
      %s79 = sshll.u32 [#allocation11], 4
      %s80 = int_to_ptr.vmem [resolvable:$true] %s79
      %85 = dma.hbm_to_vmem [thread:$0]  %s78, 2048, %s80, [#allocation10], 64, 64, 4
    $region21: #{tpu_custom_call.1} parent=1 // pred_fallthru
      _
    // Predicated region
    $region22: #{tpu_custom_call.1} parent=1 // pred_check
      _
    $region23: #{tpu_custom_call.1} parent=1 // pred_check_branch
      %87 = sbr.rel (0) target = $region25
    $region24: #{tpu_custom_call.1} parent=1 // pred_region
      %89 = vsyncadd [#allocation13], 0
      %s90 = sshll.u32 %s5, 4
      %s91 = int_to_ptr.hbm [resolvable:$true] %s90
      %s92 = sshll.u32 [#allocation12], 4
      %s93 = int_to_ptr.vmem [resolvable:$true] %s92
      %98 = dma.hbm_to_vmem [thread:$0]  %s91, 3072, %s93, [#allocation13], 192, 192, 12
    $region25: #{tpu_custom_call.1} parent=1 // pred_fallthru
      _
    // Predicated region
    $region26: #{tpu_custom_call.1} parent=1 // pred_check
      _
    $region27: #{tpu_custom_call.1} parent=1 // pred_check_branch
      %100 = sbr.rel (0) target = $region29
    $region28: #{tpu_custom_call.1} parent=1 // pred_region
      %102 = vsyncadd [#allocation13], 0
      %s103 = sshll.u32 %s6, 4
      %s104 = int_to_ptr.hbm [resolvable:$true] %s103
      %s105 = sshll.u32 [#allocation14], 4
      %s106 = int_to_ptr.vmem [resolvable:$true] %s105
      %111 = dma.hbm_to_vmem [thread:$0]  %s104, 1024, %s106, [#allocation13], 64, 64, 4
    $region29: #{tpu_custom_call.1} parent=1 // pred_fallthru
      _
    // Predicated region
    $region30: #{tpu_custom_call.1} parent=1 // pred_check
      _
    $region31: #{tpu_custom_call.1} parent=1 // pred_check_branch
      %113 = sbr.rel (0) target = $region33
    $region32: #{tpu_custom_call.1} parent=1 // pred_region
      %115 = vsyncadd [#allocation16], 0
      %s116 = sshll.u32 %s7, 4
      %s117 = int_to_ptr.hbm [resolvable:$true] %s116
      %s118 = sshll.u32 [#allocation15], 4
      %s119 = int_to_ptr.vmem [resolvable:$true] %s118
      %124 = dma.hbm_to_vmem [thread:$0]  %s117, 2048, %s119, [#allocation16], 128, 128, 8
    $region33: #{tpu_custom_call.1} parent=1 // pred_fallthru
      _
    // Predicated region
    $region34: #{tpu_custom_call.1} parent=1 // pred_check
      _
    $region35: #{tpu_custom_call.1} parent=1 // pred_check_branch
      %126 = sbr.rel (0) target = $region37
    $region36: #{tpu_custom_call.1} parent=1 // pred_region
      %128 = vsyncadd [#allocation16], 0
      %s129 = sshll.u32 %s8, 4
      %s130 = int_to_ptr.hbm [resolvable:$true] %s129
      %s131 = sshll.u32 [#allocation17], 4
      %s132 = int_to_ptr.vmem [resolvable:$true] %s131
      %137 = dma.hbm_to_vmem [thread:$0]  %s130, 1024, %s132, [#allocation16], 64, 64, 4
    $region37: #{tpu_custom_call.1} parent=1 // pred_fallthru
      _
    // Predicated region
    $region38: #{tpu_custom_call.1} parent=1 // pred_check
      _
    $region39: #{tpu_custom_call.1} parent=1 // pred_check_branch
      %139 = sbr.rel (0) target = $region41
    $region40: #{tpu_custom_call.1} parent=1 // pred_region
      %141 = vsyncadd [#allocation19], 0
      %s142 = sshll.u32 %s9, 4
      %s143 = int_to_ptr.hbm [resolvable:$true] %s142
      %s144 = sshll.u32 [#allocation18], 4
      %s145 = int_to_ptr.vmem [resolvable:$true] %s144
      %150 = dma.hbm_to_vmem [thread:$0]  %s143, 2048, %s145, [#allocation19], 128, 128, 8
    $region41: #{tpu_custom_call.1} parent=1 // pred_fallthru
      _
    // Predicated region
    $region42: #{tpu_custom_call.1} parent=1 // pred_check
      _
    $region43: #{tpu_custom_call.1} parent=1 // pred_check_branch
      %152 = sbr.rel (0) target = $region45
    $region44: #{tpu_custom_call.1} parent=1 // pred_region
      %154 = vsyncadd [#allocation19], 0
      %s155 = sshll.u32 %s10, 4
      %s156 = int_to_ptr.hbm [resolvable:$true] %s155
      %s157 = sshll.u32 [#allocation20], 4
      %s158 = int_to_ptr.vmem [resolvable:$true] %s157
      %163 = dma.hbm_to_vmem [thread:$0]  %s156, 2048, %s158, [#allocation19], 64, 64, 4
    $region45: #{tpu_custom_call.1} parent=1 // pred_fallthru
      _
    // Predicated region
    $region46: #{tpu_custom_call.1} parent=1 // pred_check
      _
    $region47: #{tpu_custom_call.1} parent=1 // pred_check_branch
      %165 = sbr.rel (0) target = $region49
    $region48: #{tpu_custom_call.1} parent=1 // pred_region
      %167 = dma.done [#allocation4], 256
    $region49: #{tpu_custom_call.1} parent=1 // pred_fallthru
      _
    // Predicated region
    $region50: #{tpu_custom_call.1} parent=1 // pred_check
      _
    $region51: #{tpu_custom_call.1} parent=1 // pred_check_branch
      %169 = sbr.rel (0) target = $region53
    $region52: #{tpu_custom_call.1} parent=1 // pred_region
      %171 = dma.done [#allocation7], 768
    $region53: #{tpu_custom_call.1} parent=1 // pred_fallthru
      _
    // Predicated region
    $region54: #{tpu_custom_call.1} parent=1 // pred_check
      _
    $region55: #{tpu_custom_call.1} parent=1 // pred_check_branch
      %173 = sbr.rel (0) target = $region57
    $region56: #{tpu_custom_call.1} parent=1 // pred_region
      %175 = dma.done [#allocation7], 128
    $region57: #{tpu_custom_call.1} parent=1 // pred_fallthru
      _
    // Predicated region
    $region58: #{tpu_custom_call.1} parent=1 // pred_check
      _
    $region59: #{tpu_custom_call.1} parent=1 // pred_check_branch
      %177 = sbr.rel (0) target = $region61
    $region60: #{tpu_custom_call.1} parent=1 // pred_region
      %179 = dma.done [#allocation10], 2048
    $region61: #{tpu_custom_call.1} parent=1 // pred_fallthru
      _
    // Predicated region
    $region62: #{tpu_custom_call.1} parent=1 // pred_check
      _
    $region63: #{tpu_custom_call.1} parent=1 // pred_check_branch
      %181 = sbr.rel (0) target = $region65
    $region64: #{tpu_custom_call.1} parent=1 // pred_region
      %183 = dma.done [#allocation10], 2048
    $region65: #{tpu_custom_call.1} parent=1 // pred_fallthru
      _
    // Predicated region
    $region66: #{tpu_custom_call.1} parent=1 // pred_check
      _
    $region67: #{tpu_custom_call.1} parent=1 // pred_check_branch
      %185 = sbr.rel (0) target = $region69
    $region68: #{tpu_custom_call.1} parent=1 // pred_region
      %187 = dma.done [#allocation13], 3072
    $region69: #{tpu_custom_call.1} parent=1 // pred_fallthru
      _
    // Predicated region
    $region70: #{tpu_custom_call.1} parent=1 // pred_check
      _
    $region71: #{tpu_custom_call.1} parent=1 // pred_check_branch
      %189 = sbr.rel (0) target = $region73
    $region72: #{tpu_custom_call.1} parent=1 // pred_region
      %191 = dma.done [#allocation13], 1024
    $region73: #{tpu_custom_call.1} parent=1 // pred_fallthru
      _
    // Predicated region
    $region74: #{tpu_custom_call.1} parent=1 // pred_check
      _
    $region75: #{tpu_custom_call.1} parent=1 // pred_check_branch
      %193 = sbr.rel (0) target = $region77
    $region76: #{tpu_custom_call.1} parent=1 // pred_region
      %195 = dma.done [#allocation16], 2048
    $region77: #{tpu_custom_call.1} parent=1 // pred_fallthru
      _
    // Predicated region
    $region78: #{tpu_custom_call.1} parent=1 // pred_check
      _
    $region79: #{tpu_custom_call.1} parent=1 // pred_check_branch
      %197 = sbr.rel (0) target = $region81
    $region80: #{tpu_custom_call.1} parent=1 // pred_region
      %199 = dma.done [#allocation16], 1024
    $region81: #{tpu_custom_call.1} parent=1 // pred_fallthru
      _
    // Predicated region
    $region82: #{tpu_custom_call.1} parent=1 // pred_check
      _
    $region83: #{tpu_custom_call.1} parent=1 // pred_check_branch
      %201 = sbr.rel (0) target = $region85
    $region84: #{tpu_custom_call.1} parent=1 // pred_region
      %203 = dma.done [#allocation19], 2048
    $region85: #{tpu_custom_call.1} parent=1 // pred_fallthru
      _
    // Predicated region
    $region86: #{tpu_custom_call.1} parent=1 // pred_check
      _
    $region87: #{tpu_custom_call.1} parent=1 // pred_check_branch
      %205 = sbr.rel (0) target = $region89
    $region88: #{tpu_custom_call.1} parent=1 // pred_region
      %207 = dma.done [#allocation19], 2048
    $region89: #{tpu_custom_call.1} parent=1 // pred_fallthru
      _
    %v209 = vld [vmem:[#allocation3] sm:$0xff]
    %v210 = vld [vmem:[#allocation3 + $0x8] sm:$0xff]
    %v211 = vld [vmem:[#allocation6] sm:$0xff]
    %v212 = vld [vmem:[#allocation6 + $0x8] sm:$0xff]
    %v213 = vld [vmem:[#allocation6 + $0x10] sm:$0xff]
    %v214 = vld [vmem:[#allocation6 + $0x18] sm:$0xff]
    %v215 = vld [vmem:[#allocation6 + $0x20] sm:$0xff]
    %v216 = vld [vmem:[#allocation6 + $0x28] sm:$0xff]
    %v217 = vld [vmem:[#allocation8] sm:$0x77]
    %v218 = vld [vmem:[#allocation9] sm:$0xff]
    %v219 = vld [vmem:[#allocation9 + $0x8] sm:$0xff]
    %v220 = vld [vmem:[#allocation9 + $0x10] sm:$0xff]
    %v221 = vld [vmem:[#allocation9 + $0x18] sm:$0xff]
    %v222 = vld [vmem:[#allocation9 + $0x20] sm:$0xff]
    %v223 = vld [vmem:[#allocation9 + $0x28] sm:$0xff]
    %v224 = vld [vmem:[#allocation9 + $0x30] sm:$0xff]
    %v225 = vld [vmem:[#allocation9 + $0x38] sm:$0xff]
    %v226 = vld [vmem:[#allocation9 + $0x40] sm:$0xff]
    %v227 = vld [vmem:[#allocation9 + $0x48] sm:$0xff]
    %v228 = vld [vmem:[#allocation9 + $0x50] sm:$0xff]
    %v229 = vld [vmem:[#allocation9 + $0x58] sm:$0xff]
    %v230 = vld [vmem:[#allocation9 + $0x60] sm:$0xff]
    %v231 = vld [vmem:[#allocation9 + $0x68] sm:$0xff]
    %v232 = vld [vmem:[#allocation9 + $0x70] sm:$0xff]
    %v233 = vld [vmem:[#allocation9 + $0x78] sm:$0xff]
    %v234 = vld [vmem:[#allocation11] sm:$0xf]
    %v235 = vld [vmem:[#allocation11 + $0x4] sm:$0xf]
    %v236 = vld [vmem:[#allocation11 + $0x8] sm:$0xf]
    %v237 = vld [vmem:[#allocation11 + $0xc] sm:$0xf]
    %v238 = vld [vmem:[#allocation11 + $0x10] sm:$0xf]
    %v239 = vld [vmem:[#allocation11 + $0x14] sm:$0xf]
    %v240 = vld [vmem:[#allocation11 + $0x18] sm:$0xf]
    %v241 = vld [vmem:[#allocation11 + $0x1c] sm:$0xf]
    %v242 = vld [vmem:[#allocation11 + $0x20] sm:$0xf]
    %v243 = vld [vmem:[#allocation11 + $0x24] sm:$0xf]
    %v244 = vld [vmem:[#allocation11 + $0x28] sm:$0xf]
    %v245 = vld [vmem:[#allocation11 + $0x2c] sm:$0xf]
    %v246 = vld [vmem:[#allocation11 + $0x30] sm:$0xf]
    %v247 = vld [vmem:[#allocation11 + $0x34] sm:$0xf]
    %v248 = vld [vmem:[#allocation11 + $0x38] sm:$0xf]
    %v249 = vld [vmem:[#allocation11 + $0x3c] sm:$0xf]
    %v250 = vld [vmem:[#allocation11 + $0x40] sm:$0xf]
    %v251 = vld [vmem:[#allocation11 + $0x44] sm:$0xf]
    %v252 = vld [vmem:[#allocation11 + $0x48] sm:$0xf]
    %v253 = vld [vmem:[#allocation11 + $0x4c] sm:$0xf]
    %v254 = vld [vmem:[#allocation11 + $0x50] sm:$0xf]
    %v255 = vld [vmem:[#allocation11 + $0x54] sm:$0xf]
    %v256 = vld [vmem:[#allocation11 + $0x58] sm:$0xf]
    %v257 = vld [vmem:[#allocation11 + $0x5c] sm:$0xf]
    %v258 = vld [vmem:[#allocation11 + $0x60] sm:$0xf]
    %v259 = vld [vmem:[#allocation11 + $0x64] sm:$0xf]
    %v260 = vld [vmem:[#allocation11 + $0x68] sm:$0xf]
    %v261 = vld [vmem:[#allocation11 + $0x6c] sm:$0xf]
    %v262 = vld [vmem:[#allocation11 + $0x70] sm:$0xf]
    %v263 = vld [vmem:[#allocation11 + $0x74] sm:$0xf]
    %v264 = vld [vmem:[#allocation11 + $0x78] sm:$0xf]
    %v265 = vld [vmem:[#allocation11 + $0x7c] sm:$0xf]
    %v266 = vld [vmem:[#allocation12] sm:$0xff]
    %v267 = vld [vmem:[#allocation12 + $0x8] sm:$0xf]
    %v268 = vld [vmem:[#allocation12 + $0xc] sm:$0xff]
    %v269 = vld [vmem:[#allocation12 + $0x14] sm:$0xf]
    %v270 = vld [vmem:[#allocation12 + $0x18] sm:$0xff]
    %v271 = vld [vmem:[#allocation12 + $0x20] sm:$0xf]
    %v272 = vld [vmem:[#allocation12 + $0x24] sm:$0xff]
    %v273 = vld [vmem:[#allocation12 + $0x2c] sm:$0xf]
    %v274 = vld [vmem:[#allocation12 + $0x30] sm:$0xff]
    %v275 = vld [vmem:[#allocation12 + $0x38] sm:$0xf]
    %v276 = vld [vmem:[#allocation12 + $0x3c] sm:$0xff]
    %v277 = vld [vmem:[#allocation12 + $0x44] sm:$0xf]
    %v278 = vld [vmem:[#allocation12 + $0x48] sm:$0xff]
    %v279 = vld [vmem:[#allocation12 + $0x50] sm:$0xf]
    %v280 = vld [vmem:[#allocation12 + $0x54] sm:$0xff]
    %v281 = vld [vmem:[#allocation12 + $0x5c] sm:$0xf]
    %v282 = vld [vmem:[#allocation12 + $0x60] sm:$0xff]
    %v283 = vld [vmem:[#allocation12 + $0x68] sm:$0xf]
    %v284 = vld [vmem:[#allocation12 + $0x6c] sm:$0xff]
    %v285 = vld [vmem:[#allocation12 + $0x74] sm:$0xf]
    %v286 = vld [vmem:[#allocation12 + $0x78] sm:$0xff]
    %v287 = vld [vmem:[#allocation12 + $0x80] sm:$0xf]
    %v288 = vld [vmem:[#allocation12 + $0x84] sm:$0xff]
    %v289 = vld [vmem:[#allocation12 + $0x8c] sm:$0xf]
    %v290 = vld [vmem:[#allocation12 + $0x90] sm:$0xff]
    %v291 = vld [vmem:[#allocation12 + $0x98] sm:$0xf]
    %v292 = vld [vmem:[#allocation12 + $0x9c] sm:$0xff]
    %v293 = vld [vmem:[#allocation12 + $0xa4] sm:$0xf]
    %v294 = vld [vmem:[#allocation12 + $0xa8] sm:$0xff]
    %v295 = vld [vmem:[#allocation12 + $0xb0] sm:$0xf]
    %v296 = vld [vmem:[#allocation12 + $0xb4] sm:$0xff]
    %v297 = vld [vmem:[#allocation12 + $0xbc] sm:$0xf]
    %v298 = vld [vmem:[#allocation14] sm:$0xf]
    %v299 = vld [vmem:[#allocation14 + $0x4] sm:$0xf]
    %v300 = vld [vmem:[#allocation14 + $0x8] sm:$0xf]
    %v301 = vld [vmem:[#allocation14 + $0xc] sm:$0xf]
    %v302 = vld [vmem:[#allocation14 + $0x10] sm:$0xf]
    %v303 = vld [vmem:[#allocation14 + $0x14] sm:$0xf]
    %v304 = vld [vmem:[#allocation14 + $0x18] sm:$0xf]
    %v305 = vld [vmem:[#allocation14 + $0x1c] sm:$0xf]
    %v306 = vld [vmem:[#allocation14 + $0x20] sm:$0xf]
    %v307 = vld [vmem:[#allocation14 + $0x24] sm:$0xf]
    %v308 = vld [vmem:[#allocation14 + $0x28] sm:$0xf]
    %v309 = vld [vmem:[#allocation14 + $0x2c] sm:$0xf]
    %v310 = vld [vmem:[#allocation14 + $0x30] sm:$0xf]
    %v311 = vld [vmem:[#allocation14 + $0x34] sm:$0xf]
    %v312 = vld [vmem:[#allocation14 + $0x38] sm:$0xf]
    %v313 = vld [vmem:[#allocation14 + $0x3c] sm:$0xf]
    %v314 = vld [vmem:[#allocation15] sm:$0xff]
    %v315 = vld [vmem:[#allocation15 + $0x8] sm:$0xff]
    %v316 = vld [vmem:[#allocation15 + $0x10] sm:$0xff]
    %v317 = vld [vmem:[#allocation15 + $0x18] sm:$0xff]
    %v318 = vld [vmem:[#allocation15 + $0x20] sm:$0xff]
    %v319 = vld [vmem:[#allocation15 + $0x28] sm:$0xff]
    %v320 = vld [vmem:[#allocation15 + $0x30] sm:$0xff]
    %v321 = vld [vmem:[#allocation15 + $0x38] sm:$0xff]
    %v322 = vld [vmem:[#allocation15 + $0x40] sm:$0xff]
    %v323 = vld [vmem:[#allocation15 + $0x48] sm:$0xff]
    %v324 = vld [vmem:[#allocation15 + $0x50] sm:$0xff]
    %v325 = vld [vmem:[#allocation15 + $0x58] sm:$0xff]
    %v326 = vld [vmem:[#allocation15 + $0x60] sm:$0xff]
    %v327 = vld [vmem:[#allocation15 + $0x68] sm:$0xff]
    %v328 = vld [vmem:[#allocation15 + $0x70] sm:$0xff]
    %v329 = vld [vmem:[#allocation15 + $0x78] sm:$0xff]
    %v330 = vld [vmem:[#allocation17] sm:$0xf]
    %v331 = vld [vmem:[#allocation17 + $0x4] sm:$0xf]
    %v332 = vld [vmem:[#allocation17 + $0x8] sm:$0xf]
    %v333 = vld [vmem:[#allocation17 + $0xc] sm:$0xf]
    %v334 = vld [vmem:[#allocation17 + $0x10] sm:$0xf]
    %v335 = vld [vmem:[#allocation17 + $0x14] sm:$0xf]
    %v336 = vld [vmem:[#allocation17 + $0x18] sm:$0xf]
    %v337 = vld [vmem:[#allocation17 + $0x1c] sm:$0xf]
    %v338 = vld [vmem:[#allocation17 + $0x20] sm:$0xf]
    %v339 = vld [vmem:[#allocation17 + $0x24] sm:$0xf]
    %v340 = vld [vmem:[#allocation17 + $0x28] sm:$0xf]
    %v341 = vld [vmem:[#allocation17 + $0x2c] sm:$0xf]
    %v342 = vld [vmem:[#allocation17 + $0x30] sm:$0xf]
    %v343 = vld [vmem:[#allocation17 + $0x34] sm:$0xf]
    %v344 = vld [vmem:[#allocation17 + $0x38] sm:$0xf]
    %v345 = vld [vmem:[#allocation17 + $0x3c] sm:$0xf]
    %v346 = vld [vmem:[#allocation18] sm:$0xff]
    %v347 = vld [vmem:[#allocation18 + $0x8] sm:$0xff]
    %v348 = vld [vmem:[#allocation18 + $0x10] sm:$0xff]
    %v349 = vld [vmem:[#allocation18 + $0x18] sm:$0xff]
    %v350 = vld [vmem:[#allocation18 + $0x20] sm:$0xff]
    %v351 = vld [vmem:[#allocation18 + $0x28] sm:$0xff]
    %v352 = vld [vmem:[#allocation18 + $0x30] sm:$0xff]
    %v353 = vld [vmem:[#allocation18 + $0x38] sm:$0xff]
    %v354 = vld [vmem:[#allocation18 + $0x40] sm:$0xff]
    %v355 = vld [vmem:[#allocation18 + $0x48] sm:$0xff]
    %v356 = vld [vmem:[#allocation18 + $0x50] sm:$0xff]
    %v357 = vld [vmem:[#allocation18 + $0x58] sm:$0xff]
    %v358 = vld [vmem:[#allocation18 + $0x60] sm:$0xff]
    %v359 = vld [vmem:[#allocation18 + $0x68] sm:$0xff]
    %v360 = vld [vmem:[#allocation18 + $0x70] sm:$0xff]
    %v361 = vld [vmem:[#allocation18 + $0x78] sm:$0xff]
    %v362 = vld [vmem:[#allocation20] sm:$0xf]
    %v363 = vld [vmem:[#allocation20 + $0x4] sm:$0xf]
    %v364 = vld [vmem:[#allocation20 + $0x8] sm:$0xf]
    %v365 = vld [vmem:[#allocation20 + $0xc] sm:$0xf]
    %v366 = vld [vmem:[#allocation20 + $0x10] sm:$0xf]
    %v367 = vld [vmem:[#allocation20 + $0x14] sm:$0xf]
    %v368 = vld [vmem:[#allocation20 + $0x18] sm:$0xf]
    %v369 = vld [vmem:[#allocation20 + $0x1c] sm:$0xf]
    %v370 = vld [vmem:[#allocation20 + $0x20] sm:$0xf]
    %v371 = vld [vmem:[#allocation20 + $0x24] sm:$0xf]
    %v372 = vld [vmem:[#allocation20 + $0x28] sm:$0xf]
    %v373 = vld [vmem:[#allocation20 + $0x2c] sm:$0xf]
    %v374 = vld [vmem:[#allocation20 + $0x30] sm:$0xf]
    %v375 = vld [vmem:[#allocation20 + $0x34] sm:$0xf]
    %v376 = vld [vmem:[#allocation20 + $0x38] sm:$0xf]
    %v377 = vld [vmem:[#allocation20 + $0x3c] sm:$0xf]
    %v378 = vld [vmem:[#allocation20 + $0x40] sm:$0xf]
    %v379 = vld [vmem:[#allocation20 + $0x44] sm:$0xf]
    %v380 = vld [vmem:[#allocation20 + $0x48] sm:$0xf]
    %v381 = vld [vmem:[#allocation20 + $0x4c] sm:$0xf]
    %v382 = vld [vmem:[#allocation20 + $0x50] sm:$0xf]
    %v383 = vld [vmem:[#allocation20 + $0x54] sm:$0xf]
    %v384 = vld [vmem:[#allocation20 + $0x58] sm:$0xf]
    %v385 = vld [vmem:[#allocation20 + $0x5c] sm:$0xf]
    %v386 = vld [vmem:[#allocation20 + $0x60] sm:$0xf]
    %v387 = vld [vmem:[#allocation20 + $0x64] sm:$0xf]
    %v388 = vld [vmem:[#allocation20 + $0x68] sm:$0xf]
    %v389 = vld [vmem:[#allocation20 + $0x6c] sm:$0xf]
    %v390 = vld [vmem:[#allocation20 + $0x70] sm:$0xf]
    %v391 = vld [vmem:[#allocation20 + $0x74] sm:$0xf]
    %v392 = vld [vmem:[#allocation20 + $0x78] sm:$0xf]
    %v393 = vld [vmem:[#allocation20 + $0x7c] sm:$0xf]
    %394 = vadd.xlane.f32.xlu0 %v209
    %v395 = vpop.xlane.xlu0 %394
    %396 = vadd.xlane.f32.xlu0 %v210
    %v397 = vpop.xlane.xlu0 %396
    %v398 = vrcp.pop 128.0
    %v399 = vmul.f32 128.0, %v398
    %v400 = vsub.f32 1.0, %v399
    %v401 = vmul.f32 %v398, %v400
    %v402 = vadd.f32 %v398, %v401
    %vm403 = vweird.f32 %v398
    %v404 = vsel %vm403, %v398, %v402
    %v405 = vmul.f32 %v395, %v404
    %v406 = vmul.f32 %v397, %v404
    %v407 = vsub.f32 %v209, %v405
    %v408 = vsub.f32 %v210, %v406
    %v409 = vmul.f32 %v407, %v407
    %v410 = vmul.f32 %v408, %v408
    %411 = vadd.xlane.f32.xlu0 %v409
    %v412 = vpop.xlane.xlu0 %411
    %413 = vadd.xlane.f32.xlu0 %v410
    %v414 = vpop.xlane.xlu0 %413
    %v415 = vmul.f32 %v412, %v404
    %v416 = vmul.f32 %v414, %v404
    %v417 = vadd.f32 %v415, 1e-05
    %v418 = vadd.f32 %v416, 1e-05
    %v419 = vrsqrt.pop %v417
    %v420 = vmul.f32 %v419, %v417
    %v421 = vmul.f32 %v420, %v419
    %v422 = vmul.f32 0.5, %v421
    %v423 = vsub.f32 1.5, %v422
    %v424 = vmul.f32 %v419, %v423
    %vm425 = vweird.f32 %v417
    %vm426 = vweird.f32 %v419
    %vm427 = vmor %vm425, %vm426
    %v428 = vsel %vm427, %v419, %v424
    %v429 = vrsqrt.pop %v418
    %v430 = vmul.f32 %v429, %v418
    %v431 = vmul.f32 %v430, %v429
    %v432 = vmul.f32 0.5, %v431
    %v433 = vsub.f32 1.5, %v432
    %v434 = vmul.f32 %v429, %v433
    %vm435 = vweird.f32 %v418
    %vm436 = vweird.f32 %v429
    %vm437 = vmor %vm435, %vm436
    %v438 = vsel %vm437, %v429, %v434
    %v439 = vmul.f32 %v407, %v428
    %v440 = vmul.f32 %v408, %v438
    %v441 = vperm.slane %v212, 7
    %v442 = vmul.f32 %v439, %v441
    %v443 = vmul.f32 %v440, %v441
    %v444 = vperm.slane %v213, 0
    %v445 = vadd.f32 %v442, %v444
    %v446 = vadd.f32 %v443, %v444
    %v447 = vpack.c.bf16 %v446, %v445
    %v449 = vperm.slane %v217, 0
    %v450 = vperm.slane %v217, 4
    %v453 = vperm.slane %v449, 0
    %v454 = vperm.slane %v450, 0
    %v471 = vunpack.c.l.b16 %v218
    %v472 = vunpack.c.h.b16 %v218
    %v473 = vunpack.c.l.b16 %v219
    %v474 = vunpack.c.h.b16 %v219
    %v475 = vunpack.c.l.b16 %v220
    %v476 = vunpack.c.h.b16 %v220
    %v477 = vunpack.c.l.b16 %v221
    %v478 = vunpack.c.h.b16 %v221
    %v479 = vunpack.c.l.b16 %v222
    %v480 = vunpack.c.h.b16 %v222
    %v481 = vunpack.c.l.b16 %v223
    %v482 = vunpack.c.h.b16 %v223
    %v483 = vunpack.c.l.b16 %v224
    %v484 = vunpack.c.h.b16 %v224
    %v485 = vunpack.c.l.b16 %v225
    %v486 = vunpack.c.h.b16 %v225
    %v487 = vunpack.c.l.b16 %v226
    %v488 = vunpack.c.h.b16 %v226
    %v489 = vunpack.c.l.b16 %v227
    %v490 = vunpack.c.h.b16 %v227
    %v491 = vunpack.c.l.b16 %v228
    %v492 = vunpack.c.h.b16 %v228
    %v493 = vunpack.c.l.b16 %v229
    %v494 = vunpack.c.h.b16 %v229
    %v495 = vunpack.c.l.b16 %v230
    %v496 = vunpack.c.h.b16 %v230
    %v497 = vunpack.c.l.b16 %v231
    %v498 = vunpack.c.h.b16 %v231
    %v499 = vunpack.c.l.b16 %v232
    %v500 = vunpack.c.h.b16 %v232
    %v501 = vunpack.c.l.b16 %v233
    %v502 = vunpack.c.h.b16 %v233
    %v503 = vpack.c.b16 %v473, %v471
    %v504 = vpack.c.b16 %v474, %v472
    %v505 = vpack.c.b16 %v477, %v475
    %v506 = vpack.c.b16 %v478, %v476
    %v507 = vpack.c.b16 %v481, %v479
    %v508 = vpack.c.b16 %v482, %v480
    %v509 = vpack.c.b16 %v485, %v483
    %v510 = vpack.c.b16 %v486, %v484
    %v511 = vpack.c.b16 %v489, %v487
    %v512 = vpack.c.b16 %v490, %v488
    %v513 = vpack.c.b16 %v493, %v491
    %v514 = vpack.c.b16 %v494, %v492
    %v515 = vpack.c.b16 %v497, %v495
    %v516 = vpack.c.b16 %v498, %v496
    %v517 = vpack.c.b16 %v501, %v499
    %v518 = vpack.c.b16 %v502, %v500
    %535 = vmatpush.bf16.msra.mxu0 %v517
    %536 = vmatpush.bf16.msra.mxu0 %v515
    %537 = vmatpush.bf16.msra.mxu0 %v513
    %538 = vmatpush.bf16.msra.mxu0 %v511
    %539 = vmatpush.bf16.msra.mxu0 %v509
    %540 = vmatpush.bf16.msra.mxu0 %v507
    %541 = vmatpush.bf16.msra.mxu0 %v505
    %542 = vmatpush.bf16.msra.mxu0 %v503
    %543 = vmatmul.bf16.gmra.mxu0 %v447
    %v544 = vpop.f32.mrf.mxu0
    %v545 = vadd.f32 %v453, %v544
    %v546 = vpop.f32.mrf.mxu0
    %v547 = vadd.f32 %v453, %v546
    %548 = vdwg.mxu0
    %549 = vmatpush.bf16.msra.mxu0 %v518
    %550 = vmatpush.bf16.msra.mxu0 %v516
    %551 = vmatpush.bf16.msra.mxu0 %v514
    %552 = vmatpush.bf16.msra.mxu0 %v512
    %553 = vmatpush.bf16.msra.mxu0 %v510
    %554 = vmatpush.bf16.msra.mxu0 %v508
    %555 = vmatpush.bf16.msra.mxu0 %v506
    %556 = vmatpush.bf16.msra.mxu0 %v504
    %557 = vmatmul.bf16.gmra.mxu0 %v447
    %v558 = vpop.f32.mrf.mxu0
    %v559 = vadd.f32 %v454, %v558
    %v560 = vpop.f32.mrf.mxu0
    %v561 = vadd.f32 %v454, %v560
    %562 = vdwg.mxu0
    %v563 = vxor.u32 %v545, 2147483648
    %v564 = vxor.u32 %v559, 2147483648
    %v565 = vxor.u32 %v547, 2147483648
    %v566 = vxor.u32 %v561, 2147483648
    %v567 = vmul.f32 %v563, 1.442695
    %v568 = vpow.pop %v567
    %v569 = vmul.f32 %v564, 1.442695
    %v570 = vpow.pop %v569
    %v571 = vmul.f32 %v565, 1.442695
    %v572 = vpow.pop %v571
    %v573 = vmul.f32 %v566, 1.442695
    %v574 = vpow.pop %v573
    %v575 = vadd.f32 %v568, 1.0
    %v576 = vadd.f32 %v570, 1.0
    %v577 = vadd.f32 %v572, 1.0
    %v578 = vadd.f32 %v574, 1.0
    %v579 = vrcp.pop %v575
    %v580 = vmul.f32 %v575, %v579
    %v581 = vsub.f32 1.0, %v580
    %v582 = vmul.f32 %v579, %v581
    %v583 = vadd.f32 %v579, %v582
    %vm584 = vweird.f32 %v575
    %vm585 = vweird.f32 %v579
    %vm586 = vmor %vm584, %vm585
    %v587 = vsel %vm586, %v579, %v583
    %v588 = vand.u32 2147483647, %v575
    %vm589 = vcmp.eq.f32.partialorder %v588, 8.507059e+37
    %v590 = vand.u32 %v575, 2147483648
    %v591 = vor.u32 1.1754944e-38, %v590
    %v592 = vsel %vm589, %v591, %v587
    %v593 = vmul.f32 1.0, %v592
    %v594 = vrcp.pop %v576
    %v595 = vmul.f32 %v576, %v594
    %v596 = vsub.f32 1.0, %v595
    %v597 = vmul.f32 %v594, %v596
    %v598 = vadd.f32 %v594, %v597
    %vm599 = vweird.f32 %v576
    %vm600 = vweird.f32 %v594
    %vm601 = vmor %vm599, %vm600
    %v602 = vsel %vm601, %v594, %v598
    %v603 = vand.u32 2147483647, %v576
    %vm604 = vcmp.eq.f32.partialorder %v603, 8.507059e+37
    %v605 = vand.u32 %v576, 2147483648
    %v606 = vor.u32 1.1754944e-38, %v605
    %v607 = vsel %vm604, %v606, %v602
    %v608 = vmul.f32 1.0, %v607
    %v609 = vrcp.pop %v577
    %v610 = vmul.f32 %v577, %v609
    %v611 = vsub.f32 1.0, %v610
    %v612 = vmul.f32 %v609, %v611
    %v613 = vadd.f32 %v609, %v612
    %vm614 = vweird.f32 %v577
    %vm615 = vweird.f32 %v609
    %vm616 = vmor %vm614, %vm615
    %v617 = vsel %vm616, %v609, %v613
    %v618 = vand.u32 2147483647, %v577
    %vm619 = vcmp.eq.f32.partialorder %v618, 8.507059e+37
    %v620 = vand.u32 %v577, 2147483648
    %v621 = vor.u32 1.1754944e-38, %v620
    %v622 = vsel %vm619, %v621, %v617
    %v623 = vmul.f32 1.0, %v622
    %v624 = vrcp.pop %v578
    %v625 = vmul.f32 %v578, %v624
    %v626 = vsub.f32 1.0, %v625
    %v627 = vmul.f32 %v624, %v626
    %v628 = vadd.f32 %v624, %v627
    %vm629 = vweird.f32 %v578
    %vm630 = vweird.f32 %v624
    %vm631 = vmor %vm629, %vm630
    %v632 = vsel %vm631, %v624, %v628
    %v633 = vand.u32 2147483647, %v578
    %vm634 = vcmp.eq.f32.partialorder %v633, 8.507059e+37
    %v635 = vand.u32 %v578, 2147483648
    %v636 = vor.u32 1.1754944e-38, %v635
    %v637 = vsel %vm634, %v636, %v632
    %v638 = vmul.f32 1.0, %v637
    %v639 = vmul.f32 %v545, %v593
    %v640 = vmul.f32 %v559, %v608
    %v641 = vmul.f32 %v547, %v623
    %v642 = vmul.f32 %v561, %v638
    %v643 = vpack.c.bf16 %v641, %v639
    %v644 = vpack.c.bf16 %v642, %v640
    %v645 = vperm.slane %v213, 1
    %v678 = vunpack.c.l.b16 %v234
    %v679 = vunpack.c.l.b16 %v235
    %v680 = vunpack.c.l.b16 %v236
    %v681 = vunpack.c.l.b16 %v237
    %v682 = vunpack.c.l.b16 %v238
    %v683 = vunpack.c.l.b16 %v239
    %v684 = vunpack.c.l.b16 %v240
    %v685 = vunpack.c.l.b16 %v241
    %v686 = vunpack.c.l.b16 %v242
    %v687 = vunpack.c.l.b16 %v243
    %v688 = vunpack.c.l.b16 %v244
    %v689 = vunpack.c.l.b16 %v245
    %v690 = vunpack.c.l.b16 %v246
    %v691 = vunpack.c.l.b16 %v247
    %v692 = vunpack.c.l.b16 %v248
    %v693 = vunpack.c.l.b16 %v249
    %v694 = vunpack.c.l.b16 %v250
    %v695 = vunpack.c.l.b16 %v251
    %v696 = vunpack.c.l.b16 %v252
    %v697 = vunpack.c.l.b16 %v253
    %v698 = vunpack.c.l.b16 %v254
    %v699 = vunpack.c.l.b16 %v255
    %v700 = vunpack.c.l.b16 %v256
    %v701 = vunpack.c.l.b16 %v257
    %v702 = vunpack.c.l.b16 %v258
    %v703 = vunpack.c.l.b16 %v259
    %v704 = vunpack.c.l.b16 %v260
    %v705 = vunpack.c.l.b16 %v261
    %v706 = vunpack.c.l.b16 %v262
    %v707 = vunpack.c.l.b16 %v263
    %v708 = vunpack.c.l.b16 %v264
    %v709 = vunpack.c.l.b16 %v265
    %v710 = vpack.c.b16 %v679, %v678
    %v711 = vpack.c.b16 %v681, %v680
    %v712 = vpack.c.b16 %v683, %v682
    %v713 = vpack.c.b16 %v685, %v684
    %v714 = vpack.c.b16 %v687, %v686
    %v715 = vpack.c.b16 %v689, %v688
    %v716 = vpack.c.b16 %v691, %v690
    %v717 = vpack.c.b16 %v693, %v692
    %v718 = vpack.c.b16 %v695, %v694
    %v719 = vpack.c.b16 %v697, %v696
    %v720 = vpack.c.b16 %v699, %v698
    %v721 = vpack.c.b16 %v701, %v700
    %v722 = vpack.c.b16 %v703, %v702
    %v723 = vpack.c.b16 %v705, %v704
    %v724 = vpack.c.b16 %v707, %v706
    %v725 = vpack.c.b16 %v709, %v708
    %742 = vmatpush.bf16.msra.mxu0 %v717
    %743 = vmatpush.bf16.msra.mxu0 %v716
    %744 = vmatpush.bf16.msra.mxu0 %v715
    %745 = vmatpush.bf16.msra.mxu0 %v714
    %746 = vmatpush.bf16.msra.mxu0 %v713
    %747 = vmatpush.bf16.msra.mxu0 %v712
    %748 = vmatpush.bf16.msra.mxu0 %v711
    %749 = vmatpush.bf16.msra.mxu0 %v710
    %750 = vmatmul.bf16.gmra.mxu0 %v643
    %v751 = vpop.f32.mrf.mxu0
    %v752 = vadd.f32 %v645, %v751
    %v753 = vpop.f32.mrf.mxu0
    %v754 = vadd.f32 %v645, %v753
    %755 = vdwg.mxu0
    %756 = vmatpush.bf16.msra.mxu0 %v725
    %757 = vmatpush.bf16.msra.mxu0 %v724
    %758 = vmatpush.bf16.msra.mxu0 %v723
    %759 = vmatpush.bf16.msra.mxu0 %v722
    %760 = vmatpush.bf16.msra.mxu0 %v721
    %761 = vmatpush.bf16.msra.mxu0 %v720
    %762 = vmatpush.bf16.msra.mxu0 %v719
    %763 = vmatpush.bf16.msra.mxu0 %v718
    %764 = vmatmul.bf16.gmra.mxu0 %v644
    %v765 = vpop.f32.mrf.mxu0
    %v766 = vadd.f32 %v752, %v765
    %v767 = vpop.f32.mrf.mxu0
    %v768 = vadd.f32 %v754, %v767
    %769 = vdwg.mxu0
    %v770 = vmul.f32 %v766, 0.5
    %v771 = vmul.f32 %v768, 0.5
    %v772 = vadd.f32 %v770, %v209
    %v773 = vadd.f32 %v771, %v210
    %774 = vadd.xlane.f32.xlu0 %v772
    %v775 = vpop.xlane.xlu0 %774
    %776 = vadd.xlane.f32.xlu0 %v773
    %v777 = vpop.xlane.xlu0 %776
    %v778 = vmul.f32 %v775, %v404
    %v779 = vmul.f32 %v777, %v404
    %v780 = vsub.f32 %v772, %v778
    %v781 = vsub.f32 %v773, %v779
    %v782 = vmul.f32 %v780, %v780
    %v783 = vmul.f32 %v781, %v781
    %784 = vadd.xlane.f32.xlu0 %v782
    %v785 = vpop.xlane.xlu0 %784
    %786 = vadd.xlane.f32.xlu0 %v783
    %v787 = vpop.xlane.xlu0 %786
    %v788 = vmul.f32 %v785, %v404
    %v789 = vmul.f32 %v787, %v404
    %v790 = vadd.f32 %v788, 1e-05
    %v791 = vadd.f32 %v789, 1e-05
    %v792 = vrsqrt.pop %v790
    %v793 = vmul.f32 %v792, %v790
    %v794 = vmul.f32 %v793, %v792
    %v795 = vmul.f32 0.5, %v794
    %v796 = vsub.f32 1.5, %v795
    %v797 = vmul.f32 %v792, %v796
    %vm798 = vweird.f32 %v790
    %vm799 = vweird.f32 %v792
    %vm800 = vmor %vm798, %vm799
    %v801 = vsel %vm800, %v792, %v797
    %v802 = vrsqrt.pop %v791
    %v803 = vmul.f32 %v802, %v791
    %v804 = vmul.f32 %v803, %v802
    %v805 = vmul.f32 0.5, %v804
    %v806 = vsub.f32 1.5, %v805
    %v807 = vmul.f32 %v802, %v806
    %vm808 = vweird.f32 %v791
    %vm809 = vweird.f32 %v802
    %vm810 = vmor %vm808, %vm809
    %v811 = vsel %vm810, %v802, %v807
    %v812 = vmul.f32 %v780, %v801
    %v813 = vmul.f32 %v781, %v811
    %v814 = vperm.slane %v213, 2
    %v815 = vmul.f32 %v812, %v814
    %v816 = vmul.f32 %v813, %v814
    %v817 = vperm.slane %v213, 3
    %v818 = vadd.f32 %v815, %v817
    %v819 = vadd.f32 %v816, %v817
    %v820 = vpack.c.bf16 %v819, %v818
    %v853 = vunpack.c.l.b16 %v266
    %v854 = vunpack.c.h.b16 %v266
    %v855 = vunpack.c.l.b16 %v267
    %v856 = vunpack.c.l.b16 %v268
    %v857 = vunpack.c.h.b16 %v268
    %v858 = vunpack.c.l.b16 %v269
    %v859 = vunpack.c.l.b16 %v270
    %v860 = vunpack.c.h.b16 %v270
    %v861 = vunpack.c.l.b16 %v271
    %v862 = vunpack.c.l.b16 %v272
    %v863 = vunpack.c.h.b16 %v272
    %v864 = vunpack.c.l.b16 %v273
    %v865 = vunpack.c.l.b16 %v274
    %v866 = vunpack.c.h.b16 %v274
    %v867 = vunpack.c.l.b16 %v275
    %v868 = vunpack.c.l.b16 %v276
    %v869 = vunpack.c.h.b16 %v276
    %v870 = vunpack.c.l.b16 %v277
    %v871 = vunpack.c.l.b16 %v278
    %v872 = vunpack.c.h.b16 %v278
    %v873 = vunpack.c.l.b16 %v279
    %v874 = vunpack.c.l.b16 %v280
    %v875 = vunpack.c.h.b16 %v280
    %v876 = vunpack.c.l.b16 %v281
    %v877 = vunpack.c.l.b16 %v282
    %v878 = vunpack.c.h.b16 %v282
    %v879 = vunpack.c.l.b16 %v283
    %v880 = vunpack.c.l.b16 %v284
    %v881 = vunpack.c.h.b16 %v284
    %v882 = vunpack.c.l.b16 %v285
    %v883 = vunpack.c.l.b16 %v286
    %v884 = vunpack.c.h.b16 %v286
    %v885 = vunpack.c.l.b16 %v287
    %v886 = vunpack.c.l.b16 %v288
    %v887 = vunpack.c.h.b16 %v288
    %v888 = vunpack.c.l.b16 %v289
    %v889 = vunpack.c.l.b16 %v290
    %v890 = vunpack.c.h.b16 %v290
    %v891 = vunpack.c.l.b16 %v291
    %v892 = vunpack.c.l.b16 %v292
    %v893 = vunpack.c.h.b16 %v292
    %v894 = vunpack.c.l.b16 %v293
    %v895 = vunpack.c.l.b16 %v294
    %v896 = vunpack.c.h.b16 %v294
    %v897 = vunpack.c.l.b16 %v295
    %v898 = vunpack.c.l.b16 %v296
    %v899 = vunpack.c.h.b16 %v296
    %v900 = vunpack.c.l.b16 %v297
    %v901 = vpack.c.b16 %v856, %v853
    %v902 = vpack.c.b16 %v857, %v854
    %v903 = vpack.c.b16 %v858, %v855
    %v904 = vpack.c.b16 %v862, %v859
    %v905 = vpack.c.b16 %v863, %v860
    %v906 = vpack.c.b16 %v864, %v861
    %v907 = vpack.c.b16 %v868, %v865
    %v908 = vpack.c.b16 %v869, %v866
    %v909 = vpack.c.b16 %v870, %v867
    %v910 = vpack.c.b16 %v874, %v871
    %v911 = vpack.c.b16 %v875, %v872
    %v912 = vpack.c.b16 %v876, %v873
    %v913 = vpack.c.b16 %v880, %v877
    %v914 = vpack.c.b16 %v881, %v878
    %v915 = vpack.c.b16 %v882, %v879
    %v916 = vpack.c.b16 %v886, %v883
    %v917 = vpack.c.b16 %v887, %v884
    %v918 = vpack.c.b16 %v888, %v885
    %v919 = vpack.c.b16 %v892, %v889
    %v920 = vpack.c.b16 %v893, %v890
    %v921 = vpack.c.b16 %v894, %v891
    %v922 = vpack.c.b16 %v898, %v895
    %v923 = vpack.c.b16 %v899, %v896
    %v924 = vpack.c.b16 %v900, %v897
    %949 = vmatpush.bf16.msra.mxu0 %v922
    %950 = vmatpush.bf16.msra.mxu0 %v919
    %951 = vmatpush.bf16.msra.mxu0 %v916
    %952 = vmatpush.bf16.msra.mxu0 %v913
    %953 = vmatpush.bf16.msra.mxu0 %v910
    %954 = vmatpush.bf16.msra.mxu0 %v907
    %955 = vmatpush.bf16.msra.mxu0 %v904
    %956 = vmatpush.bf16.msra.mxu0 %v901
    %957 = vmatmul.bf16.gmra.mxu0 %v820
    %v958 = vpop.f32.mrf.mxu0
    %v959 = vadd.f32 0.0, %v958
    %v960 = vpop.f32.mrf.mxu0
    %v961 = vadd.f32 0.0, %v960
    %962 = vdwg.mxu0
    %963 = vmatpush.bf16.msra.mxu0 %v923
    %964 = vmatpush.bf16.msra.mxu0 %v920
    %965 = vmatpush.bf16.msra.mxu0 %v917
    %966 = vmatpush.bf16.msra.mxu0 %v914
    %967 = vmatpush.bf16.msra.mxu0 %v911
    %968 = vmatpush.bf16.msra.mxu0 %v908
    %969 = vmatpush.bf16.msra.mxu0 %v905
    %970 = vmatpush.bf16.msra.mxu0 %v902
    %971 = vmatmul.bf16.gmra.mxu0 %v820
    %v972 = vpop.f32.mrf.mxu0
    %v973 = vadd.f32 0.0, %v972
    %v974 = vpop.f32.mrf.mxu0
    %v975 = vadd.f32 0.0, %v974
    %976 = vdwg.mxu0
    %977 = vmatpush.bf16.msra.mxu0 %v924
    %978 = vmatpush.bf16.msra.mxu0 %v921
    %979 = vmatpush.bf16.msra.mxu0 %v918
    %980 = vmatpush.bf16.msra.mxu0 %v915
    %981 = vmatpush.bf16.msra.mxu0 %v912
    %982 = vmatpush.bf16.msra.mxu0 %v909
    %983 = vmatpush.bf16.msra.mxu0 %v906
    %984 = vmatpush.bf16.msra.mxu0 %v903
    %985 = vmatmul.bf16.gmra.mxu0 %v820
    %v986 = vpop.f32.mrf.mxu0
    %v987 = vadd.f32 0.0, %v986
    %v988 = vpop.f32.mrf.mxu0
    %v989 = vadd.f32 0.0, %v988
    %990 = vdwg.mxu0
    %v991 = vmul.f32 %v959, %v215
    %v992 = vmul.f32 %v961, %v215
    %995 = vrot.lane.b32.xlu0 %v959, 127
    %v996 = vpop.permute.xlu0 %995
    %997 = vrot.lane.b32.xlu0 %v961, 127
    %v998 = vpop.permute.xlu0 %997
    %1001 = vrot.lane.b32.xlu0 %v959, 1
    %v1002 = vpop.permute.xlu0 %1001
    %1003 = vrot.lane.b32.xlu0 %v961, 1
    %v1004 = vpop.permute.xlu0 %1003
    %v1007 = vlaneseq
    %v1008 = vand.u32 %v1007, 127
    %vm1009 = vcmp.lt.s32.totalorder %v1008, 0
    %v1010 = vsub.s32 0, %v1008
    %v1011 = vsel %vm1009, %v1010, %v1008
    %v1012 = vshrl.u32 %v1011, 1
    %v1013 = vand.u32 %v1011, 1
    %v1014 = vsub.s32 0, %v1013
    %v1015 = vsel %vm1009, %v1014, %v1013
    %vm1016 = vcmp.ne.s32.totalorder %v1015, 0
    %vm1017 = vcmp.lt.s32.totalorder %v1015, 0
    %vm1018 = vmand %vm1017, %vm1016
    %v1019 = vadd.s32 %v1015, 2
    %v1020 = vsel %vm1018, %v1019, %v1015
    %vm1021 = vcmp.eq.s32.totalorder %v1020, 0
    %v1022 = vsub.f32 0.0, %v996
    %v1023 = vsub.f32 0.0, %v998
    %v1024 = vsel %vm1021, %v1022, %v1002
    %v1025 = vsel %vm1021, %v1023, %v1004
    %v1026 = vmul.f32 %v1024, %v216
    %v1027 = vmul.f32 %v1025, %v216
    %v1028 = vadd.f32 %v991, %v1026
    %v1029 = vadd.f32 %v992, %v1027
    %v1030 = vmul.f32 %v973, %v215
    %v1031 = vmul.f32 %v975, %v215
    %1034 = vrot.lane.b32.xlu0 %v973, 127
    %v1035 = vpop.permute.xlu0 %1034
    %1036 = vrot.lane.b32.xlu0 %v975, 127
    %v1037 = vpop.permute.xlu0 %1036
    %1040 = vrot.lane.b32.xlu0 %v973, 1
    %v1041 = vpop.permute.xlu0 %1040
    %1042 = vrot.lane.b32.xlu0 %v975, 1
    %v1043 = vpop.permute.xlu0 %1042
    %v1046 = vsub.f32 0.0, %v1035
    %v1047 = vsub.f32 0.0, %v1037
    %v1048 = vsel %vm1021, %v1046, %v1041
    %v1049 = vsel %vm1021, %v1047, %v1043
    %v1050 = vmul.f32 %v1048, %v216
    %v1051 = vmul.f32 %v1049, %v216
    %v1052 = vadd.f32 %v1030, %v1050
    %v1053 = vadd.f32 %v1031, %v1051
    %v1054 = vpack.c.bf16 %v1028, %v1028
    %v1055 = vpack.c.bf16 %v1029, %v1029
    %v1056 = vpack.c.bf16 %v1052, %v1052
    %v1057 = vpack.c.bf16 %v1053, %v1053
    %vm1058 = vcmask 523264
    %v1060 = vsel %vm1058, %v1054, 0
    %v1063 = vsel %vm1058, %v1056, 0
    %1065 = vmatpush.bf16.xpose.msra.mxu0 0
    %1066 = vmatpush.bf16.xpose.msra.mxu0 0
    %1067 = vmatpush.bf16.xpose.msra.mxu0 0
    %1068 = vmatpush.bf16.xpose.msra.mxu0 0
    %1069 = vmatpush.bf16.xpose.msra.mxu0 0
    %1070 = vmatpush.bf16.xpose.msra.mxu0 0
    %1071 = vmatpush.bf16.xpose.msra.mxu0 0
    %1072 = vmatpush.bf16.xpose.msra.mxu0 %v1063
    %1073 = vmatmul.bf16.gmra.mxu0 %v1060
    %v1074 = vpop.f32.mrf.mxu0
    %v1075 = vadd.f32 0.0, %v1074
    %v1076 = vpop.f32.mrf.mxu0
    %1077 = vdwg.mxu0
    %v1079 = vsel %vm1058, %v1055, 0
    %v1082 = vsel %vm1058, %v1057, 0
    %1084 = vmatpush.bf16.xpose.msra.mxu0 0
    %1085 = vmatpush.bf16.xpose.msra.mxu0 0
    %1086 = vmatpush.bf16.xpose.msra.mxu0 0
    %1087 = vmatpush.bf16.xpose.msra.mxu0 0
    %1088 = vmatpush.bf16.xpose.msra.mxu0 0
    %1089 = vmatpush.bf16.xpose.msra.mxu0 0
    %1090 = vmatpush.bf16.xpose.msra.mxu0 0
    %1091 = vmatpush.bf16.xpose.msra.mxu0 %v1082
    %1092 = vmatmul.bf16.gmra.mxu0 %v1079
    %v1093 = vpop.f32.mrf.mxu0
    %v1094 = vadd.f32 0.0, %v1093
    %v1095 = vpop.f32.mrf.mxu0
    %1096 = vdwg.mxu0
    %v1097 = vmul.f32 %v1075, 0.125
    %v1098 = vmul.f32 %v1094, 0.125
    %vm1099 = vcmask 64512
    %v1100 = vsel %vm1099, %v1097, -inf
    %1101 = vmax.xlane.f32.xlu0 %v1100
    %v1102 = vpop.xlane.xlu0 %1101
    %v1103 = vsel %vm1099, %v1098, -inf
    %1104 = vmax.xlane.f32.xlu0 %v1103
    %v1105 = vpop.xlane.xlu0 %1104
    %v1106 = vsub.f32 %v1097, %v1102
    %v1107 = vsub.f32 %v1098, %v1105
    %v1108 = vmul.f32 %v1106, 1.442695
    %v1109 = vpow.pop %v1108
    %v1110 = vmul.f32 %v1107, 1.442695
    %v1111 = vpow.pop %v1110
    %v1112 = vsel %vm1099, %v1109, 0.0
    %1113 = vadd.xlane.f32.xlu0 %v1112
    %v1114 = vpop.xlane.xlu0 %1113
    %v1115 = vsel %vm1099, %v1111, 0.0
    %1116 = vadd.xlane.f32.xlu0 %v1115
    %v1117 = vpop.xlane.xlu0 %1116
    %v1118 = vrcp.pop %v1114
    %v1119 = vmul.f32 %v1114, %v1118
    %v1120 = vsub.f32 1.0, %v1119
    %v1121 = vmul.f32 %v1118, %v1120
    %v1122 = vadd.f32 %v1118, %v1121
    %vm1123 = vweird.f32 %v1114
    %vm1124 = vweird.f32 %v1118
    %vm1125 = vmor %vm1123, %vm1124
    %v1126 = vsel %vm1125, %v1118, %v1122
    %v1127 = vand.u32 2147483647, %v1114
    %vm1128 = vcmp.eq.f32.partialorder %v1127, 8.507059e+37
    %v1129 = vand.u32 %v1114, 2147483648
    %v1130 = vor.u32 1.1754944e-38, %v1129
    %v1131 = vsel %vm1128, %v1130, %v1126
    %v1132 = vmul.f32 %v1109, %v1131
    %v1133 = vrcp.pop %v1117
    %v1134 = vmul.f32 %v1117, %v1133
    %v1135 = vsub.f32 1.0, %v1134
    %v1136 = vmul.f32 %v1133, %v1135
    %v1137 = vadd.f32 %v1133, %v1136
    %vm1138 = vweird.f32 %v1117
    %vm1139 = vweird.f32 %v1133
    %vm1140 = vmor %vm1138, %vm1139
    %v1141 = vsel %vm1140, %v1133, %v1137
    %v1142 = vand.u32 2147483647, %v1117
    %vm1143 = vcmp.eq.f32.partialorder %v1142, 8.507059e+37
    %v1144 = vand.u32 %v1117, 2147483648
    %v1145 = vor.u32 1.1754944e-38, %v1144
    %v1146 = vsel %vm1143, %v1145, %v1141
    %v1147 = vmul.f32 %v1111, %v1146
    %v1148 = vpack.c.bf16 %v1132, %v1132
    %v1149 = vpack.c.bf16 %v1147, %v1147
    %v1150 = vpack.c.bf16 %v987, %v987
    %v1151 = vpack.c.bf16 %v989, %v989
    %v1153 = vsel %vm1099, %v1148, 0
    %vm1155 = vcmask 1043456
    %v1157 = vsel %vm1155, %v1150, 0
    %1159 = vmatpush.bf16.msra.mxu0 0
    %1160 = vmatpush.bf16.msra.mxu0 0
    %1161 = vmatpush.bf16.msra.mxu0 0
    %1162 = vmatpush.bf16.msra.mxu0 0
    %1163 = vmatpush.bf16.msra.mxu0 0
    %1164 = vmatpush.bf16.msra.mxu0 0
    %1165 = vmatpush.bf16.msra.mxu0 0
    %1166 = vmatpush.bf16.msra.mxu0 %v1157
    %1167 = vmatmul.bf16.gmra.mxu0 %v1153
    %v1168 = vpop.f32.mrf.mxu0
    %v1169 = vadd.f32 0.0, %v1168
    %v1170 = vpop.f32.mrf.mxu0
    %1171 = vdwg.mxu0
    %v1173 = vsel %vm1099, %v1149, 0
    %v1176 = vsel %vm1155, %v1151, 0
    %1178 = vmatpush.bf16.msra.mxu0 0
    %1179 = vmatpush.bf16.msra.mxu0 0
    %1180 = vmatpush.bf16.msra.mxu0 0
    %1181 = vmatpush.bf16.msra.mxu0 0
    %1182 = vmatpush.bf16.msra.mxu0 0
    %1183 = vmatpush.bf16.msra.mxu0 0
    %1184 = vmatpush.bf16.msra.mxu0 0
    %1185 = vmatpush.bf16.msra.mxu0 %v1176
    %1186 = vmatmul.bf16.gmra.mxu0 %v1173
    %v1187 = vpop.f32.mrf.mxu0
    %v1188 = vadd.f32 0.0, %v1187
    %v1189 = vpop.f32.mrf.mxu0
    %1190 = vdwg.mxu0
    %v1192 = vunpack.c.l.b16 %v1054
    %v1193 = vpack.c.b16 %v1192, %v1192
    %1194 = vrot.lane.b32.xlu0 %v1193, 64
    %v1195 = vpop.permute.xlu0 %1194
    %v1197 = vunpack.c.l.b16 %v1056
    %v1198 = vpack.c.b16 %v1197, %v1197
    %1199 = vrot.lane.b32.xlu0 %v1198, 64
    %v1200 = vpop.permute.xlu0 %1199
    %v1202 = vsel %vm1058, %v1195, 0
    %v1205 = vsel %vm1058, %v1200, 0
    %1207 = vmatpush.bf16.xpose.msra.mxu0 0
    %1208 = vmatpush.bf16.xpose.msra.mxu0 0
    %1209 = vmatpush.bf16.xpose.msra.mxu0 0
    %1210 = vmatpush.bf16.xpose.msra.mxu0 0
    %1211 = vmatpush.bf16.xpose.msra.mxu0 0
    %1212 = vmatpush.bf16.xpose.msra.mxu0 0
    %1213 = vmatpush.bf16.xpose.msra.mxu0 0
    %1214 = vmatpush.bf16.xpose.msra.mxu0 %v1205
    %1215 = vmatmul.bf16.gmra.mxu0 %v1202
    %v1216 = vpop.f32.mrf.mxu0
    %v1217 = vadd.f32 0.0, %v1216
    %v1218 = vpop.f32.mrf.mxu0
    %1219 = vdwg.mxu0
    %v1221 = vunpack.c.l.b16 %v1055
    %v1222 = vpack.c.b16 %v1221, %v1221
    %1223 = vrot.lane.b32.xlu0 %v1222, 64
    %v1224 = vpop.permute.xlu0 %1223
    %v1226 = vunpack.c.l.b16 %v1057
    %v1227 = vpack.c.b16 %v1226, %v1226
    %1228 = vrot.lane.b32.xlu0 %v1227, 64
    %v1229 = vpop.permute.xlu0 %1228
    %v1231 = vsel %vm1058, %v1224, 0
    %v1234 = vsel %vm1058, %v1229, 0
    %1236 = vmatpush.bf16.xpose.msra.mxu0 0
    %1237 = vmatpush.bf16.xpose.msra.mxu0 0
    %1238 = vmatpush.bf16.xpose.msra.mxu0 0
    %1239 = vmatpush.bf16.xpose.msra.mxu0 0
    %1240 = vmatpush.bf16.xpose.msra.mxu0 0
    %1241 = vmatpush.bf16.xpose.msra.mxu0 0
    %1242 = vmatpush.bf16.xpose.msra.mxu0 0
    %1243 = vmatpush.bf16.xpose.msra.mxu0 %v1234
    %1244 = vmatmul.bf16.gmra.mxu0 %v1231
    %v1245 = vpop.f32.mrf.mxu0
    %v1246 = vadd.f32 0.0, %v1245
    %v1247 = vpop.f32.mrf.mxu0
    %1248 = vdwg.mxu0
    %v1249 = vmul.f32 %v1217, 0.125
    %v1250 = vmul.f32 %v1246, 0.125
    %v1251 = vsel %vm1099, %v1249, -inf
    %1252 = vmax.xlane.f32.xlu0 %v1251
    %v1253 = vpop.xlane.xlu0 %1252
    %v1254 = vsel %vm1099, %v1250, -inf
    %1255 = vmax.xlane.f32.xlu0 %v1254
    %v1256 = vpop.xlane.xlu0 %1255
    %v1257 = vsub.f32 %v1249, %v1253
    %v1258 = vsub.f32 %v1250, %v1256
    %v1259 = vmul.f32 %v1257, 1.442695
    %v1260 = vpow.pop %v1259
    %v1261 = vmul.f32 %v1258, 1.442695
    %v1262 = vpow.pop %v1261
    %v1263 = vsel %vm1099, %v1260, 0.0
    %1264 = vadd.xlane.f32.xlu0 %v1263
    %v1265 = vpop.xlane.xlu0 %1264
    %v1266 = vsel %vm1099, %v1262, 0.0
    %1267 = vadd.xlane.f32.xlu0 %v1266
    %v1268 = vpop.xlane.xlu0 %1267
    %v1269 = vrcp.pop %v1265
    %v1270 = vmul.f32 %v1265, %v1269
    %v1271 = vsub.f32 1.0, %v1270
    %v1272 = vmul.f32 %v1269, %v1271
    %v1273 = vadd.f32 %v1269, %v1272
    %vm1274 = vweird.f32 %v1265
    %vm1275 = vweird.f32 %v1269
    %vm1276 = vmor %vm1274, %vm1275
    %v1277 = vsel %vm1276, %v1269, %v1273
    %v1278 = vand.u32 2147483647, %v1265
    %vm1279 = vcmp.eq.f32.partialorder %v1278, 8.507059e+37
    %v1280 = vand.u32 %v1265, 2147483648
    %v1281 = vor.u32 1.1754944e-38, %v1280
    %v1282 = vsel %vm1279, %v1281, %v1277
    %v1283 = vmul.f32 %v1260, %v1282
    %v1284 = vrcp.pop %v1268
    %v1285 = vmul.f32 %v1268, %v1284
    %v1286 = vsub.f32 1.0, %v1285
    %v1287 = vmul.f32 %v1284, %v1286
    %v1288 = vadd.f32 %v1284, %v1287
    %vm1289 = vweird.f32 %v1268
    %vm1290 = vweird.f32 %v1284
    %vm1291 = vmor %vm1289, %vm1290
    %v1292 = vsel %vm1291, %v1284, %v1288
    %v1293 = vand.u32 2147483647, %v1268
    %vm1294 = vcmp.eq.f32.partialorder %v1293, 8.507059e+37
    %v1295 = vand.u32 %v1268, 2147483648
    %v1296 = vor.u32 1.1754944e-38, %v1295
    %v1297 = vsel %vm1294, %v1296, %v1292
    %v1298 = vmul.f32 %v1262, %v1297
    %v1299 = vpack.c.bf16 %v1283, %v1283
    %v1300 = vpack.c.bf16 %v1298, %v1298
    %v1302 = vunpack.c.l.b16 %v1150
    %v1303 = vpack.c.b16 %v1302, %v1302
    %1304 = vrot.lane.b32.xlu0 %v1303, 64
    %v1305 = vpop.permute.xlu0 %1304
    %v1307 = vsel %vm1099, %v1299, 0
    %v1310 = vsel %vm1155, %v1305, 0
    %1312 = vmatpush.bf16.msra.mxu0 0
    %1313 = vmatpush.bf16.msra.mxu0 0
    %1314 = vmatpush.bf16.msra.mxu0 0
    %1315 = vmatpush.bf16.msra.mxu0 0
    %1316 = vmatpush.bf16.msra.mxu0 0
    %1317 = vmatpush.bf16.msra.mxu0 0
    %1318 = vmatpush.bf16.msra.mxu0 0
    %1319 = vmatpush.bf16.msra.mxu0 %v1310
    %1320 = vmatmul.bf16.gmra.mxu0 %v1307
    %v1321 = vpop.f32.mrf.mxu0
    %v1322 = vadd.f32 0.0, %v1321
    %v1323 = vpop.f32.mrf.mxu0
    %1324 = vdwg.mxu0
    %v1326 = vunpack.c.l.b16 %v1151
    %v1327 = vpack.c.b16 %v1326, %v1326
    %1328 = vrot.lane.b32.xlu0 %v1327, 64
    %v1329 = vpop.permute.xlu0 %1328
    %v1331 = vsel %vm1099, %v1300, 0
    %v1334 = vsel %vm1155, %v1329, 0
    %1336 = vmatpush.bf16.msra.mxu0 0
    %1337 = vmatpush.bf16.msra.mxu0 0
    %1338 = vmatpush.bf16.msra.mxu0 0
    %1339 = vmatpush.bf16.msra.mxu0 0
    %1340 = vmatpush.bf16.msra.mxu0 0
    %1341 = vmatpush.bf16.msra.mxu0 0
    %1342 = vmatpush.bf16.msra.mxu0 0
    %1343 = vmatpush.bf16.msra.mxu0 %v1334
    %1344 = vmatmul.bf16.gmra.mxu0 %v1331
    %v1345 = vpop.f32.mrf.mxu0
    %v1346 = vadd.f32 0.0, %v1345
    %v1347 = vpop.f32.mrf.mxu0
    %1348 = vdwg.mxu0
    %1351 = vrot.lane.b32.xlu0 %v1322, 64
    %v1352 = vpop.permute.xlu0 %1351
    %1353 = vrot.lane.b32.xlu0 %v1346, 64
    %v1354 = vpop.permute.xlu0 %1353
    %v1357 = vsel %vm1058, %v1169, %v1352
    %v1358 = vsel %vm1058, %v1188, %v1354
    %v1359 = vpack.c.bf16 %v1358, %v1357
    %v1360 = vperm.slane %v213, 4
    %v1377 = vunpack.c.l.b16 %v298
    %v1378 = vunpack.c.l.b16 %v299
    %v1379 = vunpack.c.l.b16 %v300
    %v1380 = vunpack.c.l.b16 %v301
    %v1381 = vunpack.c.l.b16 %v302
    %v1382 = vunpack.c.l.b16 %v303
    %v1383 = vunpack.c.l.b16 %v304
    %v1384 = vunpack.c.l.b16 %v305
    %v1385 = vunpack.c.l.b16 %v306
    %v1386 = vunpack.c.l.b16 %v307
    %v1387 = vunpack.c.l.b16 %v308
    %v1388 = vunpack.c.l.b16 %v309
    %v1389 = vunpack.c.l.b16 %v310
    %v1390 = vunpack.c.l.b16 %v311
    %v1391 = vunpack.c.l.b16 %v312
    %v1392 = vunpack.c.l.b16 %v313
    %v1393 = vpack.c.b16 %v1378, %v1377
    %v1394 = vpack.c.b16 %v1380, %v1379
    %v1395 = vpack.c.b16 %v1382, %v1381
    %v1396 = vpack.c.b16 %v1384, %v1383
    %v1397 = vpack.c.b16 %v1386, %v1385
    %v1398 = vpack.c.b16 %v1388, %v1387
    %v1399 = vpack.c.b16 %v1390, %v1389
    %v1400 = vpack.c.b16 %v1392, %v1391
    %1409 = vmatpush.bf16.msra.mxu0 %v1400
    %1410 = vmatpush.bf16.msra.mxu0 %v1399
    %1411 = vmatpush.bf16.msra.mxu0 %v1398
    %1412 = vmatpush.bf16.msra.mxu0 %v1397
    %1413 = vmatpush.bf16.msra.mxu0 %v1396
    %1414 = vmatpush.bf16.msra.mxu0 %v1395
    %1415 = vmatpush.bf16.msra.mxu0 %v1394
    %1416 = vmatpush.bf16.msra.mxu0 %v1393
    %1417 = vmatmul.bf16.gmra.mxu0 %v1359
    %v1418 = vpop.f32.mrf.mxu0
    %v1419 = vadd.f32 %v1360, %v1418
    %v1420 = vpop.f32.mrf.mxu0
    %v1421 = vadd.f32 %v1360, %v1420
    %1422 = vdwg.mxu0
    %v1423 = vadd.f32 %v1419, %v772
    %v1424 = vadd.f32 %v1421, %v773
    %1425 = vadd.xlane.f32.xlu0 %v1423
    %v1426 = vpop.xlane.xlu0 %1425
    %1427 = vadd.xlane.f32.xlu0 %v1424
    %v1428 = vpop.xlane.xlu0 %1427
    %v1429 = vmul.f32 %v1426, %v404
    %v1430 = vmul.f32 %v1428, %v404
    %v1431 = vsub.f32 %v1423, %v1429
    %v1432 = vsub.f32 %v1424, %v1430
    %v1433 = vmul.f32 %v1431, %v1431
    %v1434 = vmul.f32 %v1432, %v1432
    %1435 = vadd.xlane.f32.xlu0 %v1433
    %v1436 = vpop.xlane.xlu0 %1435
    %1437 = vadd.xlane.f32.xlu0 %v1434
    %v1438 = vpop.xlane.xlu0 %1437
    %v1439 = vmul.f32 %v1436, %v404
    %v1440 = vmul.f32 %v1438, %v404
    %v1441 = vadd.f32 %v1439, 1e-05
    %v1442 = vadd.f32 %v1440, 1e-05
    %v1443 = vrsqrt.pop %v1441
    %v1444 = vmul.f32 %v1443, %v1441
    %v1445 = vmul.f32 %v1444, %v1443
    %v1446 = vmul.f32 0.5, %v1445
    %v1447 = vsub.f32 1.5, %v1446
    %v1448 = vmul.f32 %v1443, %v1447
    %vm1449 = vweird.f32 %v1441
    %vm1450 = vweird.f32 %v1443
    %vm1451 = vmor %vm1449, %vm1450
    %v1452 = vsel %vm1451, %v1443, %v1448
    %v1453 = vrsqrt.pop %v1442
    %v1454 = vmul.f32 %v1453, %v1442
    %v1455 = vmul.f32 %v1454, %v1453
    %v1456 = vmul.f32 0.5, %v1455
    %v1457 = vsub.f32 1.5, %v1456
    %v1458 = vmul.f32 %v1453, %v1457
    %vm1459 = vweird.f32 %v1442
    %vm1460 = vweird.f32 %v1453
    %vm1461 = vmor %vm1459, %vm1460
    %v1462 = vsel %vm1461, %v1453, %v1458
    %v1463 = vmul.f32 %v1431, %v1452
    %v1464 = vmul.f32 %v1432, %v1462
    %v1465 = vperm.slane %v213, 5
    %v1466 = vmul.f32 %v1463, %v1465
    %v1467 = vmul.f32 %v1464, %v1465
    %v1468 = vperm.slane %v213, 6
    %v1469 = vadd.f32 %v1466, %v1468
    %v1470 = vadd.f32 %v1467, %v1468
    %v1471 = vpack.c.bf16 %v1470, %v1469
    %v1472 = vperm.slane %v217, 1
    %v1473 = vperm.slane %v217, 5
    %v1476 = vperm.slane %v1472, 1
    %v1477 = vperm.slane %v1473, 1
    %v1494 = vunpack.c.l.b16 %v314
    %v1495 = vunpack.c.h.b16 %v314
    %v1496 = vunpack.c.l.b16 %v315
    %v1497 = vunpack.c.h.b16 %v315
    %v1498 = vunpack.c.l.b16 %v316
    %v1499 = vunpack.c.h.b16 %v316
    %v1500 = vunpack.c.l.b16 %v317
    %v1501 = vunpack.c.h.b16 %v317
    %v1502 = vunpack.c.l.b16 %v318
    %v1503 = vunpack.c.h.b16 %v318
    %v1504 = vunpack.c.l.b16 %v319
    %v1505 = vunpack.c.h.b16 %v319
    %v1506 = vunpack.c.l.b16 %v320
    %v1507 = vunpack.c.h.b16 %v320
    %v1508 = vunpack.c.l.b16 %v321
    %v1509 = vunpack.c.h.b16 %v321
    %v1510 = vunpack.c.l.b16 %v322
    %v1511 = vunpack.c.h.b16 %v322
    %v1512 = vunpack.c.l.b16 %v323
    %v1513 = vunpack.c.h.b16 %v323
    %v1514 = vunpack.c.l.b16 %v324
    %v1515 = vunpack.c.h.b16 %v324
    %v1516 = vunpack.c.l.b16 %v325
    %v1517 = vunpack.c.h.b16 %v325
    %v1518 = vunpack.c.l.b16 %v326
    %v1519 = vunpack.c.h.b16 %v326
    %v1520 = vunpack.c.l.b16 %v327
    %v1521 = vunpack.c.h.b16 %v327
    %v1522 = vunpack.c.l.b16 %v328
    %v1523 = vunpack.c.h.b16 %v328
    %v1524 = vunpack.c.l.b16 %v329
    %v1525 = vunpack.c.h.b16 %v329
    %v1526 = vpack.c.b16 %v1496, %v1494
    %v1527 = vpack.c.b16 %v1497, %v1495
    %v1528 = vpack.c.b16 %v1500, %v1498
    %v1529 = vpack.c.b16 %v1501, %v1499
    %v1530 = vpack.c.b16 %v1504, %v1502
    %v1531 = vpack.c.b16 %v1505, %v1503
    %v1532 = vpack.c.b16 %v1508, %v1506
    %v1533 = vpack.c.b16 %v1509, %v1507
    %v1534 = vpack.c.b16 %v1512, %v1510
    %v1535 = vpack.c.b16 %v1513, %v1511
    %v1536 = vpack.c.b16 %v1516, %v1514
    %v1537 = vpack.c.b16 %v1517, %v1515
    %v1538 = vpack.c.b16 %v1520, %v1518
    %v1539 = vpack.c.b16 %v1521, %v1519
    %v1540 = vpack.c.b16 %v1524, %v1522
    %v1541 = vpack.c.b16 %v1525, %v1523
    %1558 = vmatpush.bf16.msra.mxu0 %v1540
    %1559 = vmatpush.bf16.msra.mxu0 %v1538
    %1560 = vmatpush.bf16.msra.mxu0 %v1536
    %1561 = vmatpush.bf16.msra.mxu0 %v1534
    %1562 = vmatpush.bf16.msra.mxu0 %v1532
    %1563 = vmatpush.bf16.msra.mxu0 %v1530
    %1564 = vmatpush.bf16.msra.mxu0 %v1528
    %1565 = vmatpush.bf16.msra.mxu0 %v1526
    %1566 = vmatmul.bf16.gmra.mxu0 %v1471
    %v1567 = vpop.f32.mrf.mxu0
    %v1568 = vadd.f32 %v1476, %v1567
    %v1569 = vpop.f32.mrf.mxu0
    %v1570 = vadd.f32 %v1476, %v1569
    %1571 = vdwg.mxu0
    %1572 = vmatpush.bf16.msra.mxu0 %v1541
    %1573 = vmatpush.bf16.msra.mxu0 %v1539
    %1574 = vmatpush.bf16.msra.mxu0 %v1537
    %1575 = vmatpush.bf16.msra.mxu0 %v1535
    %1576 = vmatpush.bf16.msra.mxu0 %v1533
    %1577 = vmatpush.bf16.msra.mxu0 %v1531
    %1578 = vmatpush.bf16.msra.mxu0 %v1529
    %1579 = vmatpush.bf16.msra.mxu0 %v1527
    %1580 = vmatmul.bf16.gmra.mxu0 %v1471
    %v1581 = vpop.f32.mrf.mxu0
    %v1582 = vadd.f32 %v1477, %v1581
    %v1583 = vpop.f32.mrf.mxu0
    %v1584 = vadd.f32 %v1477, %v1583
    %1585 = vdwg.mxu0
    %v1586 = vxor.u32 %v1582, 2147483648
    %v1587 = vxor.u32 %v1584, 2147483648
    %v1588 = vmul.f32 %v1586, 1.442695
    %v1589 = vpow.pop %v1588
    %v1590 = vmul.f32 %v1587, 1.442695
    %v1591 = vpow.pop %v1590
    %v1592 = vadd.f32 %v1589, 1.0
    %v1593 = vadd.f32 %v1591, 1.0
    %v1594 = vrcp.pop %v1592
    %v1595 = vmul.f32 %v1592, %v1594
    %v1596 = vsub.f32 1.0, %v1595
    %v1597 = vmul.f32 %v1594, %v1596
    %v1598 = vadd.f32 %v1594, %v1597
    %vm1599 = vweird.f32 %v1592
    %vm1600 = vweird.f32 %v1594
    %vm1601 = vmor %vm1599, %vm1600
    %v1602 = vsel %vm1601, %v1594, %v1598
    %v1603 = vand.u32 2147483647, %v1592
    %vm1604 = vcmp.eq.f32.partialorder %v1603, 8.507059e+37
    %v1605 = vand.u32 %v1592, 2147483648
    %v1606 = vor.u32 1.1754944e-38, %v1605
    %v1607 = vsel %vm1604, %v1606, %v1602
    %v1608 = vmul.f32 1.0, %v1607
    %v1609 = vrcp.pop %v1593
    %v1610 = vmul.f32 %v1593, %v1609
    %v1611 = vsub.f32 1.0, %v1610
    %v1612 = vmul.f32 %v1609, %v1611
    %v1613 = vadd.f32 %v1609, %v1612
    %vm1614 = vweird.f32 %v1593
    %vm1615 = vweird.f32 %v1609
    %vm1616 = vmor %vm1614, %vm1615
    %v1617 = vsel %vm1616, %v1609, %v1613
    %v1618 = vand.u32 2147483647, %v1593
    %vm1619 = vcmp.eq.f32.partialorder %v1618, 8.507059e+37
    %v1620 = vand.u32 %v1593, 2147483648
    %v1621 = vor.u32 1.1754944e-38, %v1620
    %v1622 = vsel %vm1619, %v1621, %v1617
    %v1623 = vmul.f32 1.0, %v1622
    %v1624 = vmul.f32 %v1568, %v1608
    %v1625 = vmul.f32 %v1570, %v1623
    %1626 = vst [vmem:[#allocation2] sm:$0xff] 0.0
    %1627 = vst [vmem:[#allocation2 + $0x18] sm:$0xff] 0.0
    %1628 = vst [vmem:[#allocation2 + $0x10] sm:$0xff] 0.0
    %1629 = vst [vmem:[#allocation2 + $0x28] sm:$0xff] 0.0
    %1630 = vst [vmem:[#allocation2 + $0x8] sm:$0xff] %v1624
    %1631 = vst [vmem:[#allocation2 + $0x20] sm:$0xff] %v1625
    %v1632 = vld [vmem:[#allocation2 + $0x1] sm:$0xff]
    %v1633 = vld [vmem:[#allocation2 + $0x19] sm:$0xff]
    %v1634 = vperm.slane %v211, 0
    %v1635 = vmul.f32 %v1632, %v1634
    %v1636 = vmul.f32 %v1633, %v1634
    %v1637 = vld [vmem:[#allocation2 + $0x2] sm:$0xff]
    %v1638 = vld [vmem:[#allocation2 + $0x1a] sm:$0xff]
    %v1639 = vperm.slane %v211, 1
    %v1640 = vmul.f32 %v1637, %v1639
    %v1641 = vmul.f32 %v1638, %v1639
    %v1642 = vadd.f32 %v1635, %v1640
    %v1643 = vadd.f32 %v1636, %v1641
    %v1644 = vld [vmem:[#allocation2 + $0x3] sm:$0xff]
    %v1645 = vld [vmem:[#allocation2 + $0x1b] sm:$0xff]
    %v1646 = vperm.slane %v211, 2
    %v1647 = vmul.f32 %v1644, %v1646
    %v1648 = vmul.f32 %v1645, %v1646
    %v1649 = vadd.f32 %v1642, %v1647
    %v1650 = vadd.f32 %v1643, %v1648
    %v1651 = vld [vmem:[#allocation2 + $0x4] sm:$0xff]
    %v1652 = vld [vmem:[#allocation2 + $0x1c] sm:$0xff]
    %v1653 = vperm.slane %v211, 3
    %v1654 = vmul.f32 %v1651, %v1653
    %v1655 = vmul.f32 %v1652, %v1653
    %v1656 = vadd.f32 %v1649, %v1654
    %v1657 = vadd.f32 %v1650, %v1655
    %v1658 = vld [vmem:[#allocation2 + $0x5] sm:$0xff]
    %v1659 = vld [vmem:[#allocation2 + $0x1d] sm:$0xff]
    %v1660 = vperm.slane %v211, 4
    %v1661 = vmul.f32 %v1658, %v1660
    %v1662 = vmul.f32 %v1659, %v1660
    %v1663 = vadd.f32 %v1656, %v1661
    %v1664 = vadd.f32 %v1657, %v1662
    %v1665 = vld [vmem:[#allocation2 + $0x6] sm:$0xff]
    %v1666 = vld [vmem:[#allocation2 + $0x1e] sm:$0xff]
    %v1667 = vperm.slane %v211, 5
    %v1668 = vmul.f32 %v1665, %v1667
    %v1669 = vmul.f32 %v1666, %v1667
    %v1670 = vadd.f32 %v1663, %v1668
    %v1671 = vadd.f32 %v1664, %v1669
    %v1672 = vld [vmem:[#allocation2 + $0x7] sm:$0xff]
    %v1673 = vld [vmem:[#allocation2 + $0x1f] sm:$0xff]
    %v1674 = vperm.slane %v211, 6
    %v1675 = vmul.f32 %v1672, %v1674
    %v1676 = vmul.f32 %v1673, %v1674
    %v1677 = vadd.f32 %v1670, %v1675
    %v1678 = vadd.f32 %v1671, %v1676
    %v1679 = vld [vmem:[#allocation2 + $0x8] sm:$0xff]
    %v1680 = vld [vmem:[#allocation2 + $0x20] sm:$0xff]
    %v1681 = vperm.slane %v211, 7
    %v1682 = vmul.f32 %v1679, %v1681
    %v1683 = vmul.f32 %v1680, %v1681
    %v1684 = vadd.f32 %v1677, %v1682
    %v1685 = vadd.f32 %v1678, %v1683
    %v1686 = vld [vmem:[#allocation2 + $0x9] sm:$0xff]
    %v1687 = vld [vmem:[#allocation2 + $0x21] sm:$0xff]
    %v1688 = vperm.slane %v212, 0
    %v1689 = vmul.f32 %v1686, %v1688
    %v1690 = vmul.f32 %v1687, %v1688
    %v1691 = vadd.f32 %v1684, %v1689
    %v1692 = vadd.f32 %v1685, %v1690
    %v1693 = vld [vmem:[#allocation2 + $0xa] sm:$0xff]
    %v1694 = vld [vmem:[#allocation2 + $0x22] sm:$0xff]
    %v1695 = vperm.slane %v212, 1
    %v1696 = vmul.f32 %v1693, %v1695
    %v1697 = vmul.f32 %v1694, %v1695
    %v1698 = vadd.f32 %v1691, %v1696
    %v1699 = vadd.f32 %v1692, %v1697
    %v1700 = vld [vmem:[#allocation2 + $0xb] sm:$0xff]
    %v1701 = vld [vmem:[#allocation2 + $0x23] sm:$0xff]
    %v1702 = vperm.slane %v212, 2
    %v1703 = vmul.f32 %v1700, %v1702
    %v1704 = vmul.f32 %v1701, %v1702
    %v1705 = vadd.f32 %v1698, %v1703
    %v1706 = vadd.f32 %v1699, %v1704
    %v1707 = vld [vmem:[#allocation2 + $0xc] sm:$0xff]
    %v1708 = vld [vmem:[#allocation2 + $0x24] sm:$0xff]
    %v1709 = vperm.slane %v212, 3
    %v1710 = vmul.f32 %v1707, %v1709
    %v1711 = vmul.f32 %v1708, %v1709
    %v1712 = vadd.f32 %v1705, %v1710
    %v1713 = vadd.f32 %v1706, %v1711
    %v1714 = vld [vmem:[#allocation2 + $0xd] sm:$0xff]
    %v1715 = vld [vmem:[#allocation2 + $0x25] sm:$0xff]
    %v1716 = vperm.slane %v212, 4
    %v1717 = vmul.f32 %v1714, %v1716
    %v1718 = vmul.f32 %v1715, %v1716
    %v1719 = vadd.f32 %v1712, %v1717
    %v1720 = vadd.f32 %v1713, %v1718
    %v1721 = vld [vmem:[#allocation2 + $0xe] sm:$0xff]
    %v1722 = vld [vmem:[#allocation2 + $0x26] sm:$0xff]
    %v1723 = vperm.slane %v212, 5
    %v1724 = vmul.f32 %v1721, %v1723
    %v1725 = vmul.f32 %v1722, %v1723
    %v1726 = vadd.f32 %v1719, %v1724
    %v1727 = vadd.f32 %v1720, %v1725
    %v1728 = vld [vmem:[#allocation2 + $0xf] sm:$0xff]
    %v1729 = vld [vmem:[#allocation2 + $0x27] sm:$0xff]
    %v1730 = vperm.slane %v212, 6
    %v1731 = vmul.f32 %v1728, %v1730
    %v1732 = vmul.f32 %v1729, %v1730
    %v1733 = vadd.f32 %v1726, %v1731
    %v1734 = vadd.f32 %v1727, %v1732
    %v1735 = vperm.slane %v213, 7
    %v1736 = vadd.f32 %v1733, %v1735
    %v1737 = vadd.f32 %v1734, %v1735
    %1738 = vadd.xlane.f32.xlu0 %v1736
    %v1739 = vpop.xlane.xlu0 %1738
    %1740 = vadd.xlane.f32.xlu0 %v1737
    %v1741 = vpop.xlane.xlu0 %1740
    %v1742 = vmul.f32 %v1739, %v404
    %v1743 = vmul.f32 %v1741, %v404
    %v1744 = vsub.f32 %v1736, %v1742
    %v1745 = vsub.f32 %v1737, %v1743
    %v1746 = vmul.f32 %v1744, %v1744
    %v1747 = vmul.f32 %v1745, %v1745
    %1748 = vadd.xlane.f32.xlu0 %v1746
    %v1749 = vpop.xlane.xlu0 %1748
    %1750 = vadd.xlane.f32.xlu0 %v1747
    %v1751 = vpop.xlane.xlu0 %1750
    %v1752 = vmul.f32 %v1749, %v404
    %v1753 = vmul.f32 %v1751, %v404
    %v1754 = vadd.f32 %v1752, 1e-05
    %v1755 = vadd.f32 %v1753, 1e-05
    %v1756 = vrsqrt.pop %v1754
    %v1757 = vmul.f32 %v1756, %v1754
    %v1758 = vmul.f32 %v1757, %v1756
    %v1759 = vmul.f32 0.5, %v1758
    %v1760 = vsub.f32 1.5, %v1759
    %v1761 = vmul.f32 %v1756, %v1760
    %vm1762 = vweird.f32 %v1754
    %vm1763 = vweird.f32 %v1756
    %vm1764 = vmor %vm1762, %vm1763
    %v1765 = vsel %vm1764, %v1756, %v1761
    %v1766 = vrsqrt.pop %v1755
    %v1767 = vmul.f32 %v1766, %v1755
    %v1768 = vmul.f32 %v1767, %v1766
    %v1769 = vmul.f32 0.5, %v1768
    %v1770 = vsub.f32 1.5, %v1769
    %v1771 = vmul.f32 %v1766, %v1770
    %vm1772 = vweird.f32 %v1755
    %vm1773 = vweird.f32 %v1766
    %vm1774 = vmor %vm1772, %vm1773
    %v1775 = vsel %vm1774, %v1766, %v1771
    %v1776 = vmul.f32 %v1744, %v1765
    %v1777 = vmul.f32 %v1745, %v1775
    %v1778 = vperm.slane %v214, 0
    %v1779 = vmul.f32 %v1776, %v1778
    %v1780 = vmul.f32 %v1777, %v1778
    %v1781 = vperm.slane %v214, 1
    %v1782 = vadd.f32 %v1779, %v1781
    %v1783 = vadd.f32 %v1780, %v1781
    %v1784 = vxor.u32 %v1782, 2147483648
    %v1785 = vxor.u32 %v1783, 2147483648
    %v1786 = vmul.f32 %v1784, 1.442695
    %v1787 = vpow.pop %v1786
    %v1788 = vmul.f32 %v1785, 1.442695
    %v1789 = vpow.pop %v1788
    %v1790 = vadd.f32 %v1787, 1.0
    %v1791 = vadd.f32 %v1789, 1.0
    %v1792 = vrcp.pop %v1790
    %v1793 = vmul.f32 %v1790, %v1792
    %v1794 = vsub.f32 1.0, %v1793
    %v1795 = vmul.f32 %v1792, %v1794
    %v1796 = vadd.f32 %v1792, %v1795
    %vm1797 = vweird.f32 %v1790
    %vm1798 = vweird.f32 %v1792
    %vm1799 = vmor %vm1797, %vm1798
    %v1800 = vsel %vm1799, %v1792, %v1796
    %v1801 = vand.u32 2147483647, %v1790
    %vm1802 = vcmp.eq.f32.partialorder %v1801, 8.507059e+37
    %v1803 = vand.u32 %v1790, 2147483648
    %v1804 = vor.u32 1.1754944e-38, %v1803
    %v1805 = vsel %vm1802, %v1804, %v1800
    %v1806 = vmul.f32 1.0, %v1805
    %v1807 = vrcp.pop %v1791
    %v1808 = vmul.f32 %v1791, %v1807
    %v1809 = vsub.f32 1.0, %v1808
    %v1810 = vmul.f32 %v1807, %v1809
    %v1811 = vadd.f32 %v1807, %v1810
    %vm1812 = vweird.f32 %v1791
    %vm1813 = vweird.f32 %v1807
    %vm1814 = vmor %vm1812, %vm1813
    %v1815 = vsel %vm1814, %v1807, %v1811
    %v1816 = vand.u32 2147483647, %v1791
    %vm1817 = vcmp.eq.f32.partialorder %v1816, 8.507059e+37
    %v1818 = vand.u32 %v1791, 2147483648
    %v1819 = vor.u32 1.1754944e-38, %v1818
    %v1820 = vsel %vm1817, %v1819, %v1815
    %v1821 = vmul.f32 1.0, %v1820
    %v1822 = vmul.f32 %v1782, %v1806
    %v1823 = vmul.f32 %v1783, %v1821
    %v1824 = vpack.c.bf16 %v1823, %v1822
    %v1825 = vperm.slane %v214, 2
    %v1842 = vunpack.c.l.b16 %v330
    %v1843 = vunpack.c.l.b16 %v331
    %v1844 = vunpack.c.l.b16 %v332
    %v1845 = vunpack.c.l.b16 %v333
    %v1846 = vunpack.c.l.b16 %v334
    %v1847 = vunpack.c.l.b16 %v335
    %v1848 = vunpack.c.l.b16 %v336
    %v1849 = vunpack.c.l.b16 %v337
    %v1850 = vunpack.c.l.b16 %v338
    %v1851 = vunpack.c.l.b16 %v339
    %v1852 = vunpack.c.l.b16 %v340
    %v1853 = vunpack.c.l.b16 %v341
    %v1854 = vunpack.c.l.b16 %v342
    %v1855 = vunpack.c.l.b16 %v343
    %v1856 = vunpack.c.l.b16 %v344
    %v1857 = vunpack.c.l.b16 %v345
    %v1858 = vpack.c.b16 %v1843, %v1842
    %v1859 = vpack.c.b16 %v1845, %v1844
    %v1860 = vpack.c.b16 %v1847, %v1846
    %v1861 = vpack.c.b16 %v1849, %v1848
    %v1862 = vpack.c.b16 %v1851, %v1850
    %v1863 = vpack.c.b16 %v1853, %v1852
    %v1864 = vpack.c.b16 %v1855, %v1854
    %v1865 = vpack.c.b16 %v1857, %v1856
    %1874 = vmatpush.bf16.msra.mxu0 %v1865
    %1875 = vmatpush.bf16.msra.mxu0 %v1864
    %1876 = vmatpush.bf16.msra.mxu0 %v1863
    %1877 = vmatpush.bf16.msra.mxu0 %v1862
    %1878 = vmatpush.bf16.msra.mxu0 %v1861
    %1879 = vmatpush.bf16.msra.mxu0 %v1860
    %1880 = vmatpush.bf16.msra.mxu0 %v1859
    %1881 = vmatpush.bf16.msra.mxu0 %v1858
    %1882 = vmatmul.bf16.gmra.mxu0 %v1824
    %v1883 = vpop.f32.mrf.mxu0
    %v1884 = vadd.f32 %v1825, %v1883
    %v1885 = vpop.f32.mrf.mxu0
    %v1886 = vadd.f32 %v1825, %v1885
    %1887 = vdwg.mxu0
    %v1888 = vadd.f32 %v1884, %v1423
    %v1889 = vadd.f32 %v1886, %v1424
    %1890 = vadd.xlane.f32.xlu0 %v1888
    %v1891 = vpop.xlane.xlu0 %1890
    %1892 = vadd.xlane.f32.xlu0 %v1889
    %v1893 = vpop.xlane.xlu0 %1892
    %v1894 = vmul.f32 %v1891, %v404
    %v1895 = vmul.f32 %v1893, %v404
    %v1896 = vsub.f32 %v1888, %v1894
    %v1897 = vsub.f32 %v1889, %v1895
    %v1898 = vmul.f32 %v1896, %v1896
    %v1899 = vmul.f32 %v1897, %v1897
    %1900 = vadd.xlane.f32.xlu0 %v1898
    %v1901 = vpop.xlane.xlu0 %1900
    %1902 = vadd.xlane.f32.xlu0 %v1899
    %v1903 = vpop.xlane.xlu0 %1902
    %v1904 = vmul.f32 %v1901, %v404
    %v1905 = vmul.f32 %v1903, %v404
    %v1906 = vadd.f32 %v1904, 1e-05
    %v1907 = vadd.f32 %v1905, 1e-05
    %v1908 = vrsqrt.pop %v1906
    %v1909 = vmul.f32 %v1908, %v1906
    %v1910 = vmul.f32 %v1909, %v1908
    %v1911 = vmul.f32 0.5, %v1910
    %v1912 = vsub.f32 1.5, %v1911
    %v1913 = vmul.f32 %v1908, %v1912
    %vm1914 = vweird.f32 %v1906
    %vm1915 = vweird.f32 %v1908
    %vm1916 = vmor %vm1914, %vm1915
    %v1917 = vsel %vm1916, %v1908, %v1913
    %v1918 = vrsqrt.pop %v1907
    %v1919 = vmul.f32 %v1918, %v1907
    %v1920 = vmul.f32 %v1919, %v1918
    %v1921 = vmul.f32 0.5, %v1920
    %v1922 = vsub.f32 1.5, %v1921
    %v1923 = vmul.f32 %v1918, %v1922
    %vm1924 = vweird.f32 %v1907
    %vm1925 = vweird.f32 %v1918
    %vm1926 = vmor %vm1924, %vm1925
    %v1927 = vsel %vm1926, %v1918, %v1923
    %v1928 = vmul.f32 %v1896, %v1917
    %v1929 = vmul.f32 %v1897, %v1927
    %v1930 = vperm.slane %v214, 3
    %v1931 = vmul.f32 %v1928, %v1930
    %v1932 = vmul.f32 %v1929, %v1930
    %v1933 = vperm.slane %v214, 4
    %v1934 = vadd.f32 %v1931, %v1933
    %v1935 = vadd.f32 %v1932, %v1933
    %v1936 = vpack.c.bf16 %v1935, %v1934
    %v1937 = vperm.slane %v217, 2
    %v1938 = vperm.slane %v217, 6
    %v1941 = vperm.slane %v1937, 2
    %v1942 = vperm.slane %v1938, 2
    %v1959 = vunpack.c.l.b16 %v346
    %v1960 = vunpack.c.h.b16 %v346
    %v1961 = vunpack.c.l.b16 %v347
    %v1962 = vunpack.c.h.b16 %v347
    %v1963 = vunpack.c.l.b16 %v348
    %v1964 = vunpack.c.h.b16 %v348
    %v1965 = vunpack.c.l.b16 %v349
    %v1966 = vunpack.c.h.b16 %v349
    %v1967 = vunpack.c.l.b16 %v350
    %v1968 = vunpack.c.h.b16 %v350
    %v1969 = vunpack.c.l.b16 %v351
    %v1970 = vunpack.c.h.b16 %v351
    %v1971 = vunpack.c.l.b16 %v352
    %v1972 = vunpack.c.h.b16 %v352
    %v1973 = vunpack.c.l.b16 %v353
    %v1974 = vunpack.c.h.b16 %v353
    %v1975 = vunpack.c.l.b16 %v354
    %v1976 = vunpack.c.h.b16 %v354
    %v1977 = vunpack.c.l.b16 %v355
    %v1978 = vunpack.c.h.b16 %v355
    %v1979 = vunpack.c.l.b16 %v356
    %v1980 = vunpack.c.h.b16 %v356
    %v1981 = vunpack.c.l.b16 %v357
    %v1982 = vunpack.c.h.b16 %v357
    %v1983 = vunpack.c.l.b16 %v358
    %v1984 = vunpack.c.h.b16 %v358
    %v1985 = vunpack.c.l.b16 %v359
    %v1986 = vunpack.c.h.b16 %v359
    %v1987 = vunpack.c.l.b16 %v360
    %v1988 = vunpack.c.h.b16 %v360
    %v1989 = vunpack.c.l.b16 %v361
    %v1990 = vunpack.c.h.b16 %v361
    %v1991 = vpack.c.b16 %v1961, %v1959
    %v1992 = vpack.c.b16 %v1962, %v1960
    %v1993 = vpack.c.b16 %v1965, %v1963
    %v1994 = vpack.c.b16 %v1966, %v1964
    %v1995 = vpack.c.b16 %v1969, %v1967
    %v1996 = vpack.c.b16 %v1970, %v1968
    %v1997 = vpack.c.b16 %v1973, %v1971
    %v1998 = vpack.c.b16 %v1974, %v1972
    %v1999 = vpack.c.b16 %v1977, %v1975
    %v2000 = vpack.c.b16 %v1978, %v1976
    %v2001 = vpack.c.b16 %v1981, %v1979
    %v2002 = vpack.c.b16 %v1982, %v1980
    %v2003 = vpack.c.b16 %v1985, %v1983
    %v2004 = vpack.c.b16 %v1986, %v1984
    %v2005 = vpack.c.b16 %v1989, %v1987
    %v2006 = vpack.c.b16 %v1990, %v1988
    %2023 = vmatpush.bf16.msra.mxu0 %v2005
    %2024 = vmatpush.bf16.msra.mxu0 %v2003
    %2025 = vmatpush.bf16.msra.mxu0 %v2001
    %2026 = vmatpush.bf16.msra.mxu0 %v1999
    %2027 = vmatpush.bf16.msra.mxu0 %v1997
    %2028 = vmatpush.bf16.msra.mxu0 %v1995
    %2029 = vmatpush.bf16.msra.mxu0 %v1993
    %2030 = vmatpush.bf16.msra.mxu0 %v1991
    %2031 = vmatmul.bf16.gmra.mxu0 %v1936
    %v2032 = vpop.f32.mrf.mxu0
    %v2033 = vadd.f32 %v1941, %v2032
    %v2034 = vpop.f32.mrf.mxu0
    %v2035 = vadd.f32 %v1941, %v2034
    %2036 = vdwg.mxu0
    %2037 = vmatpush.bf16.msra.mxu0 %v2006
    %2038 = vmatpush.bf16.msra.mxu0 %v2004
    %2039 = vmatpush.bf16.msra.mxu0 %v2002
    %2040 = vmatpush.bf16.msra.mxu0 %v2000
    %2041 = vmatpush.bf16.msra.mxu0 %v1998
    %2042 = vmatpush.bf16.msra.mxu0 %v1996
    %2043 = vmatpush.bf16.msra.mxu0 %v1994
    %2044 = vmatpush.bf16.msra.mxu0 %v1992
    %2045 = vmatmul.bf16.gmra.mxu0 %v1936
    %v2046 = vpop.f32.mrf.mxu0
    %v2047 = vadd.f32 %v1942, %v2046
    %v2048 = vpop.f32.mrf.mxu0
    %v2049 = vadd.f32 %v1942, %v2048
    %2050 = vdwg.mxu0
    %v2051 = vxor.u32 %v2033, 2147483648
    %v2052 = vxor.u32 %v2047, 2147483648
    %v2053 = vxor.u32 %v2035, 2147483648
    %v2054 = vxor.u32 %v2049, 2147483648
    %v2055 = vmul.f32 %v2051, 1.442695
    %v2056 = vpow.pop %v2055
    %v2057 = vmul.f32 %v2052, 1.442695
    %v2058 = vpow.pop %v2057
    %v2059 = vmul.f32 %v2053, 1.442695
    %v2060 = vpow.pop %v2059
    %v2061 = vmul.f32 %v2054, 1.442695
    %v2062 = vpow.pop %v2061
    %v2063 = vadd.f32 %v2056, 1.0
    %v2064 = vadd.f32 %v2058, 1.0
    %v2065 = vadd.f32 %v2060, 1.0
    %v2066 = vadd.f32 %v2062, 1.0
    %v2067 = vrcp.pop %v2063
    %v2068 = vmul.f32 %v2063, %v2067
    %v2069 = vsub.f32 1.0, %v2068
    %v2070 = vmul.f32 %v2067, %v2069
    %v2071 = vadd.f32 %v2067, %v2070
    %vm2072 = vweird.f32 %v2063
    %vm2073 = vweird.f32 %v2067
    %vm2074 = vmor %vm2072, %vm2073
    %v2075 = vsel %vm2074, %v2067, %v2071
    %v2076 = vand.u32 2147483647, %v2063
    %vm2077 = vcmp.eq.f32.partialorder %v2076, 8.507059e+37
    %v2078 = vand.u32 %v2063, 2147483648
    %v2079 = vor.u32 1.1754944e-38, %v2078
    %v2080 = vsel %vm2077, %v2079, %v2075
    %v2081 = vmul.f32 1.0, %v2080
    %v2082 = vrcp.pop %v2064
    %v2083 = vmul.f32 %v2064, %v2082
    %v2084 = vsub.f32 1.0, %v2083
    %v2085 = vmul.f32 %v2082, %v2084
    %v2086 = vadd.f32 %v2082, %v2085
    %vm2087 = vweird.f32 %v2064
    %vm2088 = vweird.f32 %v2082
    %vm2089 = vmor %vm2087, %vm2088
    %v2090 = vsel %vm2089, %v2082, %v2086
    %v2091 = vand.u32 2147483647, %v2064
    %vm2092 = vcmp.eq.f32.partialorder %v2091, 8.507059e+37
    %v2093 = vand.u32 %v2064, 2147483648
    %v2094 = vor.u32 1.1754944e-38, %v2093
    %v2095 = vsel %vm2092, %v2094, %v2090
    %v2096 = vmul.f32 1.0, %v2095
    %v2097 = vrcp.pop %v2065
    %v2098 = vmul.f32 %v2065, %v2097
    %v2099 = vsub.f32 1.0, %v2098
    %v2100 = vmul.f32 %v2097, %v2099
    %v2101 = vadd.f32 %v2097, %v2100
    %vm2102 = vweird.f32 %v2065
    %vm2103 = vweird.f32 %v2097
    %vm2104 = vmor %vm2102, %vm2103
    %v2105 = vsel %vm2104, %v2097, %v2101
    %v2106 = vand.u32 2147483647, %v2065
    %vm2107 = vcmp.eq.f32.partialorder %v2106, 8.507059e+37
    %v2108 = vand.u32 %v2065, 2147483648
    %v2109 = vor.u32 1.1754944e-38, %v2108
    %v2110 = vsel %vm2107, %v2109, %v2105
    %v2111 = vmul.f32 1.0, %v2110
    %v2112 = vrcp.pop %v2066
    %v2113 = vmul.f32 %v2066, %v2112
    %v2114 = vsub.f32 1.0, %v2113
    %v2115 = vmul.f32 %v2112, %v2114
    %v2116 = vadd.f32 %v2112, %v2115
    %vm2117 = vweird.f32 %v2066
    %vm2118 = vweird.f32 %v2112
    %vm2119 = vmor %vm2117, %vm2118
    %v2120 = vsel %vm2119, %v2112, %v2116
    %v2121 = vand.u32 2147483647, %v2066
    %vm2122 = vcmp.eq.f32.partialorder %v2121, 8.507059e+37
    %v2123 = vand.u32 %v2066, 2147483648
    %v2124 = vor.u32 1.1754944e-38, %v2123
    %v2125 = vsel %vm2122, %v2124, %v2120
    %v2126 = vmul.f32 1.0, %v2125
    %v2127 = vmul.f32 %v2033, %v2081
    %v2128 = vmul.f32 %v2047, %v2096
    %v2129 = vmul.f32 %v2035, %v2111
    %v2130 = vmul.f32 %v2049, %v2126
    %v2131 = vpack.c.bf16 %v2129, %v2127
    %v2132 = vpack.c.bf16 %v2130, %v2128
    %v2133 = vperm.slane %v214, 5
    %v2166 = vunpack.c.l.b16 %v362
    %v2167 = vunpack.c.l.b16 %v363
    %v2168 = vunpack.c.l.b16 %v364
    %v2169 = vunpack.c.l.b16 %v365
    %v2170 = vunpack.c.l.b16 %v366
    %v2171 = vunpack.c.l.b16 %v367
    %v2172 = vunpack.c.l.b16 %v368
    %v2173 = vunpack.c.l.b16 %v369
    %v2174 = vunpack.c.l.b16 %v370
    %v2175 = vunpack.c.l.b16 %v371
    %v2176 = vunpack.c.l.b16 %v372
    %v2177 = vunpack.c.l.b16 %v373
    %v2178 = vunpack.c.l.b16 %v374
    %v2179 = vunpack.c.l.b16 %v375
    %v2180 = vunpack.c.l.b16 %v376
    %v2181 = vunpack.c.l.b16 %v377
    %v2182 = vunpack.c.l.b16 %v378
    %v2183 = vunpack.c.l.b16 %v379
    %v2184 = vunpack.c.l.b16 %v380
    %v2185 = vunpack.c.l.b16 %v381
    %v2186 = vunpack.c.l.b16 %v382
    %v2187 = vunpack.c.l.b16 %v383
    %v2188 = vunpack.c.l.b16 %v384
    %v2189 = vunpack.c.l.b16 %v385
    %v2190 = vunpack.c.l.b16 %v386
    %v2191 = vunpack.c.l.b16 %v387
    %v2192 = vunpack.c.l.b16 %v388
    %v2193 = vunpack.c.l.b16 %v389
    %v2194 = vunpack.c.l.b16 %v390
    %v2195 = vunpack.c.l.b16 %v391
    %v2196 = vunpack.c.l.b16 %v392
    %v2197 = vunpack.c.l.b16 %v393
    %v2198 = vpack.c.b16 %v2167, %v2166
    %v2199 = vpack.c.b16 %v2169, %v2168
    %v2200 = vpack.c.b16 %v2171, %v2170
    %v2201 = vpack.c.b16 %v2173, %v2172
    %v2202 = vpack.c.b16 %v2175, %v2174
    %v2203 = vpack.c.b16 %v2177, %v2176
    %v2204 = vpack.c.b16 %v2179, %v2178
    %v2205 = vpack.c.b16 %v2181, %v2180
    %v2206 = vpack.c.b16 %v2183, %v2182
    %v2207 = vpack.c.b16 %v2185, %v2184
    %v2208 = vpack.c.b16 %v2187, %v2186
    %v2209 = vpack.c.b16 %v2189, %v2188
    %v2210 = vpack.c.b16 %v2191, %v2190
    %v2211 = vpack.c.b16 %v2193, %v2192
    %v2212 = vpack.c.b16 %v2195, %v2194
    %v2213 = vpack.c.b16 %v2197, %v2196
    %2230 = vmatpush.bf16.msra.mxu0 %v2205
    %2231 = vmatpush.bf16.msra.mxu0 %v2204
    %2232 = vmatpush.bf16.msra.mxu0 %v2203
    %2233 = vmatpush.bf16.msra.mxu0 %v2202
    %2234 = vmatpush.bf16.msra.mxu0 %v2201
    %2235 = vmatpush.bf16.msra.mxu0 %v2200
    %2236 = vmatpush.bf16.msra.mxu0 %v2199
    %2237 = vmatpush.bf16.msra.mxu0 %v2198
    %2238 = vmatmul.bf16.gmra.mxu0 %v2131
    %v2239 = vpop.f32.mrf.mxu0
    %v2240 = vadd.f32 %v2133, %v2239
    %v2241 = vpop.f32.mrf.mxu0
    %v2242 = vadd.f32 %v2133, %v2241
    %2243 = vdwg.mxu0
    %2244 = vmatpush.bf16.msra.mxu0 %v2213
    %2245 = vmatpush.bf16.msra.mxu0 %v2212
    %2246 = vmatpush.bf16.msra.mxu0 %v2211
    %2247 = vmatpush.bf16.msra.mxu0 %v2210
    %2248 = vmatpush.bf16.msra.mxu0 %v2209
    %2249 = vmatpush.bf16.msra.mxu0 %v2208
    %2250 = vmatpush.bf16.msra.mxu0 %v2207
    %2251 = vmatpush.bf16.msra.mxu0 %v2206
    %2252 = vmatmul.bf16.gmra.mxu0 %v2132
    %v2253 = vpop.f32.mrf.mxu0
    %v2254 = vadd.f32 %v2240, %v2253
    %v2255 = vpop.f32.mrf.mxu0
    %v2256 = vadd.f32 %v2242, %v2255
    %2257 = vdwg.mxu0
    %v2258 = vmul.f32 %v2254, 0.5
    %v2259 = vmul.f32 %v2256, 0.5
    %v2260 = vadd.f32 %v2258, %v1888
    %v2261 = vadd.f32 %v2259, %v1889
    %2262 = vadd.xlane.f32.xlu0 %v2260
    %v2263 = vpop.xlane.xlu0 %2262
    %2264 = vadd.xlane.f32.xlu0 %v2261
    %v2265 = vpop.xlane.xlu0 %2264
    %v2266 = vmul.f32 %v2263, %v404
    %v2267 = vmul.f32 %v2265, %v404
    %v2268 = vsub.f32 %v2260, %v2266
    %v2269 = vsub.f32 %v2261, %v2267
    %v2270 = vmul.f32 %v2268, %v2268
    %v2271 = vmul.f32 %v2269, %v2269
    %2272 = vadd.xlane.f32.xlu0 %v2270
    %v2273 = vpop.xlane.xlu0 %2272
    %2274 = vadd.xlane.f32.xlu0 %v2271
    %v2275 = vpop.xlane.xlu0 %2274
    %v2276 = vmul.f32 %v2273, %v404
    %v2277 = vmul.f32 %v2275, %v404
    %v2278 = vadd.f32 %v2276, 1e-05
    %v2279 = vadd.f32 %v2277, 1e-05
    %v2280 = vrsqrt.pop %v2278
    %v2281 = vmul.f32 %v2280, %v2278
    %v2282 = vmul.f32 %v2281, %v2280
    %v2283 = vmul.f32 0.5, %v2282
    %v2284 = vsub.f32 1.5, %v2283
    %v2285 = vmul.f32 %v2280, %v2284
    %vm2286 = vweird.f32 %v2278
    %vm2287 = vweird.f32 %v2280
    %vm2288 = vmor %vm2286, %vm2287
    %v2289 = vsel %vm2288, %v2280, %v2285
    %v2290 = vrsqrt.pop %v2279
    %v2291 = vmul.f32 %v2290, %v2279
    %v2292 = vmul.f32 %v2291, %v2290
    %v2293 = vmul.f32 0.5, %v2292
    %v2294 = vsub.f32 1.5, %v2293
    %v2295 = vmul.f32 %v2290, %v2294
    %vm2296 = vweird.f32 %v2279
    %vm2297 = vweird.f32 %v2290
    %vm2298 = vmor %vm2296, %vm2297
    %v2299 = vsel %vm2298, %v2290, %v2295
    %v2300 = vmul.f32 %v2268, %v2289
    %v2301 = vmul.f32 %v2269, %v2299
    %v2302 = vperm.slane %v214, 6
    %v2303 = vmul.f32 %v2300, %v2302
    %v2304 = vmul.f32 %v2301, %v2302
    %v2305 = vperm.slane %v214, 7
    %v2306 = vadd.f32 %v2303, %v2305
    %v2307 = vadd.f32 %v2304, %v2305
    %2308 = vst [vmem:[#allocation21] sm:$0xff] %v2306
    %2309 = vst [vmem:[#allocation21 + $0x8] sm:$0xff] %v2307
    // Predicated region
    $region90: #{tpu_custom_call.1} parent=1 // pred_check
      _
    $region91: #{tpu_custom_call.1} parent=1 // pred_check_branch
      %2311 = sbr.rel (0) target = $region93
    $region92: #{tpu_custom_call.1} parent=1 // pred_region
      %2313 = vsyncadd [#allocation5], 0
      %s2314 = sshll.u32 [#allocation21], 4
      %s2315 = int_to_ptr.vmem [resolvable:$true] %s2314
      %s2316 = sshll.u32 %s11, 4
      %s2317 = int_to_ptr.hbm [resolvable:$true] %s2316
      %2322 = dma.vmem_to_hbm [thread:$0]  %s2315, 256, %s2317, [#allocation5], 128, 128, 8
    $region93: #{tpu_custom_call.1} parent=1 // pred_fallthru
      _
    // Predicated region
    $region94: #{tpu_custom_call.1} parent=1 // pred_check
      _
    $region95: #{tpu_custom_call.1} parent=1 // pred_check_branch
      %2324 = sbr.rel (0) target = $region97
    $region96: #{tpu_custom_call.1} parent=1 // pred_region
      %2326 = dma.done [#allocation5], 256
    $region97: #{tpu_custom_call.1} parent=1 // pred_fallthru
      _
    %2327 = vsyncpa [#allocation4], 1
    %2328 = vsyncpa [#allocation7], 1
    %2329 = vsyncpa [#allocation10], 1
    %2330 = vsyncpa [#allocation13], 1
    %2331 = vsyncpa [#allocation16], 1
    %2332 = vsyncpa [#allocation19], 1
    %2333 = vsyncpa [#allocation5], 1

</llo_original>
